<compile_context>
chip_gen: v6e
topology: v6e:2x2x1
jax: 0.10.0
libtpu: 0.0.40
codegen_flags: <defaults>
</compile_context>

<pallas_src>
import functools

import jax
import jax.numpy as jnp
from jax.experimental import pallas as pl
from jax.experimental.pallas import tpu as pltpu

_EPS = 1e-5  # PyTorch InstanceNorm2d default


def _round_up(x, m):
    return (x + m - 1) // m * m


# ----------------------------------------------------------------------------
# Pallas kernels
# ----------------------------------------------------------------------------
def _fused_conv_kernel(*refs, act, norm, has_bias, has_res, eps):
    # a: (1, Kp, HW) bf16 patches, w: (OCp, Kp) bf16,
    # optional b: (OCp, 1) f32, optional residual r: (1, OCp, HW) f32,
    # out: (1, OCp, HW) f32.
    it = iter(refs)
    a_ref = next(it)
    w_ref = next(it)
    b_ref = next(it) if has_bias else None
    r_ref = next(it) if has_res else None
    o_ref = next(it)

    # MXU matmul, f32 accumulate; output lane dim = HW (lane-dense).
    y = jnp.dot(w_ref[...], a_ref[0], preferred_element_type=jnp.float32)
    if has_bias:
        y = y + b_ref[...]

    if norm:  # InstanceNorm2d: biased variance over spatial, no affine.
        mean = jnp.mean(y, axis=-1, keepdims=True)
        var = jnp.mean((y - mean) * (y - mean), axis=-1, keepdims=True)
        y = (y - mean) * jax.lax.rsqrt(var + eps)

    if act == "relu":
        y = jnp.maximum(y, 0.0)
    elif act == "tanh":
        y = jnp.tanh(y)

    if has_res:
        y = y + r_ref[0]  # x + IN(conv(...))

    o_ref[0] = y.astype(o_ref.dtype)


def _fused_up_kernel(a_ref, w_ref, o_ref, *, eps):
    # Sub-pixel ConvTranspose: four 2x2 stride-1 sub-convs share one
    # InstanceNorm over the full (2H x 2W) output, then ReLU.
    # a: (1, 4, Kp, HW) bf16, w: (4, OCp, Kp) bf16, out: (1, 4, OCp, HW) f32.
    # (ConvTranspose bias is cancelled by the following affine-free IN.)
    ys = [jnp.dot(w_ref[t], a_ref[0, t], preferred_element_type=jnp.float32)
          for t in range(4)]
    hw = ys[0].shape[-1]
    denom = 4.0 * hw  # IN statistics over the full upsampled spatial extent
    mean = sum(jnp.sum(y, axis=-1, keepdims=True) for y in ys) / denom
    var = sum(jnp.sum((y - mean) * (y - mean), axis=-1, keepdims=True)
              for y in ys) / denom
    inv = jax.lax.rsqrt(var + eps)
    for t in range(4):
        o_ref[0, t] = (jnp.maximum((ys[t] - mean) * inv, 0.0)).astype(o_ref.dtype)


# ----------------------------------------------------------------------------
# Layer wrappers (im2col / padding / sub-pixel plumbing in XLA, compute in Pallas)
# ----------------------------------------------------------------------------
def _im2col_nchw(x, kh, kw, stride):
    # x: (N, C, H, W) -> (N, C*kh*kw, oh*ow); K ordered (c, ky, kx) to match
    # torch weight.reshape(OC, IC*KH*KW).
    N, C, H, W = x.shape
    oh = (H - kh) // stride + 1
    ow = (W - kw) // stride + 1
    taps = []
    for i in range(kh):
        for j in range(kw):
            taps.append(x[:, :, i:i + stride * oh:stride, j:j + stride * ow:stride])
    p = jnp.stack(taps, axis=2)  # (N, C, kh*kw, oh, ow)
    return p.reshape(N, C * kh * kw, oh * ow), oh, ow


def fused_conv_layer(x, w, b, *, stride=1, pad=0, pad_mode="zeros",
                     act="relu", norm=True, residual=None):
    """Conv2d (+ optional pad) + [bias] + [InstanceNorm] + act (+ residual add).

    x: (N, C, H, W) f32.  w: torch Conv2d weight (OC, IC, KH, KW).  b: (OC,).
    """
    if pad > 0:
        mode = "reflect" if pad_mode == "reflect" else "constant"
        x = jnp.pad(x, ((0, 0), (0, 0), (pad, pad), (pad, pad)), mode=mode)
    N = x.shape[0]
    OC, IC, KH, KW = w.shape
    a, oh, ow = _im2col_nchw(x, KH, KW, stride)  # (N, K, HW)
    K = IC * KH * KW
    HW = oh * ow
    Kp = _round_up(K, 128)
    OCp = _round_up(OC, 8)

    a = jnp.pad(a, ((0, 0), (0, Kp - K), (0, 0))).astype(jnp.bfloat16)
    wmat = jnp.pad(w.reshape(OC, K),
                   ((0, OCp - OC), (0, Kp - K))).astype(jnp.bfloat16)

    args = [a, wmat]
    in_specs = [
        pl.BlockSpec((1, Kp, HW), lambda n: (n, 0, 0)),
        pl.BlockSpec((OCp, Kp), lambda n: (0, 0)),
    ]

    # Per-channel bias is exactly cancelled by the affine-free InstanceNorm
    # that follows it (it shifts the per-channel mean only) -> skip it.
    has_bias = not norm
    if has_bias:
        bias = jnp.pad(b, (0, OCp - OC)).reshape(OCp, 1).astype(jnp.float32)
        args.append(bias)
        in_specs.append(pl.BlockSpec((OCp, 1), lambda n: (0, 0)))

    has_res = residual is not None
    io_aliases = {}
    if has_res:
        assert OCp == OC, "residual layers must have 8-aligned channel counts"
        args.append(residual.reshape(N, OC, HW).astype(jnp.float32))
        in_specs.append(pl.BlockSpec((1, OCp, HW), lambda n: (n, 0, 0)))
        io_aliases = {len(args) - 1: 0}  # write result in place of the residual

    out = pl.pallas_call(
        functools.partial(_fused_conv_kernel, act=act, norm=norm,
                          has_bias=has_bias, has_res=has_res, eps=_EPS),
        out_shape=jax.ShapeDtypeStruct((N, OCp, HW), jnp.float32),
        grid_spec=pltpu.PrefetchScalarGridSpec(
            num_scalar_prefetch=0,
            grid=(N,),
            in_specs=in_specs,
            out_specs=pl.BlockSpec((1, OCp, HW), lambda n: (n, 0, 0)),
        ),
        compiler_params=pltpu.CompilerParams(
            dimension_semantics=("parallel",)),
        input_output_aliases=io_aliases,
    )(*args)
    return out[:, :OC, :].reshape(N, OC, oh, ow)


def fused_up_layer(x, w_t, b):
    """ConvTranspose2d(k=4, s=2, p=1) + InstanceNorm + ReLU via sub-pixel
    decomposition (no zero-filled taps).  x: (N, IC, H, W); w_t: (IC, OC, 4, 4).
    `b` is accepted for parameter parity but cancelled by the affine-free IN."""
    del b
    N, IC, H, W = x.shape
    OC = w_t.shape[1]
    K = 4 * IC
    HW = H * W
    taps = {0: [3, 1], 1: [2, 0]}   # kernel row/col taps per output sub-grid
    pads = {0: (1, 0), 1: (0, 1)}   # (before, after) zero-pad per sub-grid

    a_list, w_list = [], []
    for r in (0, 1):
        for s in (0, 1):
            xp = jnp.pad(x, ((0, 0), (0, 0), pads[r], pads[s]))
            a_rs, _, _ = _im2col_nchw(xp, 2, 2, 1)            # (N, 4*IC, H*W)
            a_list.append(a_rs)
            wsub = w_t[:, :, taps[r], :][:, :, :, taps[s]]    # (IC, OC, 2, 2)
            w_list.append(jnp.transpose(wsub, (1, 0, 2, 3)).reshape(OC, K))

    Kp = _round_up(K, 128)
    OCp = _round_up(OC, 8)
    a4 = jnp.stack(a_list, axis=1)                            # (N, 4, K, HW)
    a4 = jnp.pad(a4, ((0, 0), (0, 0), (0, Kp - K), (0, 0))).astype(jnp.bfloat16)
    w4 = jnp.stack(w_list, axis=0)                            # (4, OC, K)
    w4 = jnp.pad(w4, ((0, 0), (0, OCp - OC), (0, Kp - K))).astype(jnp.bfloat16)

    out = pl.pallas_call(
        functools.partial(_fused_up_kernel, eps=_EPS),
        out_shape=jax.ShapeDtypeStruct((N, 4, OCp, HW), jnp.float32),
        grid_spec=pltpu.PrefetchScalarGridSpec(
            num_scalar_prefetch=0,
            grid=(N,),
            in_specs=[
                pl.BlockSpec((1, 4, Kp, HW), lambda n: (n, 0, 0, 0)),
                pl.BlockSpec((4, OCp, Kp), lambda n: (0, 0, 0)),
            ],
            out_specs=pl.BlockSpec((1, 4, OCp, HW), lambda n: (n, 0, 0, 0)),
        ),
        compiler_params=pltpu.CompilerParams(
            dimension_semantics=("parallel",)),
    )(a4, w4)

    out = out[:, :, :OC, :]                        # (N, 4, OC, HW), t = 2r + s
    out = out.reshape(N, 2, 2, OC, H, W)           # (N, r, s, OC, H, W)
    out = jnp.transpose(out, (0, 3, 4, 1, 5, 2))   # (N, OC, H, r, W, s)
    return out.reshape(N, OC, 2 * H, 2 * W)        # out[2h+r, 2w+s]


# ----------------------------------------------------------------------------
# ResidualGenerator parameters + forward
# ----------------------------------------------------------------------------
def init_params(key, in_channels=3, out_channels=3, features=(8, 16, 32), num_res=2):
    keys = iter(jax.random.split(key, 64))

    def conv_init(oc, ic, kh, kw):
        scale = 1.0 / (ic * kh * kw) ** 0.5
        w = jax.random.uniform(next(keys), (oc, ic, kh, kw), jnp.float32, -scale, scale)
        b = jax.random.uniform(next(keys), (oc,), jnp.float32, -scale, scale)
        return {"w": w, "b": b}

    def convT_init(ic, oc, kh, kw):
        scale = 1.0 / (oc * kh * kw) ** 0.5
        w = jax.random.uniform(next(keys), (ic, oc, kh, kw), jnp.float32, -scale, scale)
        b = jax.random.uniform(next(keys), (oc,), jnp.float32, -scale, scale)
        return {"w": w, "b": b}

    params = {
        "down0": conv_init(features[0], in_channels, 7, 7),
        "downs": [conv_init(features[i], features[i - 1], 4, 4)
                  for i in range(1, len(features))],
        "res": [],
        "ups": [convT_init(features[-i], features[-i - 1], 4, 4)
                for i in range(1, len(features))],
        "final": conv_init(out_channels, features[0], 7, 7),
    }
    for _ in range(num_res):
        c1 = conv_init(features[-1], features[-1], 3, 3)
        c2 = conv_init(features[-1], features[-1], 3, 3)
        params["res"].append({"w1": c1["w"], "b1": c1["b"],
                              "w2": c2["w"], "b2": c2["b"]})
    return params


def residual_generator_forward(params, x_nchw):
    y = x_nchw  # NCHW throughout

    # downs[0]: ReflectionPad(3) + Conv7 + IN + ReLU  (one fused pallas_call)
    p = params["down0"]
    y = fused_conv_layer(y, p["w"], p["b"], stride=1, pad=3, pad_mode="reflect",
                         act="relu", norm=True)

    # downs[1:]: Conv4 s2 p1 + IN + ReLU
    for p in params["downs"]:
        y = fused_conv_layer(y, p["w"], p["b"], stride=2, pad=1,
                             act="relu", norm=True)

    # residual blocks: x + IN(Conv3(ReLU(IN(Conv3(reflect-pad(x))))))
    for p in params["res"]:
        h = fused_conv_layer(y, p["w1"], p["b1"], stride=1, pad=1,
                             pad_mode="reflect", act="relu", norm=True)
        y = fused_conv_layer(h, p["w2"], p["b2"], stride=1, pad=1,
                             pad_mode="reflect", act="none", norm=True,
                             residual=y)

    # ups: ConvTranspose4 s2 p1 + IN + ReLU (sub-pixel, fused)
    # TODO(synk): the `transforms.Resize` branch in the reference forward is
    # unreachable for these stride-2-symmetric shapes (and references an
    # undefined `transforms` name), so it is omitted.
    for p in params["ups"]:
        y = fused_up_layer(y, p["w"], p["b"])

    # final: ReflectionPad(3) + Conv7 + Tanh (fused in the GEMM epilogue)
    pf = params["final"]
    y = fused_conv_layer(y, pf["w"], pf["b"], stride=1, pad=3,
                         pad_mode="reflect", act="tanh", norm=False)
    return y


if __name__ == "__main__":
    key = jax.random.PRNGKey(0)
    k_param, k_x = jax.random.split(key)

    in_channels, out_channels = 3, 3
    features = (8, 16, 32)
    num_residual_blocks = 2
    x = jax.random.normal(k_x, (2, in_channels, 16, 16), jnp.float32)  # NCHW

    params = init_params(k_param, in_channels, out_channels, features,
                         num_residual_blocks)

    fwd = jax.jit(residual_generator_forward)
    out = jax.block_until_ready(fwd(params, x))

    assert out.shape == (2, out_channels, 16, 16), out.shape
    assert out.dtype == jnp.float32
    assert bool(jnp.all(jnp.isfinite(out)))
    assert bool(jnp.all(jnp.abs(out) <= 1.0))  # tanh output range
    print("KERNEL_OK")
</pallas_src>

<mosaic_0001>
module attributes {stable_mosaic.version = 11 : i64} {
  func.func @_fused_conv_kernel(%arg0: i32, %arg1: memref<1x256x256xbf16, #tpu.memory_space<vmem>>, %arg2: memref<8x256xbf16, #tpu.memory_space<vmem>>, %arg3: memref<1x8x256xf32, #tpu.memory_space<vmem>>) attributes {dimension_semantics = [#tpu.dimension_semantics<parallel>], iteration_bounds = array<i64: 2>, scalar_prefetch = 0 : i64, scratch_operands = 0 : i64, tpu.core_type = #tpu.core_type<tc>, window_params = [{transform_indices = @transform_0, window_bounds = array<i64: 1, 256, 256>}, {pipeline_mode = #tpu.pipeline_mode<synchronous>, transform_indices = @transform_1, window_bounds = array<i64: 8, 256>}, {transform_indices = @transform_2, window_bounds = array<i64: 1, 8, 256>}]} {
    %c0 = arith.constant 0 : index
    %c0_0 = arith.constant 0 : index
    %0 = vector.load %arg2[%c0, %c0_0] : memref<8x256xbf16, #tpu.memory_space<vmem>>, vector<8x256xbf16>
    %c0_1 = arith.constant 0 : index
    %c0_2 = arith.constant 0 : index
    %c0_3 = arith.constant 0 : index
    %1 = vector.load %arg1[%c0_1, %c0_2, %c0_3] : memref<1x256x256xbf16, #tpu.memory_space<vmem>>, vector<1x256x256xbf16>
    %2 = vector.shape_cast %1 : vector<1x256x256xbf16> to vector<256x256xbf16>
    %cst = arith.constant dense<0.000000e+00> : vector<8x256xf32>
    %3 = tpu.matmul %0, %2, %cst {dimension_numbers = #tpu.dot_dimension_numbers<[1], [0], [0], [1], [0, 0, 1, 1], [], []>} : vector<8x256xbf16>, vector<256x256xbf16>, vector<8x256xf32> -> vector<8x256xf32>
    %cst_4 = arith.constant dense<0.000000e+00> : vector<8xf32>
    %4 = vector.multi_reduction <add>, %3, %cst_4 [1] : vector<8x256xf32> to vector<8xf32>
    %5 = vector.shape_cast %4 : vector<8xf32> to vector<8x1xf32>
    %cst_5 = arith.constant 2.560000e+02 : f32
    %6 = vector.broadcast %cst_5 : f32 to vector<8x1xf32>
    %7 = arith.divf %5, %6 : vector<8x1xf32>
    %8 = vector.broadcast %7 : vector<8x1xf32> to vector<8x256xf32>
    %9 = arith.subf %3, %8 : vector<8x256xf32>
    %10 = vector.broadcast %7 : vector<8x1xf32> to vector<8x256xf32>
    %11 = arith.subf %3, %10 : vector<8x256xf32>
    %12 = arith.mulf %9, %11 : vector<8x256xf32>
    %cst_6 = arith.constant dense<0.000000e+00> : vector<8xf32>
    %13 = vector.multi_reduction <add>, %12, %cst_6 [1] : vector<8x256xf32> to vector<8xf32>
    %14 = vector.shape_cast %13 : vector<8xf32> to vector<8x1xf32>
    %cst_7 = arith.constant 2.560000e+02 : f32
    %15 = vector.broadcast %cst_7 : f32 to vector<8x1xf32>
    %16 = arith.divf %14, %15 : vector<8x1xf32>
    %17 = vector.broadcast %7 : vector<8x1xf32> to vector<8x256xf32>
    %18 = arith.subf %3, %17 : vector<8x256xf32>
    %cst_8 = arith.constant 9.99999974E-6 : f32
    %19 = vector.broadcast %cst_8 : f32 to vector<8x1xf32>
    %20 = arith.addf %16, %19 : vector<8x1xf32>
    %21 = math.rsqrt %20 : vector<8x1xf32>
    %22 = vector.broadcast %21 : vector<8x1xf32> to vector<8x256xf32>
    %23 = arith.mulf %18, %22 : vector<8x256xf32>
    %cst_9 = arith.constant 0.000000e+00 : f32
    %24 = vector.broadcast %cst_9 : f32 to vector<8x256xf32>
    %25 = arith.maximumf %23, %24 : vector<8x256xf32>
    %c0_10 = arith.constant 0 : index
    %c0_11 = arith.constant 0 : index
    %c0_12 = arith.constant 0 : index
    %26 = vector.load %arg3[%c0_10, %c0_11, %c0_12] : memref<1x8x256xf32, #tpu.memory_space<vmem>>, vector<1x8x256xf32>
    %27 = vector.shape_cast %26 : vector<1x8x256xf32> to vector<8x256xf32>
    %28 = vector.shape_cast %25 : vector<8x256xf32> to vector<1x8x256xf32>
    tpu.vector_store %arg3[%c0_10, %c0_11, %c0_12], %28 {strides = array<i32>} : memref<1x8x256xf32, #tpu.memory_space<vmem>>, vector<1x8x256xf32>,
    return
  }
  func.func @transform_0(%arg0: i32) -> (i32, i32, i32) {
    %c0_i32 = arith.constant 0 : i32
    %c0_i32_0 = arith.constant 0 : i32
    %c0_i32_1 = arith.constant 0 : i32
    return %arg0, %c0_i32, %c0_i32_0 : i32, i32, i32
  }
  func.func @transform_1(%arg0: i32) -> (i32, i32) {
    %c0_i32 = arith.constant 0 : i32
    %c0_i32_0 = arith.constant 0 : i32
    %c0_i32_1 = arith.constant 0 : i32
    return %c0_i32, %c0_i32_0 : i32, i32
  }
  func.func @transform_2(%arg0: i32) -> (i32, i32, i32) {
    %c0_i32 = arith.constant 0 : i32
    %c0_i32_0 = arith.constant 0 : i32
    %c0_i32_1 = arith.constant 0 : i32
    return %arg0, %c0_i32, %c0_i32_0 : i32, i32, i32
  }
}

module attributes {stable_mosaic.version = 11 : i64} {
  func.func @_fused_conv_kernel(%arg0: i32, %arg1: memref<1x128x64xbf16, #tpu.memory_space<vmem>>, %arg2: memref<16x128xbf16, #tpu.memory_space<vmem>>, %arg3: memref<1x16x64xf32, #tpu.memory_space<vmem>>) attributes {dimension_semantics = [#tpu.dimension_semantics<parallel>], iteration_bounds = array<i64: 2>, scalar_prefetch = 0 : i64, scratch_operands = 0 : i64, tpu.core_type = #tpu.core_type<tc>, window_params = [{transform_indices = @transform_0, window_bounds = array<i64: 1, 128, 64>}, {pipeline_mode = #tpu.pipeline_mode<synchronous>, transform_indices = @transform_1, window_bounds = array<i64: 16, 128>}, {transform_indices = @transform_2, window_bounds = array<i64: 1, 16, 64>}]} {
    %c0 = arith.constant 0 : index
    %c0_0 = arith.constant 0 : index
    %0 = vector.load %arg2[%c0, %c0_0] : memref<16x128xbf16, #tpu.memory_space<vmem>>, vector<16x128xbf16>
    %c0_1 = arith.constant 0 : index
    %c0_2 = arith.constant 0 : index
    %c0_3 = arith.constant 0 : index
    %1 = vector.load %arg1[%c0_1, %c0_2, %c0_3] : memref<1x128x64xbf16, #tpu.memory_space<vmem>>, vector<1x128x64xbf16>
    %2 = vector.shape_cast %1 : vector<1x128x64xbf16> to vector<128x64xbf16>
    %cst = arith.constant dense<0.000000e+00> : vector<16x64xf32>
    %3 = tpu.matmul %0, %2, %cst {dimension_numbers = #tpu.dot_dimension_numbers<[1], [0], [0], [1], [0, 0, 1, 1], [], []>} : vector<16x128xbf16>, vector<128x64xbf16>, vector<16x64xf32> -> vector<16x64xf32>
    %cst_4 = arith.constant dense<0.000000e+00> : vector<16xf32>
    %4 = vector.multi_reduction <add>, %3, %cst_4 [1] : vector<16x64xf32> to vector<16xf32>
    %5 = vector.shape_cast %4 : vector<16xf32> to vector<16x1xf32>
    %cst_5 = arith.constant 6.400000e+01 : f32
    %6 = vector.broadcast %cst_5 : f32 to vector<16x1xf32>
    %7 = arith.divf %5, %6 : vector<16x1xf32>
    %8 = vector.broadcast %7 : vector<16x1xf32> to vector<16x64xf32>
    %9 = arith.subf %3, %8 : vector<16x64xf32>
    %10 = vector.broadcast %7 : vector<16x1xf32> to vector<16x64xf32>
    %11 = arith.subf %3, %10 : vector<16x64xf32>
    %12 = arith.mulf %9, %11 : vector<16x64xf32>
    %cst_6 = arith.constant dense<0.000000e+00> : vector<16xf32>
    %13 = vector.multi_reduction <add>, %12, %cst_6 [1] : vector<16x64xf32> to vector<16xf32>
    %14 = vector.shape_cast %13 : vector<16xf32> to vector<16x1xf32>
    %cst_7 = arith.constant 6.400000e+01 : f32
    %15 = vector.broadcast %cst_7 : f32 to vector<16x1xf32>
    %16 = arith.divf %14, %15 : vector<16x1xf32>
    %17 = vector.broadcast %7 : vector<16x1xf32> to vector<16x64xf32>
    %18 = arith.subf %3, %17 : vector<16x64xf32>
    %cst_8 = arith.constant 9.99999974E-6 : f32
    %19 = vector.broadcast %cst_8 : f32 to vector<16x1xf32>
    %20 = arith.addf %16, %19 : vector<16x1xf32>
    %21 = math.rsqrt %20 : vector<16x1xf32>
    %22 = vector.broadcast %21 : vector<16x1xf32> to vector<16x64xf32>
    %23 = arith.mulf %18, %22 : vector<16x64xf32>
    %cst_9 = arith.constant 0.000000e+00 : f32
    %24 = vector.broadcast %cst_9 : f32 to vector<16x64xf32>
    %25 = arith.maximumf %23, %24 : vector<16x64xf32>
    %c0_10 = arith.constant 0 : index
    %c0_11 = arith.constant 0 : index
    %c0_12 = arith.constant 0 : index
    %26 = vector.load %arg3[%c0_10, %c0_11, %c0_12] : memref<1x16x64xf32, #tpu.memory_space<vmem>>, vector<1x16x64xf32>
    %27 = vector.shape_cast %26 : vector<1x16x64xf32> to vector<16x64xf32>
    %28 = vector.shape_cast %25 : vector<16x64xf32> to vector<1x16x64xf32>
    tpu.vector_store %arg3[%c0_10, %c0_11, %c0_12], %28 {strides = array<i32>} : memref<1x16x64xf32, #tpu.memory_space<vmem>>, vector<1x16x64xf32>,
    return
  }
  func.func @transform_0(%arg0: i32) -> (i32, i32, i32) {
    %c0_i32 = arith.constant 0 : i32
    %c0_i32_0 = arith.constant 0 : i32
    %c0_i32_1 = arith.constant 0 : i32
    return %arg0, %c0_i32, %c0_i32_0 : i32, i32, i32
  }
  func.func @transform_1(%arg0: i32) -> (i32, i32) {
    %c0_i32 = arith.constant 0 : i32
    %c0_i32_0 = arith.constant 0 : i32
    %c0_i32_1 = arith.constant 0 : i32
    return %c0_i32, %c0_i32_0 : i32, i32
  }
  func.func @transform_2(%arg0: i32) -> (i32, i32, i32) {
    %c0_i32 = arith.constant 0 : i32
    %c0_i32_0 = arith.constant 0 : i32
    %c0_i32_1 = arith.constant 0 : i32
    return %arg0, %c0_i32, %c0_i32_0 : i32, i32, i32
  }
}

module attributes {stable_mosaic.version = 11 : i64} {
  func.func @_fused_conv_kernel(%arg0: i32, %arg1: memref<1x256x16xbf16, #tpu.memory_space<vmem>>, %arg2: memref<32x256xbf16, #tpu.memory_space<vmem>>, %arg3: memref<1x32x16xf32, #tpu.memory_space<vmem>>) attributes {dimension_semantics = [#tpu.dimension_semantics<parallel>], iteration_bounds = array<i64: 2>, scalar_prefetch = 0 : i64, scratch_operands = 0 : i64, tpu.core_type = #tpu.core_type<tc>, window_params = [{transform_indices = @transform_0, window_bounds = array<i64: 1, 256, 16>}, {pipeline_mode = #tpu.pipeline_mode<synchronous>, transform_indices = @transform_1, window_bounds = array<i64: 32, 256>}, {transform_indices = @transform_2, window_bounds = array<i64: 1, 32, 16>}]} {
    %c0 = arith.constant 0 : index
    %c0_0 = arith.constant 0 : index
    %0 = vector.load %arg2[%c0, %c0_0] : memref<32x256xbf16, #tpu.memory_space<vmem>>, vector<32x256xbf16>
    %c0_1 = arith.constant 0 : index
    %c0_2 = arith.constant 0 : index
    %c0_3 = arith.constant 0 : index
    %1 = vector.load %arg1[%c0_1, %c0_2, %c0_3] : memref<1x256x16xbf16, #tpu.memory_space<vmem>>, vector<1x256x16xbf16>
    %2 = vector.shape_cast %1 : vector<1x256x16xbf16> to vector<256x16xbf16>
    %cst = arith.constant dense<0.000000e+00> : vector<32x16xf32>
    %3 = tpu.matmul %0, %2, %cst {dimension_numbers = #tpu.dot_dimension_numbers<[1], [0], [0], [1], [0, 0, 1, 1], [], []>} : vector<32x256xbf16>, vector<256x16xbf16>, vector<32x16xf32> -> vector<32x16xf32>
    %cst_4 = arith.constant dense<0.000000e+00> : vector<32xf32>
    %4 = vector.multi_reduction <add>, %3, %cst_4 [1] : vector<32x16xf32> to vector<32xf32>
    %5 = vector.shape_cast %4 : vector<32xf32> to vector<32x1xf32>
    %cst_5 = arith.constant 1.600000e+01 : f32
    %6 = vector.broadcast %cst_5 : f32 to vector<32x1xf32>
    %7 = arith.divf %5, %6 : vector<32x1xf32>
    %8 = vector.broadcast %7 : vector<32x1xf32> to vector<32x16xf32>
    %9 = arith.subf %3, %8 : vector<32x16xf32>
    %10 = vector.broadcast %7 : vector<32x1xf32> to vector<32x16xf32>
    %11 = arith.subf %3, %10 : vector<32x16xf32>
    %12 = arith.mulf %9, %11 : vector<32x16xf32>
    %cst_6 = arith.constant dense<0.000000e+00> : vector<32xf32>
    %13 = vector.multi_reduction <add>, %12, %cst_6 [1] : vector<32x16xf32> to vector<32xf32>
    %14 = vector.shape_cast %13 : vector<32xf32> to vector<32x1xf32>
    %cst_7 = arith.constant 1.600000e+01 : f32
    %15 = vector.broadcast %cst_7 : f32 to vector<32x1xf32>
    %16 = arith.divf %14, %15 : vector<32x1xf32>
    %17 = vector.broadcast %7 : vector<32x1xf32> to vector<32x16xf32>
    %18 = arith.subf %3, %17 : vector<32x16xf32>
    %cst_8 = arith.constant 9.99999974E-6 : f32
    %19 = vector.broadcast %cst_8 : f32 to vector<32x1xf32>
    %20 = arith.addf %16, %19 : vector<32x1xf32>
    %21 = math.rsqrt %20 : vector<32x1xf32>
    %22 = vector.broadcast %21 : vector<32x1xf32> to vector<32x16xf32>
    %23 = arith.mulf %18, %22 : vector<32x16xf32>
    %cst_9 = arith.constant 0.000000e+00 : f32
    %24 = vector.broadcast %cst_9 : f32 to vector<32x16xf32>
    %25 = arith.maximumf %23, %24 : vector<32x16xf32>
    %c0_10 = arith.constant 0 : index
    %c0_11 = arith.constant 0 : index
    %c0_12 = arith.constant 0 : index
    %26 = vector.load %arg3[%c0_10, %c0_11, %c0_12] : memref<1x32x16xf32, #tpu.memory_space<vmem>>, vector<1x32x16xf32>
    %27 = vector.shape_cast %26 : vector<1x32x16xf32> to vector<32x16xf32>
    %28 = vector.shape_cast %25 : vector<32x16xf32> to vector<1x32x16xf32>
    tpu.vector_store %arg3[%c0_10, %c0_11, %c0_12], %28 {strides = array<i32>} : memref<1x32x16xf32, #tpu.memory_space<vmem>>, vector<1x32x16xf32>,
    return
  }
  func.func @transform_0(%arg0: i32) -> (i32, i32, i32) {
    %c0_i32 = arith.constant 0 : i32
    %c0_i32_0 = arith.constant 0 : i32
    %c0_i32_1 = arith.constant 0 : i32
    return %arg0, %c0_i32, %c0_i32_0 : i32, i32, i32
  }
  func.func @transform_1(%arg0: i32) -> (i32, i32) {
    %c0_i32 = arith.constant 0 : i32
    %c0_i32_0 = arith.constant 0 : i32
    %c0_i32_1 = arith.constant 0 : i32
    return %c0_i32, %c0_i32_0 : i32, i32
  }
  func.func @transform_2(%arg0: i32) -> (i32, i32, i32) {
    %c0_i32 = arith.constant 0 : i32
    %c0_i32_0 = arith.constant 0 : i32
    %c0_i32_1 = arith.constant 0 : i32
    return %arg0, %c0_i32, %c0_i32_0 : i32, i32, i32
  }
}

module attributes {stable_mosaic.version = 11 : i64} {
  func.func @_fused_conv_kernel(%arg0: i32, %arg1: memref<1x384x16xbf16, #tpu.memory_space<vmem>>, %arg2: memref<32x384xbf16, #tpu.memory_space<vmem>>, %arg3: memref<1x32x16xf32, #tpu.memory_space<vmem>>, %arg4: memref<1x32x16xf32, #tpu.memory_space<vmem>>) attributes {dimension_semantics = [#tpu.dimension_semantics<parallel>], iteration_bounds = array<i64: 2>, scalar_prefetch = 0 : i64, scratch_operands = 0 : i64, tpu.core_type = #tpu.core_type<tc>, window_params = [{transform_indices = @transform_0, window_bounds = array<i64: 1, 384, 16>}, {pipeline_mode = #tpu.pipeline_mode<synchronous>, transform_indices = @transform_1, window_bounds = array<i64: 32, 384>}, {transform_indices = @transform_2, window_bounds = array<i64: 1, 32, 16>}, {transform_indices = @transform_3, window_bounds = array<i64: 1, 32, 16>}]} {
    %c0 = arith.constant 0 : index
    %c0_0 = arith.constant 0 : index
    %0 = vector.load %arg2[%c0, %c0_0] : memref<32x384xbf16, #tpu.memory_space<vmem>>, vector<32x384xbf16>
    %c0_1 = arith.constant 0 : index
    %c0_2 = arith.constant 0 : index
    %c0_3 = arith.constant 0 : index
    %1 = vector.load %arg1[%c0_1, %c0_2, %c0_3] : memref<1x384x16xbf16, #tpu.memory_space<vmem>>, vector<1x384x16xbf16>
    %2 = vector.shape_cast %1 : vector<1x384x16xbf16> to vector<384x16xbf16>
    %cst = arith.constant dense<0.000000e+00> : vector<32x16xf32>
    %3 = tpu.matmul %0, %2, %cst {dimension_numbers = #tpu.dot_dimension_numbers<[1], [0], [0], [1], [0, 0, 1, 1], [], []>} : vector<32x384xbf16>, vector<384x16xbf16>, vector<32x16xf32> -> vector<32x16xf32>
    %cst_4 = arith.constant dense<0.000000e+00> : vector<32xf32>
    %4 = vector.multi_reduction <add>, %3, %cst_4 [1] : vector<32x16xf32> to vector<32xf32>
    %5 = vector.shape_cast %4 : vector<32xf32> to vector<32x1xf32>
    %cst_5 = arith.constant 1.600000e+01 : f32
    %6 = vector.broadcast %cst_5 : f32 to vector<32x1xf32>
    %7 = arith.divf %5, %6 : vector<32x1xf32>
    %8 = vector.broadcast %7 : vector<32x1xf32> to vector<32x16xf32>
    %9 = arith.subf %3, %8 : vector<32x16xf32>
    %10 = vector.broadcast %7 : vector<32x1xf32> to vector<32x16xf32>
    %11 = arith.subf %3, %10 : vector<32x16xf32>
    %12 = arith.mulf %9, %11 : vector<32x16xf32>
    %cst_6 = arith.constant dense<0.000000e+00> : vector<32xf32>
    %13 = vector.multi_reduction <add>, %12, %cst_6 [1] : vector<32x16xf32> to vector<32xf32>
    %14 = vector.shape_cast %13 : vector<32xf32> to vector<32x1xf32>
    %cst_7 = arith.constant 1.600000e+01 : f32
    %15 = vector.broadcast %cst_7 : f32 to vector<32x1xf32>
    %16 = arith.divf %14, %15 : vector<32x1xf32>
    %17 = vector.broadcast %7 : vector<32x1xf32> to vector<32x16xf32>
    %18 = arith.subf %3, %17 : vector<32x16xf32>
    %cst_8 = arith.constant 9.99999974E-6 : f32
    %19 = vector.broadcast %cst_8 : f32 to vector<32x1xf32>
    %20 = arith.addf %16, %19 : vector<32x1xf32>
    %21 = math.rsqrt %20 : vector<32x1xf32>
    %22 = vector.broadcast %21 : vector<32x1xf32> to vector<32x16xf32>
    %23 = arith.mulf %18, %22 : vector<32x16xf32>
    %c0_9 = arith.constant 0 : index
    %c0_10 = arith.constant 0 : index
    %c0_11 = arith.constant 0 : index
    %24 = vector.load %arg3[%c0_9, %c0_10, %c0_11] : memref<1x32x16xf32, #tpu.memory_space<vmem>>, vector<1x32x16xf32>
    %25 = vector.shape_cast %24 : vector<1x32x16xf32> to vector<32x16xf32>
    %26 = arith.addf %23, %25 : vector<32x16xf32>
    %c0_12 = arith.constant 0 : index
    %c0_13 = arith.constant 0 : index
    %c0_14 = arith.constant 0 : index
    %27 = vector.load %arg4[%c0_12, %c0_13, %c0_14] : memref<1x32x16xf32, #tpu.memory_space<vmem>>, vector<1x32x16xf32>
    %28 = vector.shape_cast %27 : vector<1x32x16xf32> to vector<32x16xf32>
    %29 = vector.shape_cast %26 : vector<32x16xf32> to vector<1x32x16xf32>
    tpu.vector_store %arg4[%c0_12, %c0_13, %c0_14], %29 {strides = array<i32>} : memref<1x32x16xf32, #tpu.memory_space<vmem>>, vector<1x32x16xf32>,
    return
  }
  func.func @transform_0(%arg0: i32) -> (i32, i32, i32) {
    %c0_i32 = arith.constant 0 : i32
    %c0_i32_0 = arith.constant 0 : i32
    %c0_i32_1 = arith.constant 0 : i32
    return %arg0, %c0_i32, %c0_i32_0 : i32, i32, i32
  }
  func.func @transform_1(%arg0: i32) -> (i32, i32) {
    %c0_i32 = arith.constant 0 : i32
    %c0_i32_0 = arith.constant 0 : i32
    %c0_i32_1 = arith.constant 0 : i32
    return %c0_i32, %c0_i32_0 : i32, i32
  }
  func.func @transform_2(%arg0: i32) -> (i32, i32, i32) {
    %c0_i32 = arith.constant 0 : i32
    %c0_i32_0 = arith.constant 0 : i32
    %c0_i32_1 = arith.constant 0 : i32
    return %arg0, %c0_i32, %c0_i32_0 : i32, i32, i32
  }
  func.func @transform_3(%arg0: i32) -> (i32, i32, i32) {
    %c0_i32 = arith.constant 0 : i32
    %c0_i32_0 = arith.constant 0 : i32
    %c0_i32_1 = arith.constant 0 : i32
    return %arg0, %c0_i32, %c0_i32_0 : i32, i32, i32
  }
}

module attributes {stable_mosaic.version = 11 : i64} {
  func.func @_fused_conv_kernel(%arg0: i32, %arg1: memref<1x384x16xbf16, #tpu.memory_space<vmem>>, %arg2: memref<32x384xbf16, #tpu.memory_space<vmem>>, %arg3: memref<1x32x16xf32, #tpu.memory_space<vmem>>) attributes {dimension_semantics = [#tpu.dimension_semantics<parallel>], iteration_bounds = array<i64: 2>, scalar_prefetch = 0 : i64, scratch_operands = 0 : i64, tpu.core_type = #tpu.core_type<tc>, window_params = [{transform_indices = @transform_0, window_bounds = array<i64: 1, 384, 16>}, {pipeline_mode = #tpu.pipeline_mode<synchronous>, transform_indices = @transform_1, window_bounds = array<i64: 32, 384>}, {transform_indices = @transform_2, window_bounds = array<i64: 1, 32, 16>}]} {
    %c0 = arith.constant 0 : index
    %c0_0 = arith.constant 0 : index
    %0 = vector.load %arg2[%c0, %c0_0] : memref<32x384xbf16, #tpu.memory_space<vmem>>, vector<32x384xbf16>
    %c0_1 = arith.constant 0 : index
    %c0_2 = arith.constant 0 : index
    %c0_3 = arith.constant 0 : index
    %1 = vector.load %arg1[%c0_1, %c0_2, %c0_3] : memref<1x384x16xbf16, #tpu.memory_space<vmem>>, vector<1x384x16xbf16>
    %2 = vector.shape_cast %1 : vector<1x384x16xbf16> to vector<384x16xbf16>
    %cst = arith.constant dense<0.000000e+00> : vector<32x16xf32>
    %3 = tpu.matmul %0, %2, %cst {dimension_numbers = #tpu.dot_dimension_numbers<[1], [0], [0], [1], [0, 0, 1, 1], [], []>} : vector<32x384xbf16>, vector<384x16xbf16>, vector<32x16xf32> -> vector<32x16xf32>
    %cst_4 = arith.constant dense<0.000000e+00> : vector<32xf32>
    %4 = vector.multi_reduction <add>, %3, %cst_4 [1] : vector<32x16xf32> to vector<32xf32>
    %5 = vector.shape_cast %4 : vector<32xf32> to vector<32x1xf32>
    %cst_5 = arith.constant 1.600000e+01 : f32
    %6 = vector.broadcast %cst_5 : f32 to vector<32x1xf32>
    %7 = arith.divf %5, %6 : vector<32x1xf32>
    %8 = vector.broadcast %7 : vector<32x1xf32> to vector<32x16xf32>
    %9 = arith.subf %3, %8 : vector<32x16xf32>
    %10 = vector.broadcast %7 : vector<32x1xf32> to vector<32x16xf32>
    %11 = arith.subf %3, %10 : vector<32x16xf32>
    %12 = arith.mulf %9, %11 : vector<32x16xf32>
    %cst_6 = arith.constant dense<0.000000e+00> : vector<32xf32>
    %13 = vector.multi_reduction <add>, %12, %cst_6 [1] : vector<32x16xf32> to vector<32xf32>
    %14 = vector.shape_cast %13 : vector<32xf32> to vector<32x1xf32>
    %cst_7 = arith.constant 1.600000e+01 : f32
    %15 = vector.broadcast %cst_7 : f32 to vector<32x1xf32>
    %16 = arith.divf %14, %15 : vector<32x1xf32>
    %17 = vector.broadcast %7 : vector<32x1xf32> to vector<32x16xf32>
    %18 = arith.subf %3, %17 : vector<32x16xf32>
    %cst_8 = arith.constant 9.99999974E-6 : f32
    %19 = vector.broadcast %cst_8 : f32 to vector<32x1xf32>
    %20 = arith.addf %16, %19 : vector<32x1xf32>
    %21 = math.rsqrt %20 : vector<32x1xf32>
    %22 = vector.broadcast %21 : vector<32x1xf32> to vector<32x16xf32>
    %23 = arith.mulf %18, %22 : vector<32x16xf32>
    %cst_9 = arith.constant 0.000000e+00 : f32
    %24 = vector.broadcast %cst_9 : f32 to vector<32x16xf32>
    %25 = arith.maximumf %23, %24 : vector<32x16xf32>
    %c0_10 = arith.constant 0 : index
    %c0_11 = arith.constant 0 : index
    %c0_12 = arith.constant 0 : index
    %26 = vector.load %arg3[%c0_10, %c0_11, %c0_12] : memref<1x32x16xf32, #tpu.memory_space<vmem>>, vector<1x32x16xf32>
    %27 = vector.shape_cast %26 : vector<1x32x16xf32> to vector<32x16xf32>
    %28 = vector.shape_cast %25 : vector<32x16xf32> to vector<1x32x16xf32>
    tpu.vector_store %arg3[%c0_10, %c0_11, %c0_12], %28 {strides = array<i32>} : memref<1x32x16xf32, #tpu.memory_space<vmem>>, vector<1x32x16xf32>,
    return
  }
  func.func @transform_0(%arg0: i32) -> (i32, i32, i32) {
    %c0_i32 = arith.constant 0 : i32
    %c0_i32_0 = arith.constant 0 : i32
    %c0_i32_1 = arith.constant 0 : i32
    return %arg0, %c0_i32, %c0_i32_0 : i32, i32, i32
  }
  func.func @transform_1(%arg0: i32) -> (i32, i32) {
    %c0_i32 = arith.constant 0 : i32
    %c0_i32_0 = arith.constant 0 : i32
    %c0_i32_1 = arith.constant 0 : i32
    return %c0_i32, %c0_i32_0 : i32, i32
  }
  func.func @transform_2(%arg0: i32) -> (i32, i32, i32) {
    %c0_i32 = arith.constant 0 : i32
    %c0_i32_0 = arith.constant 0 : i32
    %c0_i32_1 = arith.constant 0 : i32
    return %arg0, %c0_i32, %c0_i32_0 : i32, i32, i32
  }
}

module attributes {stable_mosaic.version = 11 : i64} {
  func.func @_fused_up_kernel(%arg0: i32, %arg1: memref<1x4x128x16xbf16, #tpu.memory_space<vmem>>, %arg2: memref<4x16x128xbf16, #tpu.memory_space<vmem>>, %arg3: memref<1x4x16x16xf32, #tpu.memory_space<vmem>>) attributes {dimension_semantics = [#tpu.dimension_semantics<parallel>], iteration_bounds = array<i64: 2>, scalar_prefetch = 0 : i64, scratch_operands = 0 : i64, tpu.core_type = #tpu.core_type<tc>, window_params = [{transform_indices = @transform_0, window_bounds = array<i64: 1, 4, 128, 16>}, {pipeline_mode = #tpu.pipeline_mode<synchronous>, transform_indices = @transform_1, window_bounds = array<i64: 4, 16, 128>}, {transform_indices = @transform_2, window_bounds = array<i64: 1, 4, 16, 16>}]} {
    %c0 = arith.constant 0 : index
    %c0_0 = arith.constant 0 : index
    %c0_1 = arith.constant 0 : index
    %0 = vector.load %arg2[%c0, %c0_0, %c0_1] : memref<4x16x128xbf16, #tpu.memory_space<vmem>>, vector<1x16x128xbf16>
    %1 = vector.shape_cast %0 : vector<1x16x128xbf16> to vector<16x128xbf16>
    %c0_2 = arith.constant 0 : index
    %c0_3 = arith.constant 0 : index
    %c0_4 = arith.constant 0 : index
    %c0_5 = arith.constant 0 : index
    %2 = vector.load %arg1[%c0_2, %c0_3, %c0_4, %c0_5] : memref<1x4x128x16xbf16, #tpu.memory_space<vmem>>, vector<1x1x128x16xbf16>
    %3 = vector.shape_cast %2 : vector<1x1x128x16xbf16> to vector<128x16xbf16>
    %cst = arith.constant dense<0.000000e+00> : vector<16x16xf32>
    %4 = tpu.matmul %1, %3, %cst {dimension_numbers = #tpu.dot_dimension_numbers<[1], [0], [0], [1], [0, 0, 1, 1], [], []>} : vector<16x128xbf16>, vector<128x16xbf16>, vector<16x16xf32> -> vector<16x16xf32>
    %c1 = arith.constant 1 : index
    %c0_6 = arith.constant 0 : index
    %c0_7 = arith.constant 0 : index
    %5 = vector.load %arg2[%c1, %c0_6, %c0_7] : memref<4x16x128xbf16, #tpu.memory_space<vmem>>, vector<1x16x128xbf16>
    %6 = vector.shape_cast %5 : vector<1x16x128xbf16> to vector<16x128xbf16>
    %c0_8 = arith.constant 0 : index
    %c1_9 = arith.constant 1 : index
    %c0_10 = arith.constant 0 : index
    %c0_11 = arith.constant 0 : index
    %7 = vector.load %arg1[%c0_8, %c1_9, %c0_10, %c0_11] : memref<1x4x128x16xbf16, #tpu.memory_space<vmem>>, vector<1x1x128x16xbf16>
    %8 = vector.shape_cast %7 : vector<1x1x128x16xbf16> to vector<128x16xbf16>
    %cst_12 = arith.constant dense<0.000000e+00> : vector<16x16xf32>
    %9 = tpu.matmul %6, %8, %cst_12 {dimension_numbers = #tpu.dot_dimension_numbers<[1], [0], [0], [1], [0, 0, 1, 1], [], []>} : vector<16x128xbf16>, vector<128x16xbf16>, vector<16x16xf32> -> vector<16x16xf32>
    %c2 = arith.constant 2 : index
    %c0_13 = arith.constant 0 : index
    %c0_14 = arith.constant 0 : index
    %10 = vector.load %arg2[%c2, %c0_13, %c0_14] : memref<4x16x128xbf16, #tpu.memory_space<vmem>>, vector<1x16x128xbf16>
    %11 = vector.shape_cast %10 : vector<1x16x128xbf16> to vector<16x128xbf16>
    %c0_15 = arith.constant 0 : index
    %c2_16 = arith.constant 2 : index
    %c0_17 = arith.constant 0 : index
    %c0_18 = arith.constant 0 : index
    %12 = vector.load %arg1[%c0_15, %c2_16, %c0_17, %c0_18] : memref<1x4x128x16xbf16, #tpu.memory_space<vmem>>, vector<1x1x128x16xbf16>
    %13 = vector.shape_cast %12 : vector<1x1x128x16xbf16> to vector<128x16xbf16>
    %cst_19 = arith.constant dense<0.000000e+00> : vector<16x16xf32>
    %14 = tpu.matmul %11, %13, %cst_19 {dimension_numbers = #tpu.dot_dimension_numbers<[1], [0], [0], [1], [0, 0, 1, 1], [], []>} : vector<16x128xbf16>, vector<128x16xbf16>, vector<16x16xf32> -> vector<16x16xf32>
    %c3 = arith.constant 3 : index
    %c0_20 = arith.constant 0 : index
    %c0_21 = arith.constant 0 : index
    %15 = vector.load %arg2[%c3, %c0_20, %c0_21] : memref<4x16x128xbf16, #tpu.memory_space<vmem>>, vector<1x16x128xbf16>
    %16 = vector.shape_cast %15 : vector<1x16x128xbf16> to vector<16x128xbf16>
    %c0_22 = arith.constant 0 : index
    %c3_23 = arith.constant 3 : index
    %c0_24 = arith.constant 0 : index
    %c0_25 = arith.constant 0 : index
    %17 = vector.load %arg1[%c0_22, %c3_23, %c0_24, %c0_25] : memref<1x4x128x16xbf16, #tpu.memory_space<vmem>>, vector<1x1x128x16xbf16>
    %18 = vector.shape_cast %17 : vector<1x1x128x16xbf16> to vector<128x16xbf16>
    %cst_26 = arith.constant dense<0.000000e+00> : vector<16x16xf32>
    %19 = tpu.matmul %16, %18, %cst_26 {dimension_numbers = #tpu.dot_dimension_numbers<[1], [0], [0], [1], [0, 0, 1, 1], [], []>} : vector<16x128xbf16>, vector<128x16xbf16>, vector<16x16xf32> -> vector<16x16xf32>
    %cst_27 = arith.constant dense<0.000000e+00> : vector<16xf32>
    %20 = vector.multi_reduction <add>, %4, %cst_27 [1] : vector<16x16xf32> to vector<16xf32>
    %21 = vector.shape_cast %20 : vector<16xf32> to vector<16x1xf32>
    %cst_28 = arith.constant 0.000000e+00 : f32
    %22 = vector.broadcast %cst_28 : f32 to vector<16x1xf32>
    %23 = arith.addf %22, %21 : vector<16x1xf32>
    %cst_29 = arith.constant dense<0.000000e+00> : vector<16xf32>
    %24 = vector.multi_reduction <add>, %9, %cst_29 [1] : vector<16x16xf32> to vector<16xf32>
    %25 = vector.shape_cast %24 : vector<16xf32> to vector<16x1xf32>
    %26 = arith.addf %23, %25 : vector<16x1xf32>
    %cst_30 = arith.constant dense<0.000000e+00> : vector<16xf32>
    %27 = vector.multi_reduction <add>, %14, %cst_30 [1] : vector<16x16xf32> to vector<16xf32>
    %28 = vector.shape_cast %27 : vector<16xf32> to vector<16x1xf32>
    %29 = arith.addf %26, %28 : vector<16x1xf32>
    %cst_31 = arith.constant dense<0.000000e+00> : vector<16xf32>
    %30 = vector.multi_reduction <add>, %19, %cst_31 [1] : vector<16x16xf32> to vector<16xf32>
    %31 = vector.shape_cast %30 : vector<16xf32> to vector<16x1xf32>
    %32 = arith.addf %29, %31 : vector<16x1xf32>
    %cst_32 = arith.constant 6.400000e+01 : f32
    %33 = vector.broadcast %cst_32 : f32 to vector<16x1xf32>
    %34 = arith.divf %32, %33 : vector<16x1xf32>
    %35 = vector.broadcast %34 : vector<16x1xf32> to vector<16x16xf32>
    %36 = arith.subf %4, %35 : vector<16x16xf32>
    %37 = vector.broadcast %34 : vector<16x1xf32> to vector<16x16xf32>
    %38 = arith.subf %4, %37 : vector<16x16xf32>
    %39 = arith.mulf %36, %38 : vector<16x16xf32>
    %cst_33 = arith.constant dense<0.000000e+00> : vector<16xf32>
    %40 = vector.multi_reduction <add>, %39, %cst_33 [1] : vector<16x16xf32> to vector<16xf32>
    %41 = vector.shape_cast %40 : vector<16xf32> to vector<16x1xf32>
    %cst_34 = arith.constant 0.000000e+00 : f32
    %42 = vector.broadcast %cst_34 : f32 to vector<16x1xf32>
    %43 = arith.addf %42, %41 : vector<16x1xf32>
    %44 = vector.broadcast %34 : vector<16x1xf32> to vector<16x16xf32>
    %45 = arith.subf %9, %44 : vector<16x16xf32>
    %46 = vector.broadcast %34 : vector<16x1xf32> to vector<16x16xf32>
    %47 = arith.subf %9, %46 : vector<16x16xf32>
    %48 = arith.mulf %45, %47 : vector<16x16xf32>
    %cst_35 = arith.constant dense<0.000000e+00> : vector<16xf32>
    %49 = vector.multi_reduction <add>, %48, %cst_35 [1] : vector<16x16xf32> to vector<16xf32>
    %50 = vector.shape_cast %49 : vector<16xf32> to vector<16x1xf32>
    %51 = arith.addf %43, %50 : vector<16x1xf32>
    %52 = vector.broadcast %34 : vector<16x1xf32> to vector<16x16xf32>
    %53 = arith.subf %14, %52 : vector<16x16xf32>
    %54 = vector.broadcast %34 : vector<16x1xf32> to vector<16x16xf32>
    %55 = arith.subf %14, %54 : vector<16x16xf32>
    %56 = arith.mulf %53, %55 : vector<16x16xf32>
    %cst_36 = arith.constant dense<0.000000e+00> : vector<16xf32>
    %57 = vector.multi_reduction <add>, %56, %cst_36 [1] : vector<16x16xf32> to vector<16xf32>
    %58 = vector.shape_cast %57 : vector<16xf32> to vector<16x1xf32>
    %59 = arith.addf %51, %58 : vector<16x1xf32>
    %60 = vector.broadcast %34 : vector<16x1xf32> to vector<16x16xf32>
    %61 = arith.subf %19, %60 : vector<16x16xf32>
    %62 = vector.broadcast %34 : vector<16x1xf32> to vector<16x16xf32>
    %63 = arith.subf %19, %62 : vector<16x16xf32>
    %64 = arith.mulf %61, %63 : vector<16x16xf32>
    %cst_37 = arith.constant dense<0.000000e+00> : vector<16xf32>
    %65 = vector.multi_reduction <add>, %64, %cst_37 [1] : vector<16x16xf32> to vector<16xf32>
    %66 = vector.shape_cast %65 : vector<16xf32> to vector<16x1xf32>
    %67 = arith.addf %59, %66 : vector<16x1xf32>
    %cst_38 = arith.constant 6.400000e+01 : f32
    %68 = vector.broadcast %cst_38 : f32 to vector<16x1xf32>
    %69 = arith.divf %67, %68 : vector<16x1xf32>
    %cst_39 = arith.constant 9.99999974E-6 : f32
    %70 = vector.broadcast %cst_39 : f32 to vector<16x1xf32>
    %71 = arith.addf %69, %70 : vector<16x1xf32>
    %72 = math.rsqrt %71 : vector<16x1xf32>
    %73 = vector.broadcast %34 : vector<16x1xf32> to vector<16x16xf32>
    %74 = arith.subf %4, %73 : vector<16x16xf32>
    %75 = vector.broadcast %72 : vector<16x1xf32> to vector<16x16xf32>
    %76 = arith.mulf %74, %75 : vector<16x16xf32>
    %cst_40 = arith.constant 0.000000e+00 : f32
    %77 = vector.broadcast %cst_40 : f32 to vector<16x16xf32>
    %78 = arith.maximumf %76, %77 : vector<16x16xf32>
    %c0_41 = arith.constant 0 : index
    %c0_42 = arith.constant 0 : index
    %c0_43 = arith.constant 0 : index
    %c0_44 = arith.constant 0 : index
    %79 = vector.load %arg3[%c0_41, %c0_42, %c0_43, %c0_44] : memref<1x4x16x16xf32, #tpu.memory_space<vmem>>, vector<1x1x16x16xf32>
    %80 = vector.shape_cast %79 : vector<1x1x16x16xf32> to vector<16x16xf32>
    %81 = vector.shape_cast %78 : vector<16x16xf32> to vector<1x1x16x16xf32>
    tpu.vector_store %arg3[%c0_41, %c0_42, %c0_43, %c0_44], %81 {strides = array<i32>} : memref<1x4x16x16xf32, #tpu.memory_space<vmem>>, vector<1x1x16x16xf32>,
    %82 = vector.broadcast %34 : vector<16x1xf32> to vector<16x16xf32>
    %83 = arith.subf %9, %82 : vector<16x16xf32>
    %84 = vector.broadcast %72 : vector<16x1xf32> to vector<16x16xf32>
    %85 = arith.mulf %83, %84 : vector<16x16xf32>
    %cst_45 = arith.constant 0.000000e+00 : f32
    %86 = vector.broadcast %cst_45 : f32 to vector<16x16xf32>
    %87 = arith.maximumf %85, %86 : vector<16x16xf32>
    %c0_46 = arith.constant 0 : index
    %c1_47 = arith.constant 1 : index
    %c0_48 = arith.constant 0 : index
    %c0_49 = arith.constant 0 : index
    %88 = vector.load %arg3[%c0_46, %c1_47, %c0_48, %c0_49] : memref<1x4x16x16xf32, #tpu.memory_space<vmem>>, vector<1x1x16x16xf32>
    %89 = vector.shape_cast %88 : vector<1x1x16x16xf32> to vector<16x16xf32>
    %90 = vector.shape_cast %87 : vector<16x16xf32> to vector<1x1x16x16xf32>
    tpu.vector_store %arg3[%c0_46, %c1_47, %c0_48, %c0_49], %90 {strides = array<i32>} : memref<1x4x16x16xf32, #tpu.memory_space<vmem>>, vector<1x1x16x16xf32>,
    %91 = vector.broadcast %34 : vector<16x1xf32> to vector<16x16xf32>
    %92 = arith.subf %14, %91 : vector<16x16xf32>
    %93 = vector.broadcast %72 : vector<16x1xf32> to vector<16x16xf32>
    %94 = arith.mulf %92, %93 : vector<16x16xf32>
    %cst_50 = arith.constant 0.000000e+00 : f32
    %95 = vector.broadcast %cst_50 : f32 to vector<16x16xf32>
    %96 = arith.maximumf %94, %95 : vector<16x16xf32>
    %c0_51 = arith.constant 0 : index
    %c2_52 = arith.constant 2 : index
    %c0_53 = arith.constant 0 : index
    %c0_54 = arith.constant 0 : index
    %97 = vector.load %arg3[%c0_51, %c2_52, %c0_53, %c0_54] : memref<1x4x16x16xf32, #tpu.memory_space<vmem>>, vector<1x1x16x16xf32>
    %98 = vector.shape_cast %97 : vector<1x1x16x16xf32> to vector<16x16xf32>
    %99 = vector.shape_cast %96 : vector<16x16xf32> to vector<1x1x16x16xf32>
    tpu.vector_store %arg3[%c0_51, %c2_52, %c0_53, %c0_54], %99 {strides = array<i32>} : memref<1x4x16x16xf32, #tpu.memory_space<vmem>>, vector<1x1x16x16xf32>,
    %100 = vector.broadcast %34 : vector<16x1xf32> to vector<16x16xf32>
    %101 = arith.subf %19, %100 : vector<16x16xf32>
    %102 = vector.broadcast %72 : vector<16x1xf32> to vector<16x16xf32>
    %103 = arith.mulf %101, %102 : vector<16x16xf32>
    %cst_55 = arith.constant 0.000000e+00 : f32
    %104 = vector.broadcast %cst_55 : f32 to vector<16x16xf32>
    %105 = arith.maximumf %103, %104 : vector<16x16xf32>
    %c0_56 = arith.constant 0 : index
    %c3_57 = arith.constant 3 : index
    %c0_58 = arith.constant 0 : index
    %c0_59 = arith.constant 0 : index
    %106 = vector.load %arg3[%c0_56, %c3_57, %c0_58, %c0_59] : memref<1x4x16x16xf32, #tpu.memory_space<vmem>>, vector<1x1x16x16xf32>
    %107 = vector.shape_cast %106 : vector<1x1x16x16xf32> to vector<16x16xf32>
    %108 = vector.shape_cast %105 : vector<16x16xf32> to vector<1x1x16x16xf32>
    tpu.vector_store %arg3[%c0_56, %c3_57, %c0_58, %c0_59], %108 {strides = array<i32>} : memref<1x4x16x16xf32, #tpu.memory_space<vmem>>, vector<1x1x16x16xf32>,
    return
  }
  func.func @transform_0(%arg0: i32) -> (i32, i32, i32, i32) {
    %c0_i32 = arith.constant 0 : i32
    %c0_i32_0 = arith.constant 0 : i32
    %c0_i32_1 = arith.constant 0 : i32
    %c0_i32_2 = arith.constant 0 : i32
    return %arg0, %c0_i32, %c0_i32_0, %c0_i32_1 : i32, i32, i32, i32
  }
  func.func @transform_1(%arg0: i32) -> (i32, i32, i32) {
    %c0_i32 = arith.constant 0 : i32
    %c0_i32_0 = arith.constant 0 : i32
    %c0_i32_1 = arith.constant 0 : i32
    %c0_i32_2 = arith.constant 0 : i32
    return %c0_i32, %c0_i32_0, %c0_i32_1 : i32, i32, i32
  }
  func.func @transform_2(%arg0: i32) -> (i32, i32, i32, i32) {
    %c0_i32 = arith.constant 0 : i32
    %c0_i32_0 = arith.constant 0 : i32
    %c0_i32_1 = arith.constant 0 : i32
    %c0_i32_2 = arith.constant 0 : i32
    return %arg0, %c0_i32, %c0_i32_0, %c0_i32_1 : i32, i32, i32, i32
  }
}

module attributes {stable_mosaic.version = 11 : i64} {
  func.func @_fused_up_kernel(%arg0: i32, %arg1: memref<1x4x128x64xbf16, #tpu.memory_space<vmem>>, %arg2: memref<4x8x128xbf16, #tpu.memory_space<vmem>>, %arg3: memref<1x4x8x64xf32, #tpu.memory_space<vmem>>) attributes {dimension_semantics = [#tpu.dimension_semantics<parallel>], iteration_bounds = array<i64: 2>, scalar_prefetch = 0 : i64, scratch_operands = 0 : i64, tpu.core_type = #tpu.core_type<tc>, window_params = [{transform_indices = @transform_0, window_bounds = array<i64: 1, 4, 128, 64>}, {pipeline_mode = #tpu.pipeline_mode<synchronous>, transform_indices = @transform_1, window_bounds = array<i64: 4, 8, 128>}, {transform_indices = @transform_2, window_bounds = array<i64: 1, 4, 8, 64>}]} {
    %c0 = arith.constant 0 : index
    %c0_0 = arith.constant 0 : index
    %c0_1 = arith.constant 0 : index
    %0 = vector.load %arg2[%c0, %c0_0, %c0_1] : memref<4x8x128xbf16, #tpu.memory_space<vmem>>, vector<1x8x128xbf16>
    %1 = vector.shape_cast %0 : vector<1x8x128xbf16> to vector<8x128xbf16>
    %c0_2 = arith.constant 0 : index
    %c0_3 = arith.constant 0 : index
    %c0_4 = arith.constant 0 : index
    %c0_5 = arith.constant 0 : index
    %2 = vector.load %arg1[%c0_2, %c0_3, %c0_4, %c0_5] : memref<1x4x128x64xbf16, #tpu.memory_space<vmem>>, vector<1x1x128x64xbf16>
    %3 = vector.shape_cast %2 : vector<1x1x128x64xbf16> to vector<128x64xbf16>
    %cst = arith.constant dense<0.000000e+00> : vector<8x64xf32>
    %4 = tpu.matmul %1, %3, %cst {dimension_numbers = #tpu.dot_dimension_numbers<[1], [0], [0], [1], [0, 0, 1, 1], [], []>} : vector<8x128xbf16>, vector<128x64xbf16>, vector<8x64xf32> -> vector<8x64xf32>
    %c1 = arith.constant 1 : index
    %c0_6 = arith.constant 0 : index
    %c0_7 = arith.constant 0 : index
    %5 = vector.load %arg2[%c1, %c0_6, %c0_7] : memref<4x8x128xbf16, #tpu.memory_space<vmem>>, vector<1x8x128xbf16>
    %6 = vector.shape_cast %5 : vector<1x8x128xbf16> to vector<8x128xbf16>
    %c0_8 = arith.constant 0 : index
    %c1_9 = arith.constant 1 : index
    %c0_10 = arith.constant 0 : index
    %c0_11 = arith.constant 0 : index
    %7 = vector.load %arg1[%c0_8, %c1_9, %c0_10, %c0_11] : memref<1x4x128x64xbf16, #tpu.memory_space<vmem>>, vector<1x1x128x64xbf16>
    %8 = vector.shape_cast %7 : vector<1x1x128x64xbf16> to vector<128x64xbf16>
    %cst_12 = arith.constant dense<0.000000e+00> : vector<8x64xf32>
    %9 = tpu.matmul %6, %8, %cst_12 {dimension_numbers = #tpu.dot_dimension_numbers<[1], [0], [0], [1], [0, 0, 1, 1], [], []>} : vector<8x128xbf16>, vector<128x64xbf16>, vector<8x64xf32> -> vector<8x64xf32>
    %c2 = arith.constant 2 : index
    %c0_13 = arith.constant 0 : index
    %c0_14 = arith.constant 0 : index
    %10 = vector.load %arg2[%c2, %c0_13, %c0_14] : memref<4x8x128xbf16, #tpu.memory_space<vmem>>, vector<1x8x128xbf16>
    %11 = vector.shape_cast %10 : vector<1x8x128xbf16> to vector<8x128xbf16>
    %c0_15 = arith.constant 0 : index
    %c2_16 = arith.constant 2 : index
    %c0_17 = arith.constant 0 : index
    %c0_18 = arith.constant 0 : index
    %12 = vector.load %arg1[%c0_15, %c2_16, %c0_17, %c0_18] : memref<1x4x128x64xbf16, #tpu.memory_space<vmem>>, vector<1x1x128x64xbf16>
    %13 = vector.shape_cast %12 : vector<1x1x128x64xbf16> to vector<128x64xbf16>
    %cst_19 = arith.constant dense<0.000000e+00> : vector<8x64xf32>
    %14 = tpu.matmul %11, %13, %cst_19 {dimension_numbers = #tpu.dot_dimension_numbers<[1], [0], [0], [1], [0, 0, 1, 1], [], []>} : vector<8x128xbf16>, vector<128x64xbf16>, vector<8x64xf32> -> vector<8x64xf32>
    %c3 = arith.constant 3 : index
    %c0_20 = arith.constant 0 : index
    %c0_21 = arith.constant 0 : index
    %15 = vector.load %arg2[%c3, %c0_20, %c0_21] : memref<4x8x128xbf16, #tpu.memory_space<vmem>>, vector<1x8x128xbf16>
    %16 = vector.shape_cast %15 : vector<1x8x128xbf16> to vector<8x128xbf16>
    %c0_22 = arith.constant 0 : index
    %c3_23 = arith.constant 3 : index
    %c0_24 = arith.constant 0 : index
    %c0_25 = arith.constant 0 : index
    %17 = vector.load %arg1[%c0_22, %c3_23, %c0_24, %c0_25] : memref<1x4x128x64xbf16, #tpu.memory_space<vmem>>, vector<1x1x128x64xbf16>
    %18 = vector.shape_cast %17 : vector<1x1x128x64xbf16> to vector<128x64xbf16>
    %cst_26 = arith.constant dense<0.000000e+00> : vector<8x64xf32>
    %19 = tpu.matmul %16, %18, %cst_26 {dimension_numbers = #tpu.dot_dimension_numbers<[1], [0], [0], [1], [0, 0, 1, 1], [], []>} : vector<8x128xbf16>, vector<128x64xbf16>, vector<8x64xf32> -> vector<8x64xf32>
    %cst_27 = arith.constant dense<0.000000e+00> : vector<8xf32>
    %20 = vector.multi_reduction <add>, %4, %cst_27 [1] : vector<8x64xf32> to vector<8xf32>
    %21 = vector.shape_cast %20 : vector<8xf32> to vector<8x1xf32>
    %cst_28 = arith.constant 0.000000e+00 : f32
    %22 = vector.broadcast %cst_28 : f32 to vector<8x1xf32>
    %23 = arith.addf %22, %21 : vector<8x1xf32>
    %cst_29 = arith.constant dense<0.000000e+00> : vector<8xf32>
    %24 = vector.multi_reduction <add>, %9, %cst_29 [1] : vector<8x64xf32> to vector<8xf32>
    %25 = vector.shape_cast %24 : vector<8xf32> to vector<8x1xf32>
    %26 = arith.addf %23, %25 : vector<8x1xf32>
    %cst_30 = arith.constant dense<0.000000e+00> : vector<8xf32>
    %27 = vector.multi_reduction <add>, %14, %cst_30 [1] : vector<8x64xf32> to vector<8xf32>
    %28 = vector.shape_cast %27 : vector<8xf32> to vector<8x1xf32>
    %29 = arith.addf %26, %28 : vector<8x1xf32>
    %cst_31 = arith.constant dense<0.000000e+00> : vector<8xf32>
    %30 = vector.multi_reduction <add>, %19, %cst_31 [1] : vector<8x64xf32> to vector<8xf32>
    %31 = vector.shape_cast %30 : vector<8xf32> to vector<8x1xf32>
    %32 = arith.addf %29, %31 : vector<8x1xf32>
    %cst_32 = arith.constant 2.560000e+02 : f32
    %33 = vector.broadcast %cst_32 : f32 to vector<8x1xf32>
    %34 = arith.divf %32, %33 : vector<8x1xf32>
    %35 = vector.broadcast %34 : vector<8x1xf32> to vector<8x64xf32>
    %36 = arith.subf %4, %35 : vector<8x64xf32>
    %37 = vector.broadcast %34 : vector<8x1xf32> to vector<8x64xf32>
    %38 = arith.subf %4, %37 : vector<8x64xf32>
    %39 = arith.mulf %36, %38 : vector<8x64xf32>
    %cst_33 = arith.constant dense<0.000000e+00> : vector<8xf32>
    %40 = vector.multi_reduction <add>, %39, %cst_33 [1] : vector<8x64xf32> to vector<8xf32>
    %41 = vector.shape_cast %40 : vector<8xf32> to vector<8x1xf32>
    %cst_34 = arith.constant 0.000000e+00 : f32
    %42 = vector.broadcast %cst_34 : f32 to vector<8x1xf32>
    %43 = arith.addf %42, %41 : vector<8x1xf32>
    %44 = vector.broadcast %34 : vector<8x1xf32> to vector<8x64xf32>
    %45 = arith.subf %9, %44 : vector<8x64xf32>
    %46 = vector.broadcast %34 : vector<8x1xf32> to vector<8x64xf32>
    %47 = arith.subf %9, %46 : vector<8x64xf32>
    %48 = arith.mulf %45, %47 : vector<8x64xf32>
    %cst_35 = arith.constant dense<0.000000e+00> : vector<8xf32>
    %49 = vector.multi_reduction <add>, %48, %cst_35 [1] : vector<8x64xf32> to vector<8xf32>
    %50 = vector.shape_cast %49 : vector<8xf32> to vector<8x1xf32>
    %51 = arith.addf %43, %50 : vector<8x1xf32>
    %52 = vector.broadcast %34 : vector<8x1xf32> to vector<8x64xf32>
    %53 = arith.subf %14, %52 : vector<8x64xf32>
    %54 = vector.broadcast %34 : vector<8x1xf32> to vector<8x64xf32>
    %55 = arith.subf %14, %54 : vector<8x64xf32>
    %56 = arith.mulf %53, %55 : vector<8x64xf32>
    %cst_36 = arith.constant dense<0.000000e+00> : vector<8xf32>
    %57 = vector.multi_reduction <add>, %56, %cst_36 [1] : vector<8x64xf32> to vector<8xf32>
    %58 = vector.shape_cast %57 : vector<8xf32> to vector<8x1xf32>
    %59 = arith.addf %51, %58 : vector<8x1xf32>
    %60 = vector.broadcast %34 : vector<8x1xf32> to vector<8x64xf32>
    %61 = arith.subf %19, %60 : vector<8x64xf32>
    %62 = vector.broadcast %34 : vector<8x1xf32> to vector<8x64xf32>
    %63 = arith.subf %19, %62 : vector<8x64xf32>
    %64 = arith.mulf %61, %63 : vector<8x64xf32>
    %cst_37 = arith.constant dense<0.000000e+00> : vector<8xf32>
    %65 = vector.multi_reduction <add>, %64, %cst_37 [1] : vector<8x64xf32> to vector<8xf32>
    %66 = vector.shape_cast %65 : vector<8xf32> to vector<8x1xf32>
    %67 = arith.addf %59, %66 : vector<8x1xf32>
    %cst_38 = arith.constant 2.560000e+02 : f32
    %68 = vector.broadcast %cst_38 : f32 to vector<8x1xf32>
    %69 = arith.divf %67, %68 : vector<8x1xf32>
    %cst_39 = arith.constant 9.99999974E-6 : f32
    %70 = vector.broadcast %cst_39 : f32 to vector<8x1xf32>
    %71 = arith.addf %69, %70 : vector<8x1xf32>
    %72 = math.rsqrt %71 : vector<8x1xf32>
    %73 = vector.broadcast %34 : vector<8x1xf32> to vector<8x64xf32>
    %74 = arith.subf %4, %73 : vector<8x64xf32>
    %75 = vector.broadcast %72 : vector<8x1xf32> to vector<8x64xf32>
    %76 = arith.mulf %74, %75 : vector<8x64xf32>
    %cst_40 = arith.constant 0.000000e+00 : f32
    %77 = vector.broadcast %cst_40 : f32 to vector<8x64xf32>
    %78 = arith.maximumf %76, %77 : vector<8x64xf32>
    %c0_41 = arith.constant 0 : index
    %c0_42 = arith.constant 0 : index
    %c0_43 = arith.constant 0 : index
    %c0_44 = arith.constant 0 : index
    %79 = vector.load %arg3[%c0_41, %c0_42, %c0_43, %c0_44] : memref<1x4x8x64xf32, #tpu.memory_space<vmem>>, vector<1x1x8x64xf32>
    %80 = vector.shape_cast %79 : vector<1x1x8x64xf32> to vector<8x64xf32>
    %81 = vector.shape_cast %78 : vector<8x64xf32> to vector<1x1x8x64xf32>
    tpu.vector_store %arg3[%c0_41, %c0_42, %c0_43, %c0_44], %81 {strides = array<i32>} : memref<1x4x8x64xf32, #tpu.memory_space<vmem>>, vector<1x1x8x64xf32>,
    %82 = vector.broadcast %34 : vector<8x1xf32> to vector<8x64xf32>
    %83 = arith.subf %9, %82 : vector<8x64xf32>
    %84 = vector.broadcast %72 : vector<8x1xf32> to vector<8x64xf32>
    %85 = arith.mulf %83, %84 : vector<8x64xf32>
    %cst_45 = arith.constant 0.000000e+00 : f32
    %86 = vector.broadcast %cst_45 : f32 to vector<8x64xf32>
    %87 = arith.maximumf %85, %86 : vector<8x64xf32>
    %c0_46 = arith.constant 0 : index
    %c1_47 = arith.constant 1 : index
    %c0_48 = arith.constant 0 : index
    %c0_49 = arith.constant 0 : index
    %88 = vector.load %arg3[%c0_46, %c1_47, %c0_48, %c0_49] : memref<1x4x8x64xf32, #tpu.memory_space<vmem>>, vector<1x1x8x64xf32>
    %89 = vector.shape_cast %88 : vector<1x1x8x64xf32> to vector<8x64xf32>
    %90 = vector.shape_cast %87 : vector<8x64xf32> to vector<1x1x8x64xf32>
    tpu.vector_store %arg3[%c0_46, %c1_47, %c0_48, %c0_49], %90 {strides = array<i32>} : memref<1x4x8x64xf32, #tpu.memory_space<vmem>>, vector<1x1x8x64xf32>,
    %91 = vector.broadcast %34 : vector<8x1xf32> to vector<8x64xf32>
    %92 = arith.subf %14, %91 : vector<8x64xf32>
    %93 = vector.broadcast %72 : vector<8x1xf32> to vector<8x64xf32>
    %94 = arith.mulf %92, %93 : vector<8x64xf32>
    %cst_50 = arith.constant 0.000000e+00 : f32
    %95 = vector.broadcast %cst_50 : f32 to vector<8x64xf32>
    %96 = arith.maximumf %94, %95 : vector<8x64xf32>
    %c0_51 = arith.constant 0 : index
    %c2_52 = arith.constant 2 : index
    %c0_53 = arith.constant 0 : index
    %c0_54 = arith.constant 0 : index
    %97 = vector.load %arg3[%c0_51, %c2_52, %c0_53, %c0_54] : memref<1x4x8x64xf32, #tpu.memory_space<vmem>>, vector<1x1x8x64xf32>
    %98 = vector.shape_cast %97 : vector<1x1x8x64xf32> to vector<8x64xf32>
    %99 = vector.shape_cast %96 : vector<8x64xf32> to vector<1x1x8x64xf32>
    tpu.vector_store %arg3[%c0_51, %c2_52, %c0_53, %c0_54], %99 {strides = array<i32>} : memref<1x4x8x64xf32, #tpu.memory_space<vmem>>, vector<1x1x8x64xf32>,
    %100 = vector.broadcast %34 : vector<8x1xf32> to vector<8x64xf32>
    %101 = arith.subf %19, %100 : vector<8x64xf32>
    %102 = vector.broadcast %72 : vector<8x1xf32> to vector<8x64xf32>
    %103 = arith.mulf %101, %102 : vector<8x64xf32>
    %cst_55 = arith.constant 0.000000e+00 : f32
    %104 = vector.broadcast %cst_55 : f32 to vector<8x64xf32>
    %105 = arith.maximumf %103, %104 : vector<8x64xf32>
    %c0_56 = arith.constant 0 : index
    %c3_57 = arith.constant 3 : index
    %c0_58 = arith.constant 0 : index
    %c0_59 = arith.constant 0 : index
    %106 = vector.load %arg3[%c0_56, %c3_57, %c0_58, %c0_59] : memref<1x4x8x64xf32, #tpu.memory_space<vmem>>, vector<1x1x8x64xf32>
    %107 = vector.shape_cast %106 : vector<1x1x8x64xf32> to vector<8x64xf32>
    %108 = vector.shape_cast %105 : vector<8x64xf32> to vector<1x1x8x64xf32>
    tpu.vector_store %arg3[%c0_56, %c3_57, %c0_58, %c0_59], %108 {strides = array<i32>} : memref<1x4x8x64xf32, #tpu.memory_space<vmem>>, vector<1x1x8x64xf32>,
    return
  }
  func.func @transform_0(%arg0: i32) -> (i32, i32, i32, i32) {
    %c0_i32 = arith.constant 0 : i32
    %c0_i32_0 = arith.constant 0 : i32
    %c0_i32_1 = arith.constant 0 : i32
    %c0_i32_2 = arith.constant 0 : i32
    return %arg0, %c0_i32, %c0_i32_0, %c0_i32_1 : i32, i32, i32, i32
  }
  func.func @transform_1(%arg0: i32) -> (i32, i32, i32) {
    %c0_i32 = arith.constant 0 : i32
    %c0_i32_0 = arith.constant 0 : i32
    %c0_i32_1 = arith.constant 0 : i32
    %c0_i32_2 = arith.constant 0 : i32
    return %c0_i32, %c0_i32_0, %c0_i32_1 : i32, i32, i32
  }
  func.func @transform_2(%arg0: i32) -> (i32, i32, i32, i32) {
    %c0_i32 = arith.constant 0 : i32
    %c0_i32_0 = arith.constant 0 : i32
    %c0_i32_1 = arith.constant 0 : i32
    %c0_i32_2 = arith.constant 0 : i32
    return %arg0, %c0_i32, %c0_i32_0, %c0_i32_1 : i32, i32, i32, i32
  }
}

module attributes {stable_mosaic.version = 11 : i64} {
  func.func @_fused_conv_kernel(%arg0: i32, %arg1: memref<1x512x256xbf16, #tpu.memory_space<vmem>>, %arg2: memref<8x512xbf16, #tpu.memory_space<vmem>>, %arg3: memref<8x1xf32, #tpu.memory_space<vmem>>, %arg4: memref<1x8x256xf32, #tpu.memory_space<vmem>>) attributes {dimension_semantics = [#tpu.dimension_semantics<parallel>], iteration_bounds = array<i64: 2>, scalar_prefetch = 0 : i64, scratch_operands = 0 : i64, tpu.core_type = #tpu.core_type<tc>, window_params = [{transform_indices = @transform_0, window_bounds = array<i64: 1, 512, 256>}, {pipeline_mode = #tpu.pipeline_mode<synchronous>, transform_indices = @transform_1, window_bounds = array<i64: 8, 512>}, {pipeline_mode = #tpu.pipeline_mode<synchronous>, transform_indices = @transform_2, window_bounds = array<i64: 8, 1>}, {transform_indices = @transform_3, window_bounds = array<i64: 1, 8, 256>}]} {
    %c0 = arith.constant 0 : index
    %c0_0 = arith.constant 0 : index
    %0 = vector.load %arg2[%c0, %c0_0] : memref<8x512xbf16, #tpu.memory_space<vmem>>, vector<8x512xbf16>
    %c0_1 = arith.constant 0 : index
    %c0_2 = arith.constant 0 : index
    %c0_3 = arith.constant 0 : index
    %1 = vector.load %arg1[%c0_1, %c0_2, %c0_3] : memref<1x512x256xbf16, #tpu.memory_space<vmem>>, vector<1x512x256xbf16>
    %2 = vector.shape_cast %1 : vector<1x512x256xbf16> to vector<512x256xbf16>
    %cst = arith.constant dense<0.000000e+00> : vector<8x256xf32>
    %3 = tpu.matmul %0, %2, %cst {dimension_numbers = #tpu.dot_dimension_numbers<[1], [0], [0], [1], [0, 0, 1, 1], [], []>} : vector<8x512xbf16>, vector<512x256xbf16>, vector<8x256xf32> -> vector<8x256xf32>
    %c0_4 = arith.constant 0 : index
    %c0_5 = arith.constant 0 : index
    %4 = vector.load %arg3[%c0_4, %c0_5] : memref<8x1xf32, #tpu.memory_space<vmem>>, vector<8x1xf32>
    %5 = vector.broadcast %4 : vector<8x1xf32> to vector<8x256xf32>
    %6 = arith.addf %3, %5 : vector<8x256xf32>
    %7 = math.tanh %6 : vector<8x256xf32>
    %c0_6 = arith.constant 0 : index
    %c0_7 = arith.constant 0 : index
    %c0_8 = arith.constant 0 : index
    %8 = vector.load %arg4[%c0_6, %c0_7, %c0_8] : memref<1x8x256xf32, #tpu.memory_space<vmem>>, vector<1x8x256xf32>
    %9 = vector.shape_cast %8 : vector<1x8x256xf32> to vector<8x256xf32>
    %10 = vector.shape_cast %7 : vector<8x256xf32> to vector<1x8x256xf32>
    tpu.vector_store %arg4[%c0_6, %c0_7, %c0_8], %10 {strides = array<i32>} : memref<1x8x256xf32, #tpu.memory_space<vmem>>, vector<1x8x256xf32>,
    return
  }
  func.func @transform_0(%arg0: i32) -> (i32, i32, i32) {
    %c0_i32 = arith.constant 0 : i32
    %c0_i32_0 = arith.constant 0 : i32
    %c0_i32_1 = arith.constant 0 : i32
    return %arg0, %c0_i32, %c0_i32_0 : i32, i32, i32
  }
  func.func @transform_1(%arg0: i32) -> (i32, i32) {
    %c0_i32 = arith.constant 0 : i32
    %c0_i32_0 = arith.constant 0 : i32
    %c0_i32_1 = arith.constant 0 : i32
    return %c0_i32, %c0_i32_0 : i32, i32
  }
  func.func @transform_2(%arg0: i32) -> (i32, i32) {
    %c0_i32 = arith.constant 0 : i32
    %c0_i32_0 = arith.constant 0 : i32
    %c0_i32_1 = arith.constant 0 : i32
    return %c0_i32, %c0_i32_0 : i32, i32
  }
  func.func @transform_3(%arg0: i32) -> (i32, i32, i32) {
    %c0_i32 = arith.constant 0 : i32
    %c0_i32_0 = arith.constant 0 : i32
    %c0_i32_1 = arith.constant 0 : i32
    return %arg0, %c0_i32, %c0_i32_0 : i32, i32, i32
  }
}

</mosaic_0001>

<llo_original>
// kernel: residual_generator_forward.10
$region0: #{residual_generator_forward.10}
  #allocation0 [shape = 'u32[]', space=smem, size = 0x4, offset = 0x4, fixed_abs, tag = 'smem constant byte address 0x4 - core index']
  #allocation1 [shape = 'u32[144,128]{1,0:T(1,128)}', space=vmem, size = 0x12000, scoped, tag = 'internal scratch']
  %s0 = inlined_call_operand.vmem [shape: bf16[2,256,256], index: 0, kind: input, shape index: {}]
  %s1 = inlined_call_operand.vmem [shape: bf16[8,256], index: 1, kind: input, shape index: {}]
  %s2 = inlined_call_operand.vmem [shape: f32[2,8,256], index: 2, kind: output, shape index: {}]
  %s3 = sld [smem:[#allocation0]]
  $region41: #{residual_generator_forward.10} parent=0
    _
  %s5 = ssub.s32 1, %s3
  %s6 = scalar_select 0, %s5, %s3
  loop: start=0, step=1, limit=4
  $region2: #{residual_generator_forward.10} parent=0 // loop_pre_header
    _
  $region3: #{residual_generator_forward.10} parent=0 // loop_header
    %s8 = sphi 0, %s12
    %p9 = scmp.ge.s32.totalorder %s8, 4
    %s18 = sphi 0, %s20
    %s21 = sphi 0, %s18
    %s22 = sphi 0, %s21
    %s38 = sphi 0, %s22
    %s42 = sphi 0, %s42
    %s44 = sphi 0, %s42
    %s45 = sphi 0, %s44
    %s59 = sphi 0, %s45
    %s65 = sphi 0, %s67
    %s68 = sphi 0, %s65
    %s69 = sphi 0, %s68
    %s85 = sphi 0, %s69
  $region4: #{residual_generator_forward.10} parent=0 // loop_header_branch
    %11 = sbr.rel (%p9) target = $region8
  $region5: #{residual_generator_forward.10} parent=0 // loop_body
    %s13 = ssub.s32 %s8, 1
    %s14 = ssub.s32 %s8, 2
    %s15 = sadd.s32 %s8, 1
    %s16 = ssub.s32 %s8, %s15
    %p17 = scmp.eq.s32.totalorder %s16, 0
    %s19 = sadd.s32 %s18, 1
    %s20 = scalar_select %p17, %s18, %s19
    %p23 = pneg %p17
    %p24 = scmp.eq.s32.totalorder %s8, 1
    %p25 = por %p23, %p24
    %p26 = scmp.ne.s32.totalorder %s18, %s21
    %p27 = scmp.eq.s32.totalorder %s8, 0
    %p28 = por %p26, %p27
    %p29 = scmp.ne.s32.totalorder %s18, %s21
    %p30 = scmp.eq.s32.totalorder %s13, 1
    %p31 = por %p29, %p30
    %p32 = scmp.ne.s32.totalorder %s21, %s22
    %p33 = scmp.eq.s32.totalorder %s13, 0
    %p34 = por %p32, %p33
    %p35 = scmp.ne.s32.totalorder %s21, %s22
    %p36 = scmp.eq.s32.totalorder %s14, 1
    %p37 = por %p35, %p36
    %p39 = scmp.ne.s32.totalorder %s22, %s38
    %p40 = scmp.eq.s32.totalorder %s14, 0
    %p41 = por %p39, %p40
    %s43 = sadd.s32 %s42, 1
    %p46 = scmp.eq.s32.totalorder %s8, 1
    %p47 = scmp.ne.s32.totalorder %s42, %s44
    %p48 = scmp.eq.s32.totalorder %s8, 0
    %p49 = por %p47, %p48
    %p50 = scmp.ne.s32.totalorder %s42, %s44
    %p51 = scmp.eq.s32.totalorder %s13, 1
    %p52 = por %p50, %p51
    %p53 = scmp.ne.s32.totalorder %s44, %s45
    %p54 = scmp.eq.s32.totalorder %s13, 0
    %p55 = por %p53, %p54
    %p56 = scmp.ne.s32.totalorder %s44, %s45
    %p57 = scmp.eq.s32.totalorder %s14, 1
    %p58 = por %p56, %p57
    %p60 = scmp.ne.s32.totalorder %s45, %s59
    %p61 = scmp.eq.s32.totalorder %s14, 0
    %p62 = por %p60, %p61
    %s63 = ssub.s32 %s8, %s15
    %p64 = scmp.eq.s32.totalorder %s63, 0
    %s66 = sadd.s32 %s65, 1
    %s67 = scalar_select %p64, %s65, %s66
    %p70 = pneg %p64
    %p71 = scmp.eq.s32.totalorder %s8, 1
    %p72 = por %p70, %p71
    %p73 = scmp.ne.s32.totalorder %s65, %s68
    %p74 = scmp.eq.s32.totalorder %s8, 0
    %p75 = por %p73, %p74
    %p76 = scmp.ne.s32.totalorder %s65, %s68
    %p77 = scmp.eq.s32.totalorder %s13, 1
    %p78 = por %p76, %p77
    %p79 = scmp.ne.s32.totalorder %s68, %s69
    %p80 = scmp.eq.s32.totalorder %s13, 0
    %p81 = por %p79, %p80
    %p82 = scmp.ne.s32.totalorder %s68, %s69
    %p83 = scmp.eq.s32.totalorder %s14, 1
    %p84 = por %p82, %p83
    %p86 = scmp.ne.s32.totalorder %s69, %s85
    %p87 = scmp.eq.s32.totalorder %s14, 0
    %p88 = por %p86, %p87
    %p89 = scmp.le.s32.totalorder 1, %s8
    %p90 = scmp.lt.s32.totalorder %s8, 3
    %p91 = pnand %p89, %p90
    %p92 = pneg %p91
    // Predicated region
    $region9: #{residual_generator_forward.10} parent=5 // pred_check
      _
    $region10: #{residual_generator_forward.10} parent=5 // pred_check_branch
      %94 = sbr.rel (%p91) target = $region12
    $region11: #{residual_generator_forward.10} parent=5 // pred_region
      %s95 = ssub.s32 %s8, 1
      // Predicated region
      $region13: #{residual_generator_forward.10} parent=11 // pred_check
        %p96 = pneg %p55
      $region14: #{residual_generator_forward.10} parent=11 // pred_check_branch
        %98 = sbr.rel (%p96) target = $region16
      $region15: #{residual_generator_forward.10} parent=11 // pred_region
        _
      $region16: #{residual_generator_forward.10} parent=11 // pred_fallthru
        _
    $region12: #{residual_generator_forward.10} parent=5 // pred_fallthru
      _
    %p99 = scmp.lt.s32.totalorder %s8, 2
    // Predicated region
    $region17: #{residual_generator_forward.10} parent=5 // pred_check
      %p100 = pneg %p99
    $region18: #{residual_generator_forward.10} parent=5 // pred_check_branch
      %102 = sbr.rel (%p100) target = $region20
    $region19: #{residual_generator_forward.10} parent=5 // pred_region
      // Predicated region
      $region21: #{residual_generator_forward.10} parent=19 // pred_check
        %p103 = pneg %p28
      $region22: #{residual_generator_forward.10} parent=19 // pred_check_branch
        %105 = sbr.rel (%p103) target = $region24
      $region23: #{residual_generator_forward.10} parent=19 // pred_region
        %p106 = scmp.lt.s32.totalorder %s8, 1
        %s107 = scalar_select %p106, %s8, 1
        %s108 = smul.addr %s107, 64
        %s109 = smul.addr %s108, 4
        %s110 = scalar_lea.vmem %s0, %s109
      $region24: #{residual_generator_forward.10} parent=19 // pred_fallthru
        _
    $region20: #{residual_generator_forward.10} parent=5 // pred_fallthru
      _
    %p111 = scmp.le.s32.totalorder 1, %s8
    %p112 = scmp.lt.s32.totalorder %s8, 3
    %p113 = pnand %p111, %p112
    %p114 = pneg %p113
    // Predicated region
    $region25: #{residual_generator_forward.10} parent=5 // pred_check
      _
    $region26: #{residual_generator_forward.10} parent=5 // pred_check_branch
      %116 = sbr.rel (%p113) target = $region28
    $region27: #{residual_generator_forward.10} parent=5 // pred_region
      %s117 = ssub.s32 %s8, 1
      %p118 = scmp.lt.s32.totalorder %s13, 1
      %s119 = scalar_select %p118, %s13, 1
      %s120 = smul.addr %s119, 64
      %s121 = smul.addr %s120, 4
      %s122 = scalar_lea.vmem %s0, %s121
      %p123 = pneg %p34
      %p124 = pneg %p31
      %p125 = pneg %p55
      %p126 = pneg %p52
      %p127 = pneg %p81
      %p128 = pneg %p78
      %p129 = scmp.lt.s32.totalorder %s13, 1
      %s130 = scalar_select %p129, %s13, 1
      %s131 = smul.addr %s130, 2
      %s132 = smul.addr %s131, 8
      %s133 = scalar_lea.vmem %s2, %s132
      %p134 = scmp.lt.s32.totalorder %s13, 1
      %s135 = scalar_select %p134, %s13, 1
      %s136 = smul.addr %s135, 64
      %s137 = smul.addr %s136, 4
      %s138 = scalar_lea.vmem %s0, %s137
      %p139 = scmp.lt.s32.totalorder %s13, 1
      %s140 = scalar_select %p139, %s13, 1
      %s141 = smul.addr %s140, 2
      %s142 = smul.addr %s141, 8
      %s143 = scalar_lea.vmem %s2, %s142
      %v144 = vld [vmem:[%s1] sm:$0xff]
      %v145 = vld [vmem:[%s138] sm:$0xff]
      %v146 = vld [vmem:[%s138 + $0x8] sm:$0xff]
      %v147 = vld [vmem:[%s138 + $0x10] sm:$0xff]
      %v148 = vld [vmem:[%s138 + $0x18] sm:$0xff]
      %v149 = vld [vmem:[%s138 + $0x20] sm:$0xff]
      %v150 = vld [vmem:[%s138 + $0x28] sm:$0xff]
      %v151 = vld [vmem:[%s138 + $0x30] sm:$0xff]
      %v152 = vld [vmem:[%s138 + $0x38] sm:$0xff]
      %v153 = vld [vmem:[%s138 + $0x40] sm:$0xff]
      %v154 = vld [vmem:[%s138 + $0x48] sm:$0xff]
      %v155 = vld [vmem:[%s138 + $0x50] sm:$0xff]
      %v156 = vld [vmem:[%s138 + $0x58] sm:$0xff]
      %v157 = vld [vmem:[%s138 + $0x60] sm:$0xff]
      %v158 = vld [vmem:[%s138 + $0x68] sm:$0xff]
      %v159 = vld [vmem:[%s138 + $0x70] sm:$0xff]
      %v160 = vld [vmem:[%s138 + $0x78] sm:$0xff]
      %v161 = vld [vmem:[%s138 + $0x80] sm:$0xff]
      %v162 = vld [vmem:[%s138 + $0x88] sm:$0xff]
      %v163 = vld [vmem:[%s138 + $0x90] sm:$0xff]
      %v164 = vld [vmem:[%s138 + $0x98] sm:$0xff]
      %v165 = vld [vmem:[%s138 + $0xa0] sm:$0xff]
      %v166 = vld [vmem:[%s138 + $0xa8] sm:$0xff]
      %v167 = vld [vmem:[%s138 + $0xb0] sm:$0xff]
      %v168 = vld [vmem:[%s138 + $0xb8] sm:$0xff]
      %v169 = vld [vmem:[%s138 + $0xc0] sm:$0xff]
      %v170 = vld [vmem:[%s138 + $0xc8] sm:$0xff]
      %v171 = vld [vmem:[%s138 + $0xd0] sm:$0xff]
      %v172 = vld [vmem:[%s138 + $0xd8] sm:$0xff]
      %v173 = vld [vmem:[%s138 + $0xe0] sm:$0xff]
      %v174 = vld [vmem:[%s138 + $0xe8] sm:$0xff]
      %v175 = vld [vmem:[%s138 + $0xf0] sm:$0xff]
      %v176 = vld [vmem:[%s138 + $0xf8] sm:$0xff]
      %v178 = vunpack.c.l.b16 %v144
      %v179 = vunpack.c.h.b16 %v144
      %v180 = vpack.c.b16 %v178, %v178
      %v181 = vpack.c.b16 %v179, %v179
      %v216 = vunpack.c.l.b16 %v145
      %v217 = vunpack.c.h.b16 %v145
      %v218 = vunpack.c.l.b16 %v146
      %v219 = vunpack.c.h.b16 %v146
      %v220 = vunpack.c.l.b16 %v147
      %v221 = vunpack.c.h.b16 %v147
      %v222 = vunpack.c.l.b16 %v148
      %v223 = vunpack.c.h.b16 %v148
      %v224 = vunpack.c.l.b16 %v149
      %v225 = vunpack.c.h.b16 %v149
      %v226 = vunpack.c.l.b16 %v150
      %v227 = vunpack.c.h.b16 %v150
      %v228 = vunpack.c.l.b16 %v151
      %v229 = vunpack.c.h.b16 %v151
      %v230 = vunpack.c.l.b16 %v152
      %v231 = vunpack.c.h.b16 %v152
      %v232 = vunpack.c.l.b16 %v153
      %v233 = vunpack.c.h.b16 %v153
      %v234 = vunpack.c.l.b16 %v154
      %v235 = vunpack.c.h.b16 %v154
      %v236 = vunpack.c.l.b16 %v155
      %v237 = vunpack.c.h.b16 %v155
      %v238 = vunpack.c.l.b16 %v156
      %v239 = vunpack.c.h.b16 %v156
      %v240 = vunpack.c.l.b16 %v157
      %v241 = vunpack.c.h.b16 %v157
      %v242 = vunpack.c.l.b16 %v158
      %v243 = vunpack.c.h.b16 %v158
      %v244 = vunpack.c.l.b16 %v159
      %v245 = vunpack.c.h.b16 %v159
      %v246 = vunpack.c.l.b16 %v160
      %v247 = vunpack.c.h.b16 %v160
      %v248 = vunpack.c.l.b16 %v161
      %v249 = vunpack.c.h.b16 %v161
      %v250 = vunpack.c.l.b16 %v162
      %v251 = vunpack.c.h.b16 %v162
      %v252 = vunpack.c.l.b16 %v163
      %v253 = vunpack.c.h.b16 %v163
      %v254 = vunpack.c.l.b16 %v164
      %v255 = vunpack.c.h.b16 %v164
      %v256 = vunpack.c.l.b16 %v165
      %v257 = vunpack.c.h.b16 %v165
      %v258 = vunpack.c.l.b16 %v166
      %v259 = vunpack.c.h.b16 %v166
      %v260 = vunpack.c.l.b16 %v167
      %v261 = vunpack.c.h.b16 %v167
      %v262 = vunpack.c.l.b16 %v168
      %v263 = vunpack.c.h.b16 %v168
      %v264 = vunpack.c.l.b16 %v169
      %v265 = vunpack.c.h.b16 %v169
      %v266 = vunpack.c.l.b16 %v170
      %v267 = vunpack.c.h.b16 %v170
      %v268 = vunpack.c.l.b16 %v171
      %v269 = vunpack.c.h.b16 %v171
      %v270 = vunpack.c.l.b16 %v172
      %v271 = vunpack.c.h.b16 %v172
      %v272 = vunpack.c.l.b16 %v173
      %v273 = vunpack.c.h.b16 %v173
      %v274 = vunpack.c.l.b16 %v174
      %v275 = vunpack.c.h.b16 %v174
      %v276 = vunpack.c.l.b16 %v175
      %v277 = vunpack.c.h.b16 %v175
      %v278 = vunpack.c.l.b16 %v176
      %v279 = vunpack.c.h.b16 %v176
      %v280 = vpack.c.b16 %v218, %v216
      %v281 = vpack.c.b16 %v219, %v217
      %v282 = vpack.c.b16 %v222, %v220
      %v283 = vpack.c.b16 %v223, %v221
      %v284 = vpack.c.b16 %v226, %v224
      %v285 = vpack.c.b16 %v227, %v225
      %v286 = vpack.c.b16 %v230, %v228
      %v287 = vpack.c.b16 %v231, %v229
      %v288 = vpack.c.b16 %v234, %v232
      %v289 = vpack.c.b16 %v235, %v233
      %v290 = vpack.c.b16 %v238, %v236
      %v291 = vpack.c.b16 %v239, %v237
      %v292 = vpack.c.b16 %v242, %v240
      %v293 = vpack.c.b16 %v243, %v241
      %v294 = vpack.c.b16 %v246, %v244
      %v295 = vpack.c.b16 %v247, %v245
      %v296 = vpack.c.b16 %v250, %v248
      %v297 = vpack.c.b16 %v251, %v249
      %v298 = vpack.c.b16 %v254, %v252
      %v299 = vpack.c.b16 %v255, %v253
      %v300 = vpack.c.b16 %v258, %v256
      %v301 = vpack.c.b16 %v259, %v257
      %v302 = vpack.c.b16 %v262, %v260
      %v303 = vpack.c.b16 %v263, %v261
      %v304 = vpack.c.b16 %v266, %v264
      %v305 = vpack.c.b16 %v267, %v265
      %v306 = vpack.c.b16 %v270, %v268
      %v307 = vpack.c.b16 %v271, %v269
      %v308 = vpack.c.b16 %v274, %v272
      %v309 = vpack.c.b16 %v275, %v273
      %v310 = vpack.c.b16 %v278, %v276
      %v311 = vpack.c.b16 %v279, %v277
      %344 = vmatprep.subr.bf16.mxu0 %v295
      %345 = vmatpush1.bf16.msra.mxu0 %v294
      %346 = vmatprep.subr.bf16.mxu0 %v293
      %347 = vmatpush1.bf16.msra.mxu0 %v292
      %348 = vmatprep.subr.bf16.mxu0 %v291
      %349 = vmatpush1.bf16.msra.mxu0 %v290
      %350 = vmatprep.subr.bf16.mxu0 %v289
      %351 = vmatpush1.bf16.msra.mxu0 %v288
      %352 = vmatprep.subr.bf16.mxu0 %v287
      %353 = vmatpush1.bf16.msra.mxu0 %v286
      %354 = vmatprep.subr.bf16.mxu0 %v285
      %355 = vmatpush1.bf16.msra.mxu0 %v284
      %356 = vmatprep.subr.bf16.mxu0 %v283
      %357 = vmatpush1.bf16.msra.mxu0 %v282
      %358 = vmatprep.subr.bf16.mxu0 %v281
      %359 = vmatpush1.bf16.msra.mxu0 %v280
      %360 = vmatprep.subr.bf16.mxu0 %v311
      %361 = vmatpush2.bf16.msra.mxu0 %v310
      %362 = vmatprep.subr.bf16.mxu0 %v309
      %363 = vmatpush2.bf16.msra.mxu0 %v308
      %364 = vmatprep.subr.bf16.mxu0 %v307
      %365 = vmatpush2.bf16.msra.mxu0 %v306
      %366 = vmatprep.subr.bf16.mxu0 %v305
      %367 = vmatpush2.bf16.msra.mxu0 %v304
      %368 = vmatprep.subr.bf16.mxu0 %v303
      %369 = vmatpush2.bf16.msra.mxu0 %v302
      %370 = vmatprep.subr.bf16.mxu0 %v301
      %371 = vmatpush2.bf16.msra.mxu0 %v300
      %372 = vmatprep.subr.bf16.mxu0 %v299
      %373 = vmatpush2.bf16.msra.mxu0 %v298
      %374 = vmatprep.subr.bf16.mxu0 %v297
      %375 = vmatpush2.bf16.msra.mxu0 %v296
      %376 = vmatprep.mubr.bf16.mxu0 %v181
      %377 = vmatmul.mubr.bf16.gmra.mxu0 %v180
      %v378 = vpop.f32.mrf.mxu0
      %v379 = vadd.f32 0.0, %v378
      %v380 = vpop.f32.mrf.mxu0
      %v381 = vadd.f32 0.0, %v380
      %v382 = vpop.f32.mrf.mxu0
      %v383 = vpop.f32.mrf.mxu0
      %384 = vdwg.mxu0
      %v385 = vadd.f32 %v379, %v381
      %386 = vadd.xlane.f32.xlu0 %v385
      %v387 = vpop.xlane.xlu0 %386
      %v388 = vrcp.pop 256.0
      %v389 = vmul.f32 %v387, %v388
      %v390 = vsub.f32 %v379, %v389
      %v391 = vsub.f32 %v381, %v389
      %v392 = vmul.f32 %v390, %v390
      %v393 = vmul.f32 %v391, %v391
      %v394 = vadd.f32 %v392, %v393
      %395 = vadd.xlane.f32.xlu0 %v394
      %v396 = vpop.xlane.xlu0 %395
      %v397 = vmul.f32 %v396, %v388
      %v398 = vadd.f32 %v397, 1e-05
      %v399 = vrsqrt.pop %v398
      %v400 = vmul.f32 %v390, %v399
      %v401 = vmul.f32 %v391, %v399
      %v402 = vmax.f32 %v400, 0.0
      %v403 = vmax.f32 %v401, 0.0
      %404 = vst [vmem:[%s143] sm:$0xff] %v402
      %405 = vst [vmem:[%s143 + $0x8] sm:$0xff] %v403
      %p406 = scmp.lt.s32.totalorder %s13, 1
      %s407 = scalar_select %p406, %s13, 1
      %s408 = smul.addr %s407, 2
      %s409 = smul.addr %s408, 8
      %s410 = scalar_lea.vmem %s2, %s409
      // Predicated region
      $region29: #{residual_generator_forward.10} parent=27 // pred_check
        %p411 = pneg %p78
      $region30: #{residual_generator_forward.10} parent=27 // pred_check_branch
        %413 = sbr.rel (%p411) target = $region32
      $region31: #{residual_generator_forward.10} parent=27 // pred_region
        _
      $region32: #{residual_generator_forward.10} parent=27 // pred_fallthru
        _
    $region28: #{residual_generator_forward.10} parent=5 // pred_fallthru
      _
    %p414 = scmp.le.s32.totalorder 2, %s8
    // Predicated region
    $region33: #{residual_generator_forward.10} parent=5 // pred_check
      %p415 = pneg %p414
    $region34: #{residual_generator_forward.10} parent=5 // pred_check_branch
      %417 = sbr.rel (%p415) target = $region36
    $region35: #{residual_generator_forward.10} parent=5 // pred_region
      %s418 = ssub.s32 %s8, 2
      // Predicated region
      $region37: #{residual_generator_forward.10} parent=35 // pred_check
        %p419 = pneg %p84
      $region38: #{residual_generator_forward.10} parent=35 // pred_check_branch
        %421 = sbr.rel (%p419) target = $region40
      $region39: #{residual_generator_forward.10} parent=35 // pred_region
        %p422 = scmp.lt.s32.totalorder %s14, 1
        %s423 = scalar_select %p422, %s14, 1
        %s424 = smul.addr %s423, 2
        %s425 = smul.addr %s424, 8
        %s426 = scalar_lea.vmem %s2, %s425
      $region40: #{residual_generator_forward.10} parent=35 // pred_fallthru
        _
    $region36: #{residual_generator_forward.10} parent=5 // pred_fallthru
      _
  $region6: #{residual_generator_forward.10} parent=0 // loop_footer
    %s12 = sadd.s32 1, %s8
  $region7: #{residual_generator_forward.10} parent=0 // loop_footer_branch
    %7 = sbr.rel target = $region3
  $region8: #{residual_generator_forward.10} parent=0 // loop_exit
    _

// kernel: residual_generator_forward.11
$region0: #{residual_generator_forward.11}
  #allocation0 [shape = 'u32[]', space=smem, size = 0x4, offset = 0x4, fixed_abs, tag = 'smem constant byte address 0x4 - core index']
  #allocation1 [shape = 'u32[144,128]{1,0:T(1,128)}', space=vmem, size = 0x12000, scoped, tag = 'internal scratch']
  %s0 = inlined_call_operand.vmem [shape: bf16[2,128,64], index: 0, kind: input, shape index: {}]
  %s1 = inlined_call_operand.vmem [shape: bf16[16,128], index: 1, kind: input, shape index: {}]
  %s2 = inlined_call_operand.vmem [shape: f32[2,16,64], index: 2, kind: output, shape index: {}]
  %s3 = sld [smem:[#allocation0]]
  $region41: #{residual_generator_forward.11} parent=0
    _
  %s5 = ssub.s32 1, %s3
  %s6 = scalar_select 0, %s5, %s3
  loop: start=0, step=1, limit=4
  $region2: #{residual_generator_forward.11} parent=0 // loop_pre_header
    _
  $region3: #{residual_generator_forward.11} parent=0 // loop_header
    %s8 = sphi 0, %s12
    %p9 = scmp.ge.s32.totalorder %s8, 4
    %s18 = sphi 0, %s20
    %s21 = sphi 0, %s18
    %s22 = sphi 0, %s21
    %s38 = sphi 0, %s22
    %s42 = sphi 0, %s42
    %s44 = sphi 0, %s42
    %s45 = sphi 0, %s44
    %s59 = sphi 0, %s45
    %s65 = sphi 0, %s67
    %s68 = sphi 0, %s65
    %s69 = sphi 0, %s68
    %s85 = sphi 0, %s69
  $region4: #{residual_generator_forward.11} parent=0 // loop_header_branch
    %11 = sbr.rel (%p9) target = $region8
  $region5: #{residual_generator_forward.11} parent=0 // loop_body
    %s13 = ssub.s32 %s8, 1
    %s14 = ssub.s32 %s8, 2
    %s15 = sadd.s32 %s8, 1
    %s16 = ssub.s32 %s8, %s15
    %p17 = scmp.eq.s32.totalorder %s16, 0
    %s19 = sadd.s32 %s18, 1
    %s20 = scalar_select %p17, %s18, %s19
    %p23 = pneg %p17
    %p24 = scmp.eq.s32.totalorder %s8, 1
    %p25 = por %p23, %p24
    %p26 = scmp.ne.s32.totalorder %s18, %s21
    %p27 = scmp.eq.s32.totalorder %s8, 0
    %p28 = por %p26, %p27
    %p29 = scmp.ne.s32.totalorder %s18, %s21
    %p30 = scmp.eq.s32.totalorder %s13, 1
    %p31 = por %p29, %p30
    %p32 = scmp.ne.s32.totalorder %s21, %s22
    %p33 = scmp.eq.s32.totalorder %s13, 0
    %p34 = por %p32, %p33
    %p35 = scmp.ne.s32.totalorder %s21, %s22
    %p36 = scmp.eq.s32.totalorder %s14, 1
    %p37 = por %p35, %p36
    %p39 = scmp.ne.s32.totalorder %s22, %s38
    %p40 = scmp.eq.s32.totalorder %s14, 0
    %p41 = por %p39, %p40
    %s43 = sadd.s32 %s42, 1
    %p46 = scmp.eq.s32.totalorder %s8, 1
    %p47 = scmp.ne.s32.totalorder %s42, %s44
    %p48 = scmp.eq.s32.totalorder %s8, 0
    %p49 = por %p47, %p48
    %p50 = scmp.ne.s32.totalorder %s42, %s44
    %p51 = scmp.eq.s32.totalorder %s13, 1
    %p52 = por %p50, %p51
    %p53 = scmp.ne.s32.totalorder %s44, %s45
    %p54 = scmp.eq.s32.totalorder %s13, 0
    %p55 = por %p53, %p54
    %p56 = scmp.ne.s32.totalorder %s44, %s45
    %p57 = scmp.eq.s32.totalorder %s14, 1
    %p58 = por %p56, %p57
    %p60 = scmp.ne.s32.totalorder %s45, %s59
    %p61 = scmp.eq.s32.totalorder %s14, 0
    %p62 = por %p60, %p61
    %s63 = ssub.s32 %s8, %s15
    %p64 = scmp.eq.s32.totalorder %s63, 0
    %s66 = sadd.s32 %s65, 1
    %s67 = scalar_select %p64, %s65, %s66
    %p70 = pneg %p64
    %p71 = scmp.eq.s32.totalorder %s8, 1
    %p72 = por %p70, %p71
    %p73 = scmp.ne.s32.totalorder %s65, %s68
    %p74 = scmp.eq.s32.totalorder %s8, 0
    %p75 = por %p73, %p74
    %p76 = scmp.ne.s32.totalorder %s65, %s68
    %p77 = scmp.eq.s32.totalorder %s13, 1
    %p78 = por %p76, %p77
    %p79 = scmp.ne.s32.totalorder %s68, %s69
    %p80 = scmp.eq.s32.totalorder %s13, 0
    %p81 = por %p79, %p80
    %p82 = scmp.ne.s32.totalorder %s68, %s69
    %p83 = scmp.eq.s32.totalorder %s14, 1
    %p84 = por %p82, %p83
    %p86 = scmp.ne.s32.totalorder %s69, %s85
    %p87 = scmp.eq.s32.totalorder %s14, 0
    %p88 = por %p86, %p87
    %p89 = scmp.le.s32.totalorder 1, %s8
    %p90 = scmp.lt.s32.totalorder %s8, 3
    %p91 = pnand %p89, %p90
    %p92 = pneg %p91
    // Predicated region
    $region9: #{residual_generator_forward.11} parent=5 // pred_check
      _
    $region10: #{residual_generator_forward.11} parent=5 // pred_check_branch
      %94 = sbr.rel (%p91) target = $region12
    $region11: #{residual_generator_forward.11} parent=5 // pred_region
      %s95 = ssub.s32 %s8, 1
      // Predicated region
      $region13: #{residual_generator_forward.11} parent=11 // pred_check
        %p96 = pneg %p55
      $region14: #{residual_generator_forward.11} parent=11 // pred_check_branch
        %98 = sbr.rel (%p96) target = $region16
      $region15: #{residual_generator_forward.11} parent=11 // pred_region
        _
      $region16: #{residual_generator_forward.11} parent=11 // pred_fallthru
        _
    $region12: #{residual_generator_forward.11} parent=5 // pred_fallthru
      _
    %p99 = scmp.lt.s32.totalorder %s8, 2
    // Predicated region
    $region17: #{residual_generator_forward.11} parent=5 // pred_check
      %p100 = pneg %p99
    $region18: #{residual_generator_forward.11} parent=5 // pred_check_branch
      %102 = sbr.rel (%p100) target = $region20
    $region19: #{residual_generator_forward.11} parent=5 // pred_region
      // Predicated region
      $region21: #{residual_generator_forward.11} parent=19 // pred_check
        %p103 = pneg %p28
      $region22: #{residual_generator_forward.11} parent=19 // pred_check_branch
        %105 = sbr.rel (%p103) target = $region24
      $region23: #{residual_generator_forward.11} parent=19 // pred_region
        %p106 = scmp.lt.s32.totalorder %s8, 1
        %s107 = scalar_select %p106, %s8, 1
        %s108 = smul.addr %s107, 16
        %s109 = smul.addr %s108, 4
        %s110 = scalar_lea.vmem %s0, %s109
      $region24: #{residual_generator_forward.11} parent=19 // pred_fallthru
        _
    $region20: #{residual_generator_forward.11} parent=5 // pred_fallthru
      _
    %p111 = scmp.le.s32.totalorder 1, %s8
    %p112 = scmp.lt.s32.totalorder %s8, 3
    %p113 = pnand %p111, %p112
    %p114 = pneg %p113
    // Predicated region
    $region25: #{residual_generator_forward.11} parent=5 // pred_check
      _
    $region26: #{residual_generator_forward.11} parent=5 // pred_check_branch
      %116 = sbr.rel (%p113) target = $region28
    $region27: #{residual_generator_forward.11} parent=5 // pred_region
      %s117 = ssub.s32 %s8, 1
      %p118 = scmp.lt.s32.totalorder %s13, 1
      %s119 = scalar_select %p118, %s13, 1
      %s120 = smul.addr %s119, 16
      %s121 = smul.addr %s120, 4
      %s122 = scalar_lea.vmem %s0, %s121
      %p123 = pneg %p34
      %p124 = pneg %p31
      %p125 = pneg %p55
      %p126 = pneg %p52
      %p127 = pneg %p81
      %p128 = pneg %p78
      %p129 = scmp.lt.s32.totalorder %s13, 1
      %s130 = scalar_select %p129, %s13, 1
      %s131 = smul.addr %s130, 2
      %s132 = smul.addr %s131, 8
      %s133 = scalar_lea.vmem %s2, %s132
      %p134 = scmp.lt.s32.totalorder %s13, 1
      %s135 = scalar_select %p134, %s13, 1
      %s136 = smul.addr %s135, 16
      %s137 = smul.addr %s136, 4
      %s138 = scalar_lea.vmem %s0, %s137
      %p139 = scmp.lt.s32.totalorder %s13, 1
      %s140 = scalar_select %p139, %s13, 1
      %s141 = smul.addr %s140, 2
      %s142 = smul.addr %s141, 8
      %s143 = scalar_lea.vmem %s2, %s142
      %v145 = vld [vmem:[%s1] sm:$0xf]
      %v146 = vld [vmem:[%s1 + $0x4] sm:$0xf]
      %v147 = vld [vmem:[%s138] sm:$0xf]
      %v148 = vld [vmem:[%s138 + $0x4] sm:$0xf]
      %v149 = vld [vmem:[%s138 + $0x8] sm:$0xf]
      %v150 = vld [vmem:[%s138 + $0xc] sm:$0xf]
      %v151 = vld [vmem:[%s138 + $0x10] sm:$0xf]
      %v152 = vld [vmem:[%s138 + $0x14] sm:$0xf]
      %v153 = vld [vmem:[%s138 + $0x18] sm:$0xf]
      %v154 = vld [vmem:[%s138 + $0x1c] sm:$0xf]
      %v155 = vld [vmem:[%s138 + $0x20] sm:$0xf]
      %v156 = vld [vmem:[%s138 + $0x24] sm:$0xf]
      %v157 = vld [vmem:[%s138 + $0x28] sm:$0xf]
      %v158 = vld [vmem:[%s138 + $0x2c] sm:$0xf]
      %v159 = vld [vmem:[%s138 + $0x30] sm:$0xf]
      %v160 = vld [vmem:[%s138 + $0x34] sm:$0xf]
      %v161 = vld [vmem:[%s138 + $0x38] sm:$0xf]
      %v162 = vld [vmem:[%s138 + $0x3c] sm:$0xf]
      %v165 = vunpack.c.l.b16 %v145
      %v166 = vunpack.c.l.b16 %v146
      %v167 = vpack.c.b16 %v166, %v165
      %v185 = vunpack.c.l.b16 %v147
      %v186 = vunpack.c.l.b16 %v148
      %v187 = vunpack.c.l.b16 %v149
      %v188 = vunpack.c.l.b16 %v150
      %v189 = vunpack.c.l.b16 %v151
      %v190 = vunpack.c.l.b16 %v152
      %v191 = vunpack.c.l.b16 %v153
      %v192 = vunpack.c.l.b16 %v154
      %v193 = vunpack.c.l.b16 %v155
      %v194 = vunpack.c.l.b16 %v156
      %v195 = vunpack.c.l.b16 %v157
      %v196 = vunpack.c.l.b16 %v158
      %v197 = vunpack.c.l.b16 %v159
      %v198 = vunpack.c.l.b16 %v160
      %v199 = vunpack.c.l.b16 %v161
      %v200 = vunpack.c.l.b16 %v162
      %v201 = vpack.c.b16 %v186, %v185
      %v202 = vpack.c.b16 %v188, %v187
      %v203 = vpack.c.b16 %v190, %v189
      %v204 = vpack.c.b16 %v192, %v191
      %v205 = vpack.c.b16 %v194, %v193
      %v206 = vpack.c.b16 %v196, %v195
      %v207 = vpack.c.b16 %v198, %v197
      %v208 = vpack.c.b16 %v200, %v199
      %217 = vmatprep.subr.bf16.mxu0 0
      %218 = vmatpush1.bf16.msra.mxu0 %v208
      %219 = vmatprep.subr.bf16.mxu0 0
      %220 = vmatpush1.bf16.msra.mxu0 %v207
      %221 = vmatprep.subr.bf16.mxu0 0
      %222 = vmatpush1.bf16.msra.mxu0 %v206
      %223 = vmatprep.subr.bf16.mxu0 0
      %224 = vmatpush1.bf16.msra.mxu0 %v205
      %225 = vmatprep.subr.bf16.mxu0 0
      %226 = vmatpush1.bf16.msra.mxu0 %v204
      %227 = vmatprep.subr.bf16.mxu0 0
      %228 = vmatpush1.bf16.msra.mxu0 %v203
      %229 = vmatprep.subr.bf16.mxu0 0
      %230 = vmatpush1.bf16.msra.mxu0 %v202
      %231 = vmatprep.subr.bf16.mxu0 0
      %232 = vmatpush1.bf16.msra.mxu0 %v201
      %233 = vmatprep.subr.bf16.mxu0 0
      %234 = vmatpush2.bf16.msra.mxu0 0
      %235 = vmatprep.subr.bf16.mxu0 0
      %236 = vmatpush2.bf16.msra.mxu0 0
      %237 = vmatprep.subr.bf16.mxu0 0
      %238 = vmatpush2.bf16.msra.mxu0 0
      %239 = vmatprep.subr.bf16.mxu0 0
      %240 = vmatpush2.bf16.msra.mxu0 0
      %241 = vmatprep.subr.bf16.mxu0 0
      %242 = vmatpush2.bf16.msra.mxu0 0
      %243 = vmatprep.subr.bf16.mxu0 0
      %244 = vmatpush2.bf16.msra.mxu0 0
      %245 = vmatprep.subr.bf16.mxu0 0
      %246 = vmatpush2.bf16.msra.mxu0 0
      %247 = vmatprep.subr.bf16.mxu0 0
      %248 = vmatpush2.bf16.msra.mxu0 0
      %249 = vmatprep.mubr.bf16.mxu0 0
      %250 = vmatmul.mubr.bf16.gmra.mxu0 %v167
      %v251 = vpop.f32.mrf.mxu0
      %v252 = vadd.f32 0.0, %v251
      %v253 = vpop.f32.mrf.mxu0
      %v254 = vpop.f32.mrf.mxu0
      %v255 = vadd.f32 0.0, %v254
      %v256 = vpop.f32.mrf.mxu0
      %257 = vdwg.mxu0
      %vm258 = vcmask 523264
      %v259 = vsel %vm258, %v252, 0.0
      %260 = vadd.xlane.f32.xlu0 %v259
      %v261 = vpop.xlane.xlu0 %260
      %v262 = vsel %vm258, %v255, 0.0
      %263 = vadd.xlane.f32.xlu0 %v262
      %v264 = vpop.xlane.xlu0 %263
      %v265 = vrcp.pop 64.0
      %v266 = vmul.f32 %v261, %v265
      %v267 = vmul.f32 %v264, %v265
      %v268 = vsub.f32 %v252, %v266
      %v269 = vsub.f32 %v255, %v267
      %v270 = vmul.f32 %v268, %v268
      %v271 = vmul.f32 %v269, %v269
      %v272 = vsel %vm258, %v270, 0.0
      %273 = vadd.xlane.f32.xlu0 %v272
      %v274 = vpop.xlane.xlu0 %273
      %v275 = vsel %vm258, %v271, 0.0
      %276 = vadd.xlane.f32.xlu0 %v275
      %v277 = vpop.xlane.xlu0 %276
      %v278 = vmul.f32 %v274, %v265
      %v279 = vmul.f32 %v277, %v265
      %v280 = vadd.f32 %v278, 1e-05
      %v281 = vadd.f32 %v279, 1e-05
      %v282 = vrsqrt.pop %v280
      %v283 = vrsqrt.pop %v281
      %v284 = vmul.f32 %v268, %v282
      %v285 = vmul.f32 %v269, %v283
      %v286 = vmax.f32 %v284, 0.0
      %v287 = vmax.f32 %v285, 0.0
      %288 = vst.msk [vmem:[%s143] sm:$0xff] %vm258, %v286
      %289 = vst.msk [vmem:[%s143 + $0x8] sm:$0xff] %vm258, %v287
      %p290 = scmp.lt.s32.totalorder %s13, 1
      %s291 = scalar_select %p290, %s13, 1
      %s292 = smul.addr %s291, 2
      %s293 = smul.addr %s292, 8
      %s294 = scalar_lea.vmem %s2, %s293
      // Predicated region
      $region29: #{residual_generator_forward.11} parent=27 // pred_check
        %p295 = pneg %p78
      $region30: #{residual_generator_forward.11} parent=27 // pred_check_branch
        %297 = sbr.rel (%p295) target = $region32
      $region31: #{residual_generator_forward.11} parent=27 // pred_region
        _
      $region32: #{residual_generator_forward.11} parent=27 // pred_fallthru
        _
    $region28: #{residual_generator_forward.11} parent=5 // pred_fallthru
      _
    %p298 = scmp.le.s32.totalorder 2, %s8
    // Predicated region
    $region33: #{residual_generator_forward.11} parent=5 // pred_check
      %p299 = pneg %p298
    $region34: #{residual_generator_forward.11} parent=5 // pred_check_branch
      %301 = sbr.rel (%p299) target = $region36
    $region35: #{residual_generator_forward.11} parent=5 // pred_region
      %s302 = ssub.s32 %s8, 2
      // Predicated region
      $region37: #{residual_generator_forward.11} parent=35 // pred_check
        %p303 = pneg %p84
      $region38: #{residual_generator_forward.11} parent=35 // pred_check_branch
        %305 = sbr.rel (%p303) target = $region40
      $region39: #{residual_generator_forward.11} parent=35 // pred_region
        %p306 = scmp.lt.s32.totalorder %s14, 1
        %s307 = scalar_select %p306, %s14, 1
        %s308 = smul.addr %s307, 2
        %s309 = smul.addr %s308, 8
        %s310 = scalar_lea.vmem %s2, %s309
      $region40: #{residual_generator_forward.11} parent=35 // pred_fallthru
        _
    $region36: #{residual_generator_forward.11} parent=5 // pred_fallthru
      _
  $region6: #{residual_generator_forward.11} parent=0 // loop_footer
    %s12 = sadd.s32 1, %s8
  $region7: #{residual_generator_forward.11} parent=0 // loop_footer_branch
    %7 = sbr.rel target = $region3
  $region8: #{residual_generator_forward.11} parent=0 // loop_exit
    _

// kernel: residual_generator_forward.12
$region0: #{residual_generator_forward.12}
  #allocation0 [shape = 'u32[]', space=smem, size = 0x4, offset = 0x4, fixed_abs, tag = 'smem constant byte address 0x4 - core index']
  #allocation1 [shape = 'u32[144,128]{1,0:T(1,128)}', space=vmem, size = 0x12000, scoped, tag = 'internal scratch']
  %s0 = inlined_call_operand.vmem [shape: bf16[2,256,16], index: 0, kind: input, shape index: {}]
  %s1 = inlined_call_operand.vmem [shape: bf16[32,256], index: 1, kind: input, shape index: {}]
  %s2 = inlined_call_operand.vmem [shape: f32[2,32,16], index: 2, kind: output, shape index: {}]
  %s3 = sld [smem:[#allocation0]]
  $region41: #{residual_generator_forward.12} parent=0
    _
  %s5 = ssub.s32 1, %s3
  %s6 = scalar_select 0, %s5, %s3
  loop: start=0, step=1, limit=4
  $region2: #{residual_generator_forward.12} parent=0 // loop_pre_header
    _
  $region3: #{residual_generator_forward.12} parent=0 // loop_header
    %s8 = sphi 0, %s12
    %p9 = scmp.ge.s32.totalorder %s8, 4
    %s18 = sphi 0, %s20
    %s21 = sphi 0, %s18
    %s22 = sphi 0, %s21
    %s38 = sphi 0, %s22
    %s42 = sphi 0, %s42
    %s44 = sphi 0, %s42
    %s45 = sphi 0, %s44
    %s59 = sphi 0, %s45
    %s65 = sphi 0, %s67
    %s68 = sphi 0, %s65
    %s69 = sphi 0, %s68
    %s85 = sphi 0, %s69
  $region4: #{residual_generator_forward.12} parent=0 // loop_header_branch
    %11 = sbr.rel (%p9) target = $region8
  $region5: #{residual_generator_forward.12} parent=0 // loop_body
    %s13 = ssub.s32 %s8, 1
    %s14 = ssub.s32 %s8, 2
    %s15 = sadd.s32 %s8, 1
    %s16 = ssub.s32 %s8, %s15
    %p17 = scmp.eq.s32.totalorder %s16, 0
    %s19 = sadd.s32 %s18, 1
    %s20 = scalar_select %p17, %s18, %s19
    %p23 = pneg %p17
    %p24 = scmp.eq.s32.totalorder %s8, 1
    %p25 = por %p23, %p24
    %p26 = scmp.ne.s32.totalorder %s18, %s21
    %p27 = scmp.eq.s32.totalorder %s8, 0
    %p28 = por %p26, %p27
    %p29 = scmp.ne.s32.totalorder %s18, %s21
    %p30 = scmp.eq.s32.totalorder %s13, 1
    %p31 = por %p29, %p30
    %p32 = scmp.ne.s32.totalorder %s21, %s22
    %p33 = scmp.eq.s32.totalorder %s13, 0
    %p34 = por %p32, %p33
    %p35 = scmp.ne.s32.totalorder %s21, %s22
    %p36 = scmp.eq.s32.totalorder %s14, 1
    %p37 = por %p35, %p36
    %p39 = scmp.ne.s32.totalorder %s22, %s38
    %p40 = scmp.eq.s32.totalorder %s14, 0
    %p41 = por %p39, %p40
    %s43 = sadd.s32 %s42, 1
    %p46 = scmp.eq.s32.totalorder %s8, 1
    %p47 = scmp.ne.s32.totalorder %s42, %s44
    %p48 = scmp.eq.s32.totalorder %s8, 0
    %p49 = por %p47, %p48
    %p50 = scmp.ne.s32.totalorder %s42, %s44
    %p51 = scmp.eq.s32.totalorder %s13, 1
    %p52 = por %p50, %p51
    %p53 = scmp.ne.s32.totalorder %s44, %s45
    %p54 = scmp.eq.s32.totalorder %s13, 0
    %p55 = por %p53, %p54
    %p56 = scmp.ne.s32.totalorder %s44, %s45
    %p57 = scmp.eq.s32.totalorder %s14, 1
    %p58 = por %p56, %p57
    %p60 = scmp.ne.s32.totalorder %s45, %s59
    %p61 = scmp.eq.s32.totalorder %s14, 0
    %p62 = por %p60, %p61
    %s63 = ssub.s32 %s8, %s15
    %p64 = scmp.eq.s32.totalorder %s63, 0
    %s66 = sadd.s32 %s65, 1
    %s67 = scalar_select %p64, %s65, %s66
    %p70 = pneg %p64
    %p71 = scmp.eq.s32.totalorder %s8, 1
    %p72 = por %p70, %p71
    %p73 = scmp.ne.s32.totalorder %s65, %s68
    %p74 = scmp.eq.s32.totalorder %s8, 0
    %p75 = por %p73, %p74
    %p76 = scmp.ne.s32.totalorder %s65, %s68
    %p77 = scmp.eq.s32.totalorder %s13, 1
    %p78 = por %p76, %p77
    %p79 = scmp.ne.s32.totalorder %s68, %s69
    %p80 = scmp.eq.s32.totalorder %s13, 0
    %p81 = por %p79, %p80
    %p82 = scmp.ne.s32.totalorder %s68, %s69
    %p83 = scmp.eq.s32.totalorder %s14, 1
    %p84 = por %p82, %p83
    %p86 = scmp.ne.s32.totalorder %s69, %s85
    %p87 = scmp.eq.s32.totalorder %s14, 0
    %p88 = por %p86, %p87
    %p89 = scmp.le.s32.totalorder 1, %s8
    %p90 = scmp.lt.s32.totalorder %s8, 3
    %p91 = pnand %p89, %p90
    %p92 = pneg %p91
    // Predicated region
    $region9: #{residual_generator_forward.12} parent=5 // pred_check
      _
    $region10: #{residual_generator_forward.12} parent=5 // pred_check_branch
      %94 = sbr.rel (%p91) target = $region12
    $region11: #{residual_generator_forward.12} parent=5 // pred_region
      %s95 = ssub.s32 %s8, 1
      // Predicated region
      $region13: #{residual_generator_forward.12} parent=11 // pred_check
        %p96 = pneg %p55
      $region14: #{residual_generator_forward.12} parent=11 // pred_check_branch
        %98 = sbr.rel (%p96) target = $region16
      $region15: #{residual_generator_forward.12} parent=11 // pred_region
        _
      $region16: #{residual_generator_forward.12} parent=11 // pred_fallthru
        _
    $region12: #{residual_generator_forward.12} parent=5 // pred_fallthru
      _
    %p99 = scmp.lt.s32.totalorder %s8, 2
    // Predicated region
    $region17: #{residual_generator_forward.12} parent=5 // pred_check
      %p100 = pneg %p99
    $region18: #{residual_generator_forward.12} parent=5 // pred_check_branch
      %102 = sbr.rel (%p100) target = $region20
    $region19: #{residual_generator_forward.12} parent=5 // pred_region
      // Predicated region
      $region21: #{residual_generator_forward.12} parent=19 // pred_check
        %p103 = pneg %p28
      $region22: #{residual_generator_forward.12} parent=19 // pred_check_branch
        %105 = sbr.rel (%p103) target = $region24
      $region23: #{residual_generator_forward.12} parent=19 // pred_region
        %p106 = scmp.lt.s32.totalorder %s8, 1
        %s107 = scalar_select %p106, %s8, 1
        %s108 = smul.addr %s107, 32
        %s109 = smul.addr %s108, 4
        %s110 = scalar_lea.vmem %s0, %s109
      $region24: #{residual_generator_forward.12} parent=19 // pred_fallthru
        _
    $region20: #{residual_generator_forward.12} parent=5 // pred_fallthru
      _
    %p111 = scmp.le.s32.totalorder 1, %s8
    %p112 = scmp.lt.s32.totalorder %s8, 3
    %p113 = pnand %p111, %p112
    %p114 = pneg %p113
    // Predicated region
    $region25: #{residual_generator_forward.12} parent=5 // pred_check
      _
    $region26: #{residual_generator_forward.12} parent=5 // pred_check_branch
      %116 = sbr.rel (%p113) target = $region28
    $region27: #{residual_generator_forward.12} parent=5 // pred_region
      %s117 = ssub.s32 %s8, 1
      %p118 = scmp.lt.s32.totalorder %s13, 1
      %s119 = scalar_select %p118, %s13, 1
      %s120 = smul.addr %s119, 32
      %s121 = smul.addr %s120, 4
      %s122 = scalar_lea.vmem %s0, %s121
      %p123 = pneg %p34
      %p124 = pneg %p31
      %p125 = pneg %p55
      %p126 = pneg %p52
      %p127 = pneg %p81
      %p128 = pneg %p78
      %p129 = scmp.lt.s32.totalorder %s13, 1
      %s130 = scalar_select %p129, %s13, 1
      %s131 = smul.addr %s130, 4
      %s132 = smul.addr %s131, 8
      %s133 = scalar_lea.vmem %s2, %s132
      %p134 = scmp.lt.s32.totalorder %s13, 1
      %s135 = scalar_select %p134, %s13, 1
      %s136 = smul.addr %s135, 32
      %s137 = smul.addr %s136, 4
      %s138 = scalar_lea.vmem %s0, %s137
      %p139 = scmp.lt.s32.totalorder %s13, 1
      %s140 = scalar_select %p139, %s13, 1
      %s141 = smul.addr %s140, 4
      %s142 = smul.addr %s141, 8
      %s143 = scalar_lea.vmem %s2, %s142
      %v145 = vld [vmem:[%s1] sm:$0xff]
      %v146 = vld [vmem:[%s1 + $0x8] sm:$0xff]
      %v147 = vld [vmem:[%s1 + $0x10] sm:$0xff]
      %v148 = vld [vmem:[%s1 + $0x18] sm:$0xff]
      %v149 = vld [vmem:[%s138] sm:$0xf]
      %v150 = vld [vmem:[%s138 + $0x4] sm:$0xf]
      %v151 = vld [vmem:[%s138 + $0x8] sm:$0xf]
      %v152 = vld [vmem:[%s138 + $0xc] sm:$0xf]
      %v153 = vld [vmem:[%s138 + $0x10] sm:$0xf]
      %v154 = vld [vmem:[%s138 + $0x14] sm:$0xf]
      %v155 = vld [vmem:[%s138 + $0x18] sm:$0xf]
      %v156 = vld [vmem:[%s138 + $0x1c] sm:$0xf]
      %v157 = vld [vmem:[%s138 + $0x20] sm:$0xf]
      %v158 = vld [vmem:[%s138 + $0x24] sm:$0xf]
      %v159 = vld [vmem:[%s138 + $0x28] sm:$0xf]
      %v160 = vld [vmem:[%s138 + $0x2c] sm:$0xf]
      %v161 = vld [vmem:[%s138 + $0x30] sm:$0xf]
      %v162 = vld [vmem:[%s138 + $0x34] sm:$0xf]
      %v163 = vld [vmem:[%s138 + $0x38] sm:$0xf]
      %v164 = vld [vmem:[%s138 + $0x3c] sm:$0xf]
      %v165 = vld [vmem:[%s138 + $0x40] sm:$0xf]
      %v166 = vld [vmem:[%s138 + $0x44] sm:$0xf]
      %v167 = vld [vmem:[%s138 + $0x48] sm:$0xf]
      %v168 = vld [vmem:[%s138 + $0x4c] sm:$0xf]
      %v169 = vld [vmem:[%s138 + $0x50] sm:$0xf]
      %v170 = vld [vmem:[%s138 + $0x54] sm:$0xf]
      %v171 = vld [vmem:[%s138 + $0x58] sm:$0xf]
      %v172 = vld [vmem:[%s138 + $0x5c] sm:$0xf]
      %v173 = vld [vmem:[%s138 + $0x60] sm:$0xf]
      %v174 = vld [vmem:[%s138 + $0x64] sm:$0xf]
      %v175 = vld [vmem:[%s138 + $0x68] sm:$0xf]
      %v176 = vld [vmem:[%s138 + $0x6c] sm:$0xf]
      %v177 = vld [vmem:[%s138 + $0x70] sm:$0xf]
      %v178 = vld [vmem:[%s138 + $0x74] sm:$0xf]
      %v179 = vld [vmem:[%s138 + $0x78] sm:$0xf]
      %v180 = vld [vmem:[%s138 + $0x7c] sm:$0xf]
      %v185 = vunpack.c.l.b16 %v145
      %v186 = vunpack.c.h.b16 %v145
      %v187 = vunpack.c.l.b16 %v146
      %v188 = vunpack.c.h.b16 %v146
      %v189 = vunpack.c.l.b16 %v147
      %v190 = vunpack.c.h.b16 %v147
      %v191 = vunpack.c.l.b16 %v148
      %v192 = vunpack.c.h.b16 %v148
      %v193 = vpack.c.b16 %v187, %v185
      %v194 = vpack.c.b16 %v188, %v186
      %v195 = vpack.c.b16 %v191, %v189
      %v196 = vpack.c.b16 %v192, %v190
      %v233 = vunpack.c.l.b16 %v149
      %v234 = vunpack.c.l.b16 %v150
      %v235 = vunpack.c.l.b16 %v151
      %v236 = vunpack.c.l.b16 %v152
      %v237 = vunpack.c.l.b16 %v153
      %v238 = vunpack.c.l.b16 %v154
      %v239 = vunpack.c.l.b16 %v155
      %v240 = vunpack.c.l.b16 %v156
      %v241 = vunpack.c.l.b16 %v157
      %v242 = vunpack.c.l.b16 %v158
      %v243 = vunpack.c.l.b16 %v159
      %v244 = vunpack.c.l.b16 %v160
      %v245 = vunpack.c.l.b16 %v161
      %v246 = vunpack.c.l.b16 %v162
      %v247 = vunpack.c.l.b16 %v163
      %v248 = vunpack.c.l.b16 %v164
      %v249 = vunpack.c.l.b16 %v165
      %v250 = vunpack.c.l.b16 %v166
      %v251 = vunpack.c.l.b16 %v167
      %v252 = vunpack.c.l.b16 %v168
      %v253 = vunpack.c.l.b16 %v169
      %v254 = vunpack.c.l.b16 %v170
      %v255 = vunpack.c.l.b16 %v171
      %v256 = vunpack.c.l.b16 %v172
      %v257 = vunpack.c.l.b16 %v173
      %v258 = vunpack.c.l.b16 %v174
      %v259 = vunpack.c.l.b16 %v175
      %v260 = vunpack.c.l.b16 %v176
      %v261 = vunpack.c.l.b16 %v177
      %v262 = vunpack.c.l.b16 %v178
      %v263 = vunpack.c.l.b16 %v179
      %v264 = vunpack.c.l.b16 %v180
      %v265 = vpack.c.b16 %v234, %v233
      %v266 = vpack.c.b16 %v236, %v235
      %v267 = vpack.c.b16 %v238, %v237
      %v268 = vpack.c.b16 %v240, %v239
      %v269 = vpack.c.b16 %v242, %v241
      %v270 = vpack.c.b16 %v244, %v243
      %v271 = vpack.c.b16 %v246, %v245
      %v272 = vpack.c.b16 %v248, %v247
      %v273 = vpack.c.b16 %v250, %v249
      %v274 = vpack.c.b16 %v252, %v251
      %v275 = vpack.c.b16 %v254, %v253
      %v276 = vpack.c.b16 %v256, %v255
      %v277 = vpack.c.b16 %v258, %v257
      %v278 = vpack.c.b16 %v260, %v259
      %v279 = vpack.c.b16 %v262, %v261
      %v280 = vpack.c.b16 %v264, %v263
      %297 = vmatprep.subr.bf16.mxu0 0
      %298 = vmatpush1.bf16.msra.mxu0 %v272
      %299 = vmatprep.subr.bf16.mxu0 0
      %300 = vmatpush1.bf16.msra.mxu0 %v271
      %301 = vmatprep.subr.bf16.mxu0 0
      %302 = vmatpush1.bf16.msra.mxu0 %v270
      %303 = vmatprep.subr.bf16.mxu0 0
      %304 = vmatpush1.bf16.msra.mxu0 %v269
      %305 = vmatprep.subr.bf16.mxu0 0
      %306 = vmatpush1.bf16.msra.mxu0 %v268
      %307 = vmatprep.subr.bf16.mxu0 0
      %308 = vmatpush1.bf16.msra.mxu0 %v267
      %309 = vmatprep.subr.bf16.mxu0 0
      %310 = vmatpush1.bf16.msra.mxu0 %v266
      %311 = vmatprep.subr.bf16.mxu0 0
      %312 = vmatpush1.bf16.msra.mxu0 %v265
      %313 = vmatprep.subr.bf16.mxu0 0
      %314 = vmatpush2.bf16.msra.mxu0 %v280
      %315 = vmatprep.subr.bf16.mxu0 0
      %316 = vmatpush2.bf16.msra.mxu0 %v279
      %317 = vmatprep.subr.bf16.mxu0 0
      %318 = vmatpush2.bf16.msra.mxu0 %v278
      %319 = vmatprep.subr.bf16.mxu0 0
      %320 = vmatpush2.bf16.msra.mxu0 %v277
      %321 = vmatprep.subr.bf16.mxu0 0
      %322 = vmatpush2.bf16.msra.mxu0 %v276
      %323 = vmatprep.subr.bf16.mxu0 0
      %324 = vmatpush2.bf16.msra.mxu0 %v275
      %325 = vmatprep.subr.bf16.mxu0 0
      %326 = vmatpush2.bf16.msra.mxu0 %v274
      %327 = vmatprep.subr.bf16.mxu0 0
      %328 = vmatpush2.bf16.msra.mxu0 %v273
      %329 = vmatprep.mubr.bf16.mxu0 %v194
      %330 = vmatmul.mubr.bf16.gmra.mxu0 %v193
      %v331 = vpop.f32.mrf.mxu0
      %v332 = vadd.f32 0.0, %v331
      %v333 = vpop.f32.mrf.mxu0
      %v334 = vpop.f32.mrf.mxu0
      %v335 = vadd.f32 0.0, %v334
      %v336 = vpop.f32.mrf.mxu0
      %337 = vmatprep.mubr.bf16.mxu0 %v196
      %338 = vmatmul.mubr.bf16.gmra.mxu0 %v195
      %v339 = vpop.f32.mrf.mxu0
      %v340 = vadd.f32 0.0, %v339
      %v341 = vpop.f32.mrf.mxu0
      %v342 = vpop.f32.mrf.mxu0
      %v343 = vadd.f32 0.0, %v342
      %v344 = vpop.f32.mrf.mxu0
      %345 = vdwg.mxu0
      %vm346 = vcmask 130048
      %v347 = vsel %vm346, %v332, 0.0
      %348 = vadd.xlane.f32.xlu0 %v347
      %v349 = vpop.xlane.xlu0 %348
      %v350 = vsel %vm346, %v335, 0.0
      %351 = vadd.xlane.f32.xlu0 %v350
      %v352 = vpop.xlane.xlu0 %351
      %v353 = vsel %vm346, %v340, 0.0
      %354 = vadd.xlane.f32.xlu0 %v353
      %v355 = vpop.xlane.xlu0 %354
      %v356 = vsel %vm346, %v343, 0.0
      %357 = vadd.xlane.f32.xlu0 %v356
      %v358 = vpop.xlane.xlu0 %357
      %v359 = vrcp.pop 16.0
      %v360 = vmul.f32 %v349, %v359
      %v361 = vmul.f32 %v352, %v359
      %v362 = vmul.f32 %v355, %v359
      %v363 = vmul.f32 %v358, %v359
      %v364 = vsub.f32 %v332, %v360
      %v365 = vsub.f32 %v335, %v361
      %v366 = vsub.f32 %v340, %v362
      %v367 = vsub.f32 %v343, %v363
      %v368 = vmul.f32 %v364, %v364
      %v369 = vmul.f32 %v365, %v365
      %v370 = vmul.f32 %v366, %v366
      %v371 = vmul.f32 %v367, %v367
      %v372 = vsel %vm346, %v368, 0.0
      %373 = vadd.xlane.f32.xlu0 %v372
      %v374 = vpop.xlane.xlu0 %373
      %v375 = vsel %vm346, %v369, 0.0
      %376 = vadd.xlane.f32.xlu0 %v375
      %v377 = vpop.xlane.xlu0 %376
      %v378 = vsel %vm346, %v370, 0.0
      %379 = vadd.xlane.f32.xlu0 %v378
      %v380 = vpop.xlane.xlu0 %379
      %v381 = vsel %vm346, %v371, 0.0
      %382 = vadd.xlane.f32.xlu0 %v381
      %v383 = vpop.xlane.xlu0 %382
      %v384 = vmul.f32 %v374, %v359
      %v385 = vmul.f32 %v377, %v359
      %v386 = vmul.f32 %v380, %v359
      %v387 = vmul.f32 %v383, %v359
      %v388 = vadd.f32 %v384, 1e-05
      %v389 = vadd.f32 %v385, 1e-05
      %v390 = vadd.f32 %v386, 1e-05
      %v391 = vadd.f32 %v387, 1e-05
      %v392 = vrsqrt.pop %v388
      %v393 = vrsqrt.pop %v389
      %v394 = vrsqrt.pop %v390
      %v395 = vrsqrt.pop %v391
      %v396 = vmul.f32 %v364, %v392
      %v397 = vmul.f32 %v365, %v393
      %v398 = vmul.f32 %v366, %v394
      %v399 = vmul.f32 %v367, %v395
      %v400 = vmax.f32 %v396, 0.0
      %v401 = vmax.f32 %v397, 0.0
      %v402 = vmax.f32 %v398, 0.0
      %v403 = vmax.f32 %v399, 0.0
      %404 = vst.msk [vmem:[%s143] sm:$0xff] %vm346, %v400
      %405 = vst.msk [vmem:[%s143 + $0x8] sm:$0xff] %vm346, %v401
      %406 = vst.msk [vmem:[%s143 + $0x10] sm:$0xff] %vm346, %v402
      %407 = vst.msk [vmem:[%s143 + $0x18] sm:$0xff] %vm346, %v403
      %p408 = scmp.lt.s32.totalorder %s13, 1
      %s409 = scalar_select %p408, %s13, 1
      %s410 = smul.addr %s409, 4
      %s411 = smul.addr %s410, 8
      %s412 = scalar_lea.vmem %s2, %s411
      // Predicated region
      $region29: #{residual_generator_forward.12} parent=27 // pred_check
        %p413 = pneg %p78
      $region30: #{residual_generator_forward.12} parent=27 // pred_check_branch
        %415 = sbr.rel (%p413) target = $region32
      $region31: #{residual_generator_forward.12} parent=27 // pred_region
        _
      $region32: #{residual_generator_forward.12} parent=27 // pred_fallthru
        _
    $region28: #{residual_generator_forward.12} parent=5 // pred_fallthru
      _
    %p416 = scmp.le.s32.totalorder 2, %s8
    // Predicated region
    $region33: #{residual_generator_forward.12} parent=5 // pred_check
      %p417 = pneg %p416
    $region34: #{residual_generator_forward.12} parent=5 // pred_check_branch
      %419 = sbr.rel (%p417) target = $region36
    $region35: #{residual_generator_forward.12} parent=5 // pred_region
      %s420 = ssub.s32 %s8, 2
      // Predicated region
      $region37: #{residual_generator_forward.12} parent=35 // pred_check
        %p421 = pneg %p84
      $region38: #{residual_generator_forward.12} parent=35 // pred_check_branch
        %423 = sbr.rel (%p421) target = $region40
      $region39: #{residual_generator_forward.12} parent=35 // pred_region
        %p424 = scmp.lt.s32.totalorder %s14, 1
        %s425 = scalar_select %p424, %s14, 1
        %s426 = smul.addr %s425, 4
        %s427 = smul.addr %s426, 8
        %s428 = scalar_lea.vmem %s2, %s427
      $region40: #{residual_generator_forward.12} parent=35 // pred_fallthru
        _
    $region36: #{residual_generator_forward.12} parent=5 // pred_fallthru
      _
  $region6: #{residual_generator_forward.12} parent=0 // loop_footer
    %s12 = sadd.s32 1, %s8
  $region7: #{residual_generator_forward.12} parent=0 // loop_footer_branch
    %7 = sbr.rel target = $region3
  $region8: #{residual_generator_forward.12} parent=0 // loop_exit
    _

// kernel: residual_generator_forward.14
$region0: #{residual_generator_forward.14}
  #allocation0 [shape = 'u32[]', space=smem, size = 0x4, offset = 0x4, fixed_abs, tag = 'smem constant byte address 0x4 - core index']
  #allocation1 [shape = 'u32[144,128]{1,0:T(1,128)}', space=vmem, size = 0x12000, scoped, tag = 'internal scratch']
  %s0 = inlined_call_operand.vmem [shape: bf16[2,384,16], index: 0, kind: input, shape index: {}]
  %s1 = inlined_call_operand.vmem [shape: bf16[32,384], index: 1, kind: input, shape index: {}]
  %s2 = inlined_call_operand.vmem [shape: f32[2,32,16], index: 2, kind: input, shape index: {}, may-alias: {2,3}]
  %s3 = inlined_call_operand.vmem [shape: f32[2,32,16], index: 3, kind: output, shape index: {}, may-alias: {2,3}]
  %s4 = sld [smem:[#allocation0]]
  $region45: #{residual_generator_forward.14} parent=0
    _
  %s6 = ssub.s32 1, %s4
  %s7 = scalar_select 0, %s6, %s4
  loop: start=0, step=1, limit=4
  $region2: #{residual_generator_forward.14} parent=0 // loop_pre_header
    _
  $region3: #{residual_generator_forward.14} parent=0 // loop_header
    %s9 = sphi 0, %s13
    %p10 = scmp.ge.s32.totalorder %s9, 4
    %s19 = sphi 0, %s21
    %s22 = sphi 0, %s19
    %s23 = sphi 0, %s22
    %s39 = sphi 0, %s23
    %s43 = sphi 0, %s43
    %s45 = sphi 0, %s43
    %s46 = sphi 0, %s45
    %s60 = sphi 0, %s46
    %s66 = sphi 0, %s68
    %s69 = sphi 0, %s66
    %s70 = sphi 0, %s69
    %s86 = sphi 0, %s70
    %s92 = sphi 0, %s94
    %s95 = sphi 0, %s92
    %s96 = sphi 0, %s95
    %s112 = sphi 0, %s96
  $region4: #{residual_generator_forward.14} parent=0 // loop_header_branch
    %12 = sbr.rel (%p10) target = $region8
  $region5: #{residual_generator_forward.14} parent=0 // loop_body
    %s14 = ssub.s32 %s9, 1
    %s15 = ssub.s32 %s9, 2
    %s16 = sadd.s32 %s9, 1
    %s17 = ssub.s32 %s9, %s16
    %p18 = scmp.eq.s32.totalorder %s17, 0
    %s20 = sadd.s32 %s19, 1
    %s21 = scalar_select %p18, %s19, %s20
    %p24 = pneg %p18
    %p25 = scmp.eq.s32.totalorder %s9, 1
    %p26 = por %p24, %p25
    %p27 = scmp.ne.s32.totalorder %s19, %s22
    %p28 = scmp.eq.s32.totalorder %s9, 0
    %p29 = por %p27, %p28
    %p30 = scmp.ne.s32.totalorder %s19, %s22
    %p31 = scmp.eq.s32.totalorder %s14, 1
    %p32 = por %p30, %p31
    %p33 = scmp.ne.s32.totalorder %s22, %s23
    %p34 = scmp.eq.s32.totalorder %s14, 0
    %p35 = por %p33, %p34
    %p36 = scmp.ne.s32.totalorder %s22, %s23
    %p37 = scmp.eq.s32.totalorder %s15, 1
    %p38 = por %p36, %p37
    %p40 = scmp.ne.s32.totalorder %s23, %s39
    %p41 = scmp.eq.s32.totalorder %s15, 0
    %p42 = por %p40, %p41
    %s44 = sadd.s32 %s43, 1
    %p47 = scmp.eq.s32.totalorder %s9, 1
    %p48 = scmp.ne.s32.totalorder %s43, %s45
    %p49 = scmp.eq.s32.totalorder %s9, 0
    %p50 = por %p48, %p49
    %p51 = scmp.ne.s32.totalorder %s43, %s45
    %p52 = scmp.eq.s32.totalorder %s14, 1
    %p53 = por %p51, %p52
    %p54 = scmp.ne.s32.totalorder %s45, %s46
    %p55 = scmp.eq.s32.totalorder %s14, 0
    %p56 = por %p54, %p55
    %p57 = scmp.ne.s32.totalorder %s45, %s46
    %p58 = scmp.eq.s32.totalorder %s15, 1
    %p59 = por %p57, %p58
    %p61 = scmp.ne.s32.totalorder %s46, %s60
    %p62 = scmp.eq.s32.totalorder %s15, 0
    %p63 = por %p61, %p62
    %s64 = ssub.s32 %s9, %s16
    %p65 = scmp.eq.s32.totalorder %s64, 0
    %s67 = sadd.s32 %s66, 1
    %s68 = scalar_select %p65, %s66, %s67
    %p71 = pneg %p65
    %p72 = scmp.eq.s32.totalorder %s9, 1
    %p73 = por %p71, %p72
    %p74 = scmp.ne.s32.totalorder %s66, %s69
    %p75 = scmp.eq.s32.totalorder %s9, 0
    %p76 = por %p74, %p75
    %p77 = scmp.ne.s32.totalorder %s66, %s69
    %p78 = scmp.eq.s32.totalorder %s14, 1
    %p79 = por %p77, %p78
    %p80 = scmp.ne.s32.totalorder %s69, %s70
    %p81 = scmp.eq.s32.totalorder %s14, 0
    %p82 = por %p80, %p81
    %p83 = scmp.ne.s32.totalorder %s69, %s70
    %p84 = scmp.eq.s32.totalorder %s15, 1
    %p85 = por %p83, %p84
    %p87 = scmp.ne.s32.totalorder %s70, %s86
    %p88 = scmp.eq.s32.totalorder %s15, 0
    %p89 = por %p87, %p88
    %s90 = ssub.s32 %s9, %s16
    %p91 = scmp.eq.s32.totalorder %s90, 0
    %s93 = sadd.s32 %s92, 1
    %s94 = scalar_select %p91, %s92, %s93
    %p97 = pneg %p91
    %p98 = scmp.eq.s32.totalorder %s9, 1
    %p99 = por %p97, %p98
    %p100 = scmp.ne.s32.totalorder %s92, %s95
    %p101 = scmp.eq.s32.totalorder %s9, 0
    %p102 = por %p100, %p101
    %p103 = scmp.ne.s32.totalorder %s92, %s95
    %p104 = scmp.eq.s32.totalorder %s14, 1
    %p105 = por %p103, %p104
    %p106 = scmp.ne.s32.totalorder %s95, %s96
    %p107 = scmp.eq.s32.totalorder %s14, 0
    %p108 = por %p106, %p107
    %p109 = scmp.ne.s32.totalorder %s95, %s96
    %p110 = scmp.eq.s32.totalorder %s15, 1
    %p111 = por %p109, %p110
    %p113 = scmp.ne.s32.totalorder %s96, %s112
    %p114 = scmp.eq.s32.totalorder %s15, 0
    %p115 = por %p113, %p114
    %p116 = scmp.le.s32.totalorder 1, %s9
    %p117 = scmp.lt.s32.totalorder %s9, 3
    %p118 = pnand %p116, %p117
    %p119 = pneg %p118
    // Predicated region
    $region9: #{residual_generator_forward.14} parent=5 // pred_check
      _
    $region10: #{residual_generator_forward.14} parent=5 // pred_check_branch
      %121 = sbr.rel (%p118) target = $region12
    $region11: #{residual_generator_forward.14} parent=5 // pred_region
      %s122 = ssub.s32 %s9, 1
      // Predicated region
      $region13: #{residual_generator_forward.14} parent=11 // pred_check
        %p123 = pneg %p56
      $region14: #{residual_generator_forward.14} parent=11 // pred_check_branch
        %125 = sbr.rel (%p123) target = $region16
      $region15: #{residual_generator_forward.14} parent=11 // pred_region
        _
      $region16: #{residual_generator_forward.14} parent=11 // pred_fallthru
        _
    $region12: #{residual_generator_forward.14} parent=5 // pred_fallthru
      _
    %p126 = scmp.lt.s32.totalorder %s9, 2
    // Predicated region
    $region17: #{residual_generator_forward.14} parent=5 // pred_check
      %p127 = pneg %p126
    $region18: #{residual_generator_forward.14} parent=5 // pred_check_branch
      %129 = sbr.rel (%p127) target = $region20
    $region19: #{residual_generator_forward.14} parent=5 // pred_region
      // Predicated region
      $region21: #{residual_generator_forward.14} parent=19 // pred_check
        %p130 = pneg %p29
      $region22: #{residual_generator_forward.14} parent=19 // pred_check_branch
        %132 = sbr.rel (%p130) target = $region24
      $region23: #{residual_generator_forward.14} parent=19 // pred_region
        %p133 = scmp.lt.s32.totalorder %s9, 1
        %s134 = scalar_select %p133, %s9, 1
        %s135 = smul.addr %s134, 48
        %s136 = smul.addr %s135, 4
        %s137 = scalar_lea.vmem %s0, %s136
      $region24: #{residual_generator_forward.14} parent=19 // pred_fallthru
        _
      // Predicated region
      $region25: #{residual_generator_forward.14} parent=19 // pred_check
        %p138 = pneg %p76
      $region26: #{residual_generator_forward.14} parent=19 // pred_check_branch
        %140 = sbr.rel (%p138) target = $region28
      $region27: #{residual_generator_forward.14} parent=19 // pred_region
        %p141 = scmp.lt.s32.totalorder %s9, 1
        %s142 = scalar_select %p141, %s9, 1
        %s143 = smul.addr %s142, 4
        %s144 = smul.addr %s143, 8
        %s145 = scalar_lea.vmem %s2, %s144
      $region28: #{residual_generator_forward.14} parent=19 // pred_fallthru
        _
    $region20: #{residual_generator_forward.14} parent=5 // pred_fallthru
      _
    %p146 = scmp.le.s32.totalorder 1, %s9
    %p147 = scmp.lt.s32.totalorder %s9, 3
    %p148 = pnand %p146, %p147
    %p149 = pneg %p148
    // Predicated region
    $region29: #{residual_generator_forward.14} parent=5 // pred_check
      _
    $region30: #{residual_generator_forward.14} parent=5 // pred_check_branch
      %151 = sbr.rel (%p148) target = $region32
    $region31: #{residual_generator_forward.14} parent=5 // pred_region
      %s152 = ssub.s32 %s9, 1
      %p153 = scmp.lt.s32.totalorder %s14, 1
      %s154 = scalar_select %p153, %s14, 1
      %s155 = smul.addr %s154, 48
      %s156 = smul.addr %s155, 4
      %s157 = scalar_lea.vmem %s0, %s156
      %p158 = pneg %p35
      %p159 = pneg %p32
      %p160 = pneg %p56
      %p161 = pneg %p53
      %p162 = scmp.lt.s32.totalorder %s14, 1
      %s163 = scalar_select %p162, %s14, 1
      %s164 = smul.addr %s163, 4
      %s165 = smul.addr %s164, 8
      %s166 = scalar_lea.vmem %s2, %s165
      %p167 = pneg %p82
      %p168 = pneg %p79
      %p169 = pneg %p108
      %p170 = pneg %p105
      %p171 = scmp.lt.s32.totalorder %s14, 1
      %s172 = scalar_select %p171, %s14, 1
      %s173 = smul.addr %s172, 4
      %s174 = smul.addr %s173, 8
      %s175 = scalar_lea.vmem %s3, %s174
      %p176 = scmp.lt.s32.totalorder %s14, 1
      %s177 = scalar_select %p176, %s14, 1
      %s178 = smul.addr %s177, 48
      %s179 = smul.addr %s178, 4
      %s180 = scalar_lea.vmem %s0, %s179
      %p181 = scmp.lt.s32.totalorder %s14, 1
      %s182 = scalar_select %p181, %s14, 1
      %s183 = smul.addr %s182, 4
      %s184 = smul.addr %s183, 8
      %s185 = scalar_lea.vmem %s2, %s184
      %p186 = scmp.lt.s32.totalorder %s14, 1
      %s187 = scalar_select %p186, %s14, 1
      %s188 = smul.addr %s187, 4
      %s189 = smul.addr %s188, 8
      %s190 = scalar_lea.vmem %s3, %s189
      %v192 = vld [vmem:[%s1] sm:$0xff]
      %v193 = vld [vmem:[%s1 + $0x8] sm:$0xf]
      %v194 = vld [vmem:[%s1 + $0xc] sm:$0xff]
      %v195 = vld [vmem:[%s1 + $0x14] sm:$0xf]
      %v196 = vld [vmem:[%s1 + $0x18] sm:$0xff]
      %v197 = vld [vmem:[%s1 + $0x20] sm:$0xf]
      %v198 = vld [vmem:[%s1 + $0x24] sm:$0xff]
      %v199 = vld [vmem:[%s1 + $0x2c] sm:$0xf]
      %v200 = vld [vmem:[%s180] sm:$0xf]
      %v201 = vld [vmem:[%s180 + $0x4] sm:$0xf]
      %v202 = vld [vmem:[%s180 + $0x8] sm:$0xf]
      %v203 = vld [vmem:[%s180 + $0xc] sm:$0xf]
      %v204 = vld [vmem:[%s180 + $0x10] sm:$0xf]
      %v205 = vld [vmem:[%s180 + $0x14] sm:$0xf]
      %v206 = vld [vmem:[%s180 + $0x18] sm:$0xf]
      %v207 = vld [vmem:[%s180 + $0x1c] sm:$0xf]
      %v208 = vld [vmem:[%s180 + $0x20] sm:$0xf]
      %v209 = vld [vmem:[%s180 + $0x24] sm:$0xf]
      %v210 = vld [vmem:[%s180 + $0x28] sm:$0xf]
      %v211 = vld [vmem:[%s180 + $0x2c] sm:$0xf]
      %v212 = vld [vmem:[%s180 + $0x30] sm:$0xf]
      %v213 = vld [vmem:[%s180 + $0x34] sm:$0xf]
      %v214 = vld [vmem:[%s180 + $0x38] sm:$0xf]
      %v215 = vld [vmem:[%s180 + $0x3c] sm:$0xf]
      %v216 = vld [vmem:[%s180 + $0x40] sm:$0xf]
      %v217 = vld [vmem:[%s180 + $0x44] sm:$0xf]
      %v218 = vld [vmem:[%s180 + $0x48] sm:$0xf]
      %v219 = vld [vmem:[%s180 + $0x4c] sm:$0xf]
      %v220 = vld [vmem:[%s180 + $0x50] sm:$0xf]
      %v221 = vld [vmem:[%s180 + $0x54] sm:$0xf]
      %v222 = vld [vmem:[%s180 + $0x58] sm:$0xf]
      %v223 = vld [vmem:[%s180 + $0x5c] sm:$0xf]
      %v224 = vld [vmem:[%s180 + $0x60] sm:$0xf]
      %v225 = vld [vmem:[%s180 + $0x64] sm:$0xf]
      %v226 = vld [vmem:[%s180 + $0x68] sm:$0xf]
      %v227 = vld [vmem:[%s180 + $0x6c] sm:$0xf]
      %v228 = vld [vmem:[%s180 + $0x70] sm:$0xf]
      %v229 = vld [vmem:[%s180 + $0x74] sm:$0xf]
      %v230 = vld [vmem:[%s180 + $0x78] sm:$0xf]
      %v231 = vld [vmem:[%s180 + $0x7c] sm:$0xf]
      %v232 = vld [vmem:[%s180 + $0x80] sm:$0xf]
      %v233 = vld [vmem:[%s180 + $0x84] sm:$0xf]
      %v234 = vld [vmem:[%s180 + $0x88] sm:$0xf]
      %v235 = vld [vmem:[%s180 + $0x8c] sm:$0xf]
      %v236 = vld [vmem:[%s180 + $0x90] sm:$0xf]
      %v237 = vld [vmem:[%s180 + $0x94] sm:$0xf]
      %v238 = vld [vmem:[%s180 + $0x98] sm:$0xf]
      %v239 = vld [vmem:[%s180 + $0x9c] sm:$0xf]
      %v240 = vld [vmem:[%s180 + $0xa0] sm:$0xf]
      %v241 = vld [vmem:[%s180 + $0xa4] sm:$0xf]
      %v242 = vld [vmem:[%s180 + $0xa8] sm:$0xf]
      %v243 = vld [vmem:[%s180 + $0xac] sm:$0xf]
      %v244 = vld [vmem:[%s180 + $0xb0] sm:$0xf]
      %v245 = vld [vmem:[%s180 + $0xb4] sm:$0xf]
      %v246 = vld [vmem:[%s180 + $0xb8] sm:$0xf]
      %v247 = vld [vmem:[%s180 + $0xbc] sm:$0xf]
      %v256 = vunpack.c.l.b16 %v192
      %v257 = vunpack.c.h.b16 %v192
      %v258 = vunpack.c.l.b16 %v193
      %v259 = vunpack.c.l.b16 %v194
      %v260 = vunpack.c.h.b16 %v194
      %v261 = vunpack.c.l.b16 %v195
      %v262 = vunpack.c.l.b16 %v196
      %v263 = vunpack.c.h.b16 %v196
      %v264 = vunpack.c.l.b16 %v197
      %v265 = vunpack.c.l.b16 %v198
      %v266 = vunpack.c.h.b16 %v198
      %v267 = vunpack.c.l.b16 %v199
      %v268 = vpack.c.b16 %v259, %v256
      %v269 = vpack.c.b16 %v260, %v257
      %v270 = vpack.c.b16 %v261, %v258
      %v271 = vpack.c.b16 %v265, %v262
      %v272 = vpack.c.b16 %v266, %v263
      %v273 = vpack.c.b16 %v267, %v264
      %v328 = vunpack.c.l.b16 %v200
      %v329 = vunpack.c.l.b16 %v201
      %v330 = vunpack.c.l.b16 %v202
      %v331 = vunpack.c.l.b16 %v203
      %v332 = vunpack.c.l.b16 %v204
      %v333 = vunpack.c.l.b16 %v205
      %v334 = vunpack.c.l.b16 %v206
      %v335 = vunpack.c.l.b16 %v207
      %v336 = vunpack.c.l.b16 %v208
      %v337 = vunpack.c.l.b16 %v209
      %v338 = vunpack.c.l.b16 %v210
      %v339 = vunpack.c.l.b16 %v211
      %v340 = vunpack.c.l.b16 %v212
      %v341 = vunpack.c.l.b16 %v213
      %v342 = vunpack.c.l.b16 %v214
      %v343 = vunpack.c.l.b16 %v215
      %v344 = vunpack.c.l.b16 %v216
      %v345 = vunpack.c.l.b16 %v217
      %v346 = vunpack.c.l.b16 %v218
      %v347 = vunpack.c.l.b16 %v219
      %v348 = vunpack.c.l.b16 %v220
      %v349 = vunpack.c.l.b16 %v221
      %v350 = vunpack.c.l.b16 %v222
      %v351 = vunpack.c.l.b16 %v223
      %v352 = vunpack.c.l.b16 %v224
      %v353 = vunpack.c.l.b16 %v225
      %v354 = vunpack.c.l.b16 %v226
      %v355 = vunpack.c.l.b16 %v227
      %v356 = vunpack.c.l.b16 %v228
      %v357 = vunpack.c.l.b16 %v229
      %v358 = vunpack.c.l.b16 %v230
      %v359 = vunpack.c.l.b16 %v231
      %v360 = vunpack.c.l.b16 %v232
      %v361 = vunpack.c.l.b16 %v233
      %v362 = vunpack.c.l.b16 %v234
      %v363 = vunpack.c.l.b16 %v235
      %v364 = vunpack.c.l.b16 %v236
      %v365 = vunpack.c.l.b16 %v237
      %v366 = vunpack.c.l.b16 %v238
      %v367 = vunpack.c.l.b16 %v239
      %v368 = vunpack.c.l.b16 %v240
      %v369 = vunpack.c.l.b16 %v241
      %v370 = vunpack.c.l.b16 %v242
      %v371 = vunpack.c.l.b16 %v243
      %v372 = vunpack.c.l.b16 %v244
      %v373 = vunpack.c.l.b16 %v245
      %v374 = vunpack.c.l.b16 %v246
      %v375 = vunpack.c.l.b16 %v247
      %v376 = vpack.c.b16 %v329, %v328
      %v377 = vpack.c.b16 %v331, %v330
      %v378 = vpack.c.b16 %v333, %v332
      %v379 = vpack.c.b16 %v335, %v334
      %v380 = vpack.c.b16 %v337, %v336
      %v381 = vpack.c.b16 %v339, %v338
      %v382 = vpack.c.b16 %v341, %v340
      %v383 = vpack.c.b16 %v343, %v342
      %v384 = vpack.c.b16 %v345, %v344
      %v385 = vpack.c.b16 %v347, %v346
      %v386 = vpack.c.b16 %v349, %v348
      %v387 = vpack.c.b16 %v351, %v350
      %v388 = vpack.c.b16 %v353, %v352
      %v389 = vpack.c.b16 %v355, %v354
      %v390 = vpack.c.b16 %v357, %v356
      %v391 = vpack.c.b16 %v359, %v358
      %v392 = vpack.c.b16 %v361, %v360
      %v393 = vpack.c.b16 %v363, %v362
      %v394 = vpack.c.b16 %v365, %v364
      %v395 = vpack.c.b16 %v367, %v366
      %v396 = vpack.c.b16 %v369, %v368
      %v397 = vpack.c.b16 %v371, %v370
      %v398 = vpack.c.b16 %v373, %v372
      %v399 = vpack.c.b16 %v375, %v374
      %424 = vmatprep.subr.bf16.mxu0 0
      %425 = vmatpush1.bf16.msra.mxu0 %v383
      %426 = vmatprep.subr.bf16.mxu0 0
      %427 = vmatpush1.bf16.msra.mxu0 %v382
      %428 = vmatprep.subr.bf16.mxu0 0
      %429 = vmatpush1.bf16.msra.mxu0 %v381
      %430 = vmatprep.subr.bf16.mxu0 0
      %431 = vmatpush1.bf16.msra.mxu0 %v380
      %432 = vmatprep.subr.bf16.mxu0 0
      %433 = vmatpush1.bf16.msra.mxu0 %v379
      %434 = vmatprep.subr.bf16.mxu0 0
      %435 = vmatpush1.bf16.msra.mxu0 %v378
      %436 = vmatprep.subr.bf16.mxu0 0
      %437 = vmatpush1.bf16.msra.mxu0 %v377
      %438 = vmatprep.subr.bf16.mxu0 0
      %439 = vmatpush1.bf16.msra.mxu0 %v376
      %440 = vmatprep.subr.bf16.mxu0 0
      %441 = vmatpush2.bf16.msra.mxu0 %v391
      %442 = vmatprep.subr.bf16.mxu0 0
      %443 = vmatpush2.bf16.msra.mxu0 %v390
      %444 = vmatprep.subr.bf16.mxu0 0
      %445 = vmatpush2.bf16.msra.mxu0 %v389
      %446 = vmatprep.subr.bf16.mxu0 0
      %447 = vmatpush2.bf16.msra.mxu0 %v388
      %448 = vmatprep.subr.bf16.mxu0 0
      %449 = vmatpush2.bf16.msra.mxu0 %v387
      %450 = vmatprep.subr.bf16.mxu0 0
      %451 = vmatpush2.bf16.msra.mxu0 %v386
      %452 = vmatprep.subr.bf16.mxu0 0
      %453 = vmatpush2.bf16.msra.mxu0 %v385
      %454 = vmatprep.subr.bf16.mxu0 0
      %455 = vmatpush2.bf16.msra.mxu0 %v384
      %456 = vmatprep.mubr.bf16.mxu0 %v269
      %457 = vmatmul.mubr.bf16.gmra.mxu0 %v268
      %v458 = vpop.f32.mrf.mxu0
      %v459 = vadd.f32 0.0, %v458
      %v460 = vpop.f32.mrf.mxu0
      %v461 = vpop.f32.mrf.mxu0
      %v462 = vadd.f32 0.0, %v461
      %v463 = vpop.f32.mrf.mxu0
      %464 = vmatprep.mubr.bf16.mxu0 %v272
      %465 = vmatmul.mubr.bf16.gmra.mxu0 %v271
      %v466 = vpop.f32.mrf.mxu0
      %v467 = vadd.f32 0.0, %v466
      %v468 = vpop.f32.mrf.mxu0
      %v469 = vpop.f32.mrf.mxu0
      %v470 = vadd.f32 0.0, %v469
      %v471 = vpop.f32.mrf.mxu0
      %472 = vdwg.mxu0
      %473 = vmatprep.subr.bf16.mxu0 0
      %474 = vmatpush1.bf16.msra.mxu0 %v399
      %475 = vmatprep.subr.bf16.mxu0 0
      %476 = vmatpush1.bf16.msra.mxu0 %v398
      %477 = vmatprep.subr.bf16.mxu0 0
      %478 = vmatpush1.bf16.msra.mxu0 %v397
      %479 = vmatprep.subr.bf16.mxu0 0
      %480 = vmatpush1.bf16.msra.mxu0 %v396
      %481 = vmatprep.subr.bf16.mxu0 0
      %482 = vmatpush1.bf16.msra.mxu0 %v395
      %483 = vmatprep.subr.bf16.mxu0 0
      %484 = vmatpush1.bf16.msra.mxu0 %v394
      %485 = vmatprep.subr.bf16.mxu0 0
      %486 = vmatpush1.bf16.msra.mxu0 %v393
      %487 = vmatprep.subr.bf16.mxu0 0
      %488 = vmatpush1.bf16.msra.mxu0 %v392
      %489 = vmatprep.subr.bf16.mxu0 0
      %490 = vmatpush2.bf16.msra.mxu0 0
      %491 = vmatprep.subr.bf16.mxu0 0
      %492 = vmatpush2.bf16.msra.mxu0 0
      %493 = vmatprep.subr.bf16.mxu0 0
      %494 = vmatpush2.bf16.msra.mxu0 0
      %495 = vmatprep.subr.bf16.mxu0 0
      %496 = vmatpush2.bf16.msra.mxu0 0
      %497 = vmatprep.subr.bf16.mxu0 0
      %498 = vmatpush2.bf16.msra.mxu0 0
      %499 = vmatprep.subr.bf16.mxu0 0
      %500 = vmatpush2.bf16.msra.mxu0 0
      %501 = vmatprep.subr.bf16.mxu0 0
      %502 = vmatpush2.bf16.msra.mxu0 0
      %503 = vmatprep.subr.bf16.mxu0 0
      %504 = vmatpush2.bf16.msra.mxu0 0
      %505 = vmatprep.mubr.bf16.mxu0 0
      %506 = vmatmul.mubr.bf16.gmra.mxu0 %v270
      %v507 = vpop.f32.mrf.mxu0
      %v508 = vadd.f32 %v459, %v507
      %v509 = vpop.f32.mrf.mxu0
      %v510 = vpop.f32.mrf.mxu0
      %v511 = vadd.f32 %v462, %v510
      %v512 = vpop.f32.mrf.mxu0
      %513 = vmatprep.mubr.bf16.mxu0 0
      %514 = vmatmul.mubr.bf16.gmra.mxu0 %v273
      %v515 = vpop.f32.mrf.mxu0
      %v516 = vadd.f32 %v467, %v515
      %v517 = vpop.f32.mrf.mxu0
      %v518 = vpop.f32.mrf.mxu0
      %v519 = vadd.f32 %v470, %v518
      %v520 = vpop.f32.mrf.mxu0
      %521 = vdwg.mxu0
      %vm522 = vcmask 130048
      %v523 = vsel %vm522, %v508, 0.0
      %524 = vadd.xlane.f32.xlu0 %v523
      %v525 = vpop.xlane.xlu0 %524
      %v526 = vsel %vm522, %v511, 0.0
      %527 = vadd.xlane.f32.xlu0 %v526
      %v528 = vpop.xlane.xlu0 %527
      %v529 = vsel %vm522, %v516, 0.0
      %530 = vadd.xlane.f32.xlu0 %v529
      %v531 = vpop.xlane.xlu0 %530
      %v532 = vsel %vm522, %v519, 0.0
      %533 = vadd.xlane.f32.xlu0 %v532
      %v534 = vpop.xlane.xlu0 %533
      %v535 = vrcp.pop 16.0
      %v536 = vmul.f32 %v525, %v535
      %v537 = vmul.f32 %v528, %v535
      %v538 = vmul.f32 %v531, %v535
      %v539 = vmul.f32 %v534, %v535
      %v540 = vsub.f32 %v508, %v536
      %v541 = vsub.f32 %v511, %v537
      %v542 = vsub.f32 %v516, %v538
      %v543 = vsub.f32 %v519, %v539
      %v544 = vmul.f32 %v540, %v540
      %v545 = vmul.f32 %v541, %v541
      %v546 = vmul.f32 %v542, %v542
      %v547 = vmul.f32 %v543, %v543
      %v548 = vsel %vm522, %v544, 0.0
      %549 = vadd.xlane.f32.xlu0 %v548
      %v550 = vpop.xlane.xlu0 %549
      %v551 = vsel %vm522, %v545, 0.0
      %552 = vadd.xlane.f32.xlu0 %v551
      %v553 = vpop.xlane.xlu0 %552
      %v554 = vsel %vm522, %v546, 0.0
      %555 = vadd.xlane.f32.xlu0 %v554
      %v556 = vpop.xlane.xlu0 %555
      %v557 = vsel %vm522, %v547, 0.0
      %558 = vadd.xlane.f32.xlu0 %v557
      %v559 = vpop.xlane.xlu0 %558
      %v560 = vmul.f32 %v550, %v535
      %v561 = vmul.f32 %v553, %v535
      %v562 = vmul.f32 %v556, %v535
      %v563 = vmul.f32 %v559, %v535
      %v564 = vadd.f32 %v560, 1e-05
      %v565 = vadd.f32 %v561, 1e-05
      %v566 = vadd.f32 %v562, 1e-05
      %v567 = vadd.f32 %v563, 1e-05
      %v568 = vrsqrt.pop %v564
      %v569 = vrsqrt.pop %v565
      %v570 = vrsqrt.pop %v566
      %v571 = vrsqrt.pop %v567
      %v572 = vmul.f32 %v540, %v568
      %v573 = vmul.f32 %v541, %v569
      %v574 = vmul.f32 %v542, %v570
      %v575 = vmul.f32 %v543, %v571
      %v576 = vld [vmem:[%s185] sm:$0xff]
      %v577 = vld [vmem:[%s185 + $0x8] sm:$0xff]
      %v578 = vld [vmem:[%s185 + $0x10] sm:$0xff]
      %v579 = vld [vmem:[%s185 + $0x18] sm:$0xff]
      %v580 = vadd.f32 %v572, %v576
      %v581 = vadd.f32 %v573, %v577
      %v582 = vadd.f32 %v574, %v578
      %v583 = vadd.f32 %v575, %v579
      %584 = vst.msk [vmem:[%s190] sm:$0xff] %vm522, %v580
      %585 = vst.msk [vmem:[%s190 + $0x8] sm:$0xff] %vm522, %v581
      %586 = vst.msk [vmem:[%s190 + $0x10] sm:$0xff] %vm522, %v582
      %587 = vst.msk [vmem:[%s190 + $0x18] sm:$0xff] %vm522, %v583
      %p588 = scmp.lt.s32.totalorder %s14, 1
      %s589 = scalar_select %p588, %s14, 1
      %s590 = smul.addr %s589, 4
      %s591 = smul.addr %s590, 8
      %s592 = scalar_lea.vmem %s3, %s591
      // Predicated region
      $region33: #{residual_generator_forward.14} parent=31 // pred_check
        %p593 = pneg %p105
      $region34: #{residual_generator_forward.14} parent=31 // pred_check_branch
        %595 = sbr.rel (%p593) target = $region36
      $region35: #{residual_generator_forward.14} parent=31 // pred_region
        _
      $region36: #{residual_generator_forward.14} parent=31 // pred_fallthru
        _
    $region32: #{residual_generator_forward.14} parent=5 // pred_fallthru
      _
    %p596 = scmp.le.s32.totalorder 2, %s9
    // Predicated region
    $region37: #{residual_generator_forward.14} parent=5 // pred_check
      %p597 = pneg %p596
    $region38: #{residual_generator_forward.14} parent=5 // pred_check_branch
      %599 = sbr.rel (%p597) target = $region40
    $region39: #{residual_generator_forward.14} parent=5 // pred_region
      %s600 = ssub.s32 %s9, 2
      // Predicated region
      $region41: #{residual_generator_forward.14} parent=39 // pred_check
        %p601 = pneg %p111
      $region42: #{residual_generator_forward.14} parent=39 // pred_check_branch
        %603 = sbr.rel (%p601) target = $region44
      $region43: #{residual_generator_forward.14} parent=39 // pred_region
        %p604 = scmp.lt.s32.totalorder %s15, 1
        %s605 = scalar_select %p604, %s15, 1
        %s606 = smul.addr %s605, 4
        %s607 = smul.addr %s606, 8
        %s608 = scalar_lea.vmem %s3, %s607
      $region44: #{residual_generator_forward.14} parent=39 // pred_fallthru
        _
    $region40: #{residual_generator_forward.14} parent=5 // pred_fallthru
      _
  $region6: #{residual_generator_forward.14} parent=0 // loop_footer
    %s13 = sadd.s32 1, %s9
  $region7: #{residual_generator_forward.14} parent=0 // loop_footer_branch
    %8 = sbr.rel target = $region3
  $region8: #{residual_generator_forward.14} parent=0 // loop_exit
    _

// kernel: residual_generator_forward.13
$region0: #{residual_generator_forward.13}
  #allocation0 [shape = 'u32[]', space=smem, size = 0x4, offset = 0x4, fixed_abs, tag = 'smem constant byte address 0x4 - core index']
  #allocation1 [shape = 'u32[144,128]{1,0:T(1,128)}', space=vmem, size = 0x12000, scoped, tag = 'internal scratch']
  %s0 = inlined_call_operand.vmem [shape: bf16[2,384,16], index: 0, kind: input, shape index: {}]
  %s1 = inlined_call_operand.vmem [shape: bf16[32,384], index: 1, kind: input, shape index: {}]
  %s2 = inlined_call_operand.vmem [shape: f32[2,32,16], index: 2, kind: output, shape index: {}]
  %s3 = sld [smem:[#allocation0]]
  $region41: #{residual_generator_forward.13} parent=0
    _
  %s5 = ssub.s32 1, %s3
  %s6 = scalar_select 0, %s5, %s3
  loop: start=0, step=1, limit=4
  $region2: #{residual_generator_forward.13} parent=0 // loop_pre_header
    _
  $region3: #{residual_generator_forward.13} parent=0 // loop_header
    %s8 = sphi 0, %s12
    %p9 = scmp.ge.s32.totalorder %s8, 4
    %s18 = sphi 0, %s20
    %s21 = sphi 0, %s18
    %s22 = sphi 0, %s21
    %s38 = sphi 0, %s22
    %s42 = sphi 0, %s42
    %s44 = sphi 0, %s42
    %s45 = sphi 0, %s44
    %s59 = sphi 0, %s45
    %s65 = sphi 0, %s67
    %s68 = sphi 0, %s65
    %s69 = sphi 0, %s68
    %s85 = sphi 0, %s69
  $region4: #{residual_generator_forward.13} parent=0 // loop_header_branch
    %11 = sbr.rel (%p9) target = $region8
  $region5: #{residual_generator_forward.13} parent=0 // loop_body
    %s13 = ssub.s32 %s8, 1
    %s14 = ssub.s32 %s8, 2
    %s15 = sadd.s32 %s8, 1
    %s16 = ssub.s32 %s8, %s15
    %p17 = scmp.eq.s32.totalorder %s16, 0
    %s19 = sadd.s32 %s18, 1
    %s20 = scalar_select %p17, %s18, %s19
    %p23 = pneg %p17
    %p24 = scmp.eq.s32.totalorder %s8, 1
    %p25 = por %p23, %p24
    %p26 = scmp.ne.s32.totalorder %s18, %s21
    %p27 = scmp.eq.s32.totalorder %s8, 0
    %p28 = por %p26, %p27
    %p29 = scmp.ne.s32.totalorder %s18, %s21
    %p30 = scmp.eq.s32.totalorder %s13, 1
    %p31 = por %p29, %p30
    %p32 = scmp.ne.s32.totalorder %s21, %s22
    %p33 = scmp.eq.s32.totalorder %s13, 0
    %p34 = por %p32, %p33
    %p35 = scmp.ne.s32.totalorder %s21, %s22
    %p36 = scmp.eq.s32.totalorder %s14, 1
    %p37 = por %p35, %p36
    %p39 = scmp.ne.s32.totalorder %s22, %s38
    %p40 = scmp.eq.s32.totalorder %s14, 0
    %p41 = por %p39, %p40
    %s43 = sadd.s32 %s42, 1
    %p46 = scmp.eq.s32.totalorder %s8, 1
    %p47 = scmp.ne.s32.totalorder %s42, %s44
    %p48 = scmp.eq.s32.totalorder %s8, 0
    %p49 = por %p47, %p48
    %p50 = scmp.ne.s32.totalorder %s42, %s44
    %p51 = scmp.eq.s32.totalorder %s13, 1
    %p52 = por %p50, %p51
    %p53 = scmp.ne.s32.totalorder %s44, %s45
    %p54 = scmp.eq.s32.totalorder %s13, 0
    %p55 = por %p53, %p54
    %p56 = scmp.ne.s32.totalorder %s44, %s45
    %p57 = scmp.eq.s32.totalorder %s14, 1
    %p58 = por %p56, %p57
    %p60 = scmp.ne.s32.totalorder %s45, %s59
    %p61 = scmp.eq.s32.totalorder %s14, 0
    %p62 = por %p60, %p61
    %s63 = ssub.s32 %s8, %s15
    %p64 = scmp.eq.s32.totalorder %s63, 0
    %s66 = sadd.s32 %s65, 1
    %s67 = scalar_select %p64, %s65, %s66
    %p70 = pneg %p64
    %p71 = scmp.eq.s32.totalorder %s8, 1
    %p72 = por %p70, %p71
    %p73 = scmp.ne.s32.totalorder %s65, %s68
    %p74 = scmp.eq.s32.totalorder %s8, 0
    %p75 = por %p73, %p74
    %p76 = scmp.ne.s32.totalorder %s65, %s68
    %p77 = scmp.eq.s32.totalorder %s13, 1
    %p78 = por %p76, %p77
    %p79 = scmp.ne.s32.totalorder %s68, %s69
    %p80 = scmp.eq.s32.totalorder %s13, 0
    %p81 = por %p79, %p80
    %p82 = scmp.ne.s32.totalorder %s68, %s69
    %p83 = scmp.eq.s32.totalorder %s14, 1
    %p84 = por %p82, %p83
    %p86 = scmp.ne.s32.totalorder %s69, %s85
    %p87 = scmp.eq.s32.totalorder %s14, 0
    %p88 = por %p86, %p87
    %p89 = scmp.le.s32.totalorder 1, %s8
    %p90 = scmp.lt.s32.totalorder %s8, 3
    %p91 = pnand %p89, %p90
    %p92 = pneg %p91
    // Predicated region
    $region9: #{residual_generator_forward.13} parent=5 // pred_check
      _
    $region10: #{residual_generator_forward.13} parent=5 // pred_check_branch
      %94 = sbr.rel (%p91) target = $region12
    $region11: #{residual_generator_forward.13} parent=5 // pred_region
      %s95 = ssub.s32 %s8, 1
      // Predicated region
      $region13: #{residual_generator_forward.13} parent=11 // pred_check
        %p96 = pneg %p55
      $region14: #{residual_generator_forward.13} parent=11 // pred_check_branch
        %98 = sbr.rel (%p96) target = $region16
      $region15: #{residual_generator_forward.13} parent=11 // pred_region
        _
      $region16: #{residual_generator_forward.13} parent=11 // pred_fallthru
        _
    $region12: #{residual_generator_forward.13} parent=5 // pred_fallthru
      _
    %p99 = scmp.lt.s32.totalorder %s8, 2
    // Predicated region
    $region17: #{residual_generator_forward.13} parent=5 // pred_check
      %p100 = pneg %p99
    $region18: #{residual_generator_forward.13} parent=5 // pred_check_branch
      %102 = sbr.rel (%p100) target = $region20
    $region19: #{residual_generator_forward.13} parent=5 // pred_region
      // Predicated region
      $region21: #{residual_generator_forward.13} parent=19 // pred_check
        %p103 = pneg %p28
      $region22: #{residual_generator_forward.13} parent=19 // pred_check_branch
        %105 = sbr.rel (%p103) target = $region24
      $region23: #{residual_generator_forward.13} parent=19 // pred_region
        %p106 = scmp.lt.s32.totalorder %s8, 1
        %s107 = scalar_select %p106, %s8, 1
        %s108 = smul.addr %s107, 48
        %s109 = smul.addr %s108, 4
        %s110 = scalar_lea.vmem %s0, %s109
      $region24: #{residual_generator_forward.13} parent=19 // pred_fallthru
        _
    $region20: #{residual_generator_forward.13} parent=5 // pred_fallthru
      _
    %p111 = scmp.le.s32.totalorder 1, %s8
    %p112 = scmp.lt.s32.totalorder %s8, 3
    %p113 = pnand %p111, %p112
    %p114 = pneg %p113
    // Predicated region
    $region25: #{residual_generator_forward.13} parent=5 // pred_check
      _
    $region26: #{residual_generator_forward.13} parent=5 // pred_check_branch
      %116 = sbr.rel (%p113) target = $region28
    $region27: #{residual_generator_forward.13} parent=5 // pred_region
      %s117 = ssub.s32 %s8, 1
      %p118 = scmp.lt.s32.totalorder %s13, 1
      %s119 = scalar_select %p118, %s13, 1
      %s120 = smul.addr %s119, 48
      %s121 = smul.addr %s120, 4
      %s122 = scalar_lea.vmem %s0, %s121
      %p123 = pneg %p34
      %p124 = pneg %p31
      %p125 = pneg %p55
      %p126 = pneg %p52
      %p127 = pneg %p81
      %p128 = pneg %p78
      %p129 = scmp.lt.s32.totalorder %s13, 1
      %s130 = scalar_select %p129, %s13, 1
      %s131 = smul.addr %s130, 4
      %s132 = smul.addr %s131, 8
      %s133 = scalar_lea.vmem %s2, %s132
      %p134 = scmp.lt.s32.totalorder %s13, 1
      %s135 = scalar_select %p134, %s13, 1
      %s136 = smul.addr %s135, 48
      %s137 = smul.addr %s136, 4
      %s138 = scalar_lea.vmem %s0, %s137
      %p139 = scmp.lt.s32.totalorder %s13, 1
      %s140 = scalar_select %p139, %s13, 1
      %s141 = smul.addr %s140, 4
      %s142 = smul.addr %s141, 8
      %s143 = scalar_lea.vmem %s2, %s142
      %v145 = vld [vmem:[%s1] sm:$0xff]
      %v146 = vld [vmem:[%s1 + $0x8] sm:$0xf]
      %v147 = vld [vmem:[%s1 + $0xc] sm:$0xff]
      %v148 = vld [vmem:[%s1 + $0x14] sm:$0xf]
      %v149 = vld [vmem:[%s1 + $0x18] sm:$0xff]
      %v150 = vld [vmem:[%s1 + $0x20] sm:$0xf]
      %v151 = vld [vmem:[%s1 + $0x24] sm:$0xff]
      %v152 = vld [vmem:[%s1 + $0x2c] sm:$0xf]
      %v153 = vld [vmem:[%s138] sm:$0xf]
      %v154 = vld [vmem:[%s138 + $0x4] sm:$0xf]
      %v155 = vld [vmem:[%s138 + $0x8] sm:$0xf]
      %v156 = vld [vmem:[%s138 + $0xc] sm:$0xf]
      %v157 = vld [vmem:[%s138 + $0x10] sm:$0xf]
      %v158 = vld [vmem:[%s138 + $0x14] sm:$0xf]
      %v159 = vld [vmem:[%s138 + $0x18] sm:$0xf]
      %v160 = vld [vmem:[%s138 + $0x1c] sm:$0xf]
      %v161 = vld [vmem:[%s138 + $0x20] sm:$0xf]
      %v162 = vld [vmem:[%s138 + $0x24] sm:$0xf]
      %v163 = vld [vmem:[%s138 + $0x28] sm:$0xf]
      %v164 = vld [vmem:[%s138 + $0x2c] sm:$0xf]
      %v165 = vld [vmem:[%s138 + $0x30] sm:$0xf]
      %v166 = vld [vmem:[%s138 + $0x34] sm:$0xf]
      %v167 = vld [vmem:[%s138 + $0x38] sm:$0xf]
      %v168 = vld [vmem:[%s138 + $0x3c] sm:$0xf]
      %v169 = vld [vmem:[%s138 + $0x40] sm:$0xf]
      %v170 = vld [vmem:[%s138 + $0x44] sm:$0xf]
      %v171 = vld [vmem:[%s138 + $0x48] sm:$0xf]
      %v172 = vld [vmem:[%s138 + $0x4c] sm:$0xf]
      %v173 = vld [vmem:[%s138 + $0x50] sm:$0xf]
      %v174 = vld [vmem:[%s138 + $0x54] sm:$0xf]
      %v175 = vld [vmem:[%s138 + $0x58] sm:$0xf]
      %v176 = vld [vmem:[%s138 + $0x5c] sm:$0xf]
      %v177 = vld [vmem:[%s138 + $0x60] sm:$0xf]
      %v178 = vld [vmem:[%s138 + $0x64] sm:$0xf]
      %v179 = vld [vmem:[%s138 + $0x68] sm:$0xf]
      %v180 = vld [vmem:[%s138 + $0x6c] sm:$0xf]
      %v181 = vld [vmem:[%s138 + $0x70] sm:$0xf]
      %v182 = vld [vmem:[%s138 + $0x74] sm:$0xf]
      %v183 = vld [vmem:[%s138 + $0x78] sm:$0xf]
      %v184 = vld [vmem:[%s138 + $0x7c] sm:$0xf]
      %v185 = vld [vmem:[%s138 + $0x80] sm:$0xf]
      %v186 = vld [vmem:[%s138 + $0x84] sm:$0xf]
      %v187 = vld [vmem:[%s138 + $0x88] sm:$0xf]
      %v188 = vld [vmem:[%s138 + $0x8c] sm:$0xf]
      %v189 = vld [vmem:[%s138 + $0x90] sm:$0xf]
      %v190 = vld [vmem:[%s138 + $0x94] sm:$0xf]
      %v191 = vld [vmem:[%s138 + $0x98] sm:$0xf]
      %v192 = vld [vmem:[%s138 + $0x9c] sm:$0xf]
      %v193 = vld [vmem:[%s138 + $0xa0] sm:$0xf]
      %v194 = vld [vmem:[%s138 + $0xa4] sm:$0xf]
      %v195 = vld [vmem:[%s138 + $0xa8] sm:$0xf]
      %v196 = vld [vmem:[%s138 + $0xac] sm:$0xf]
      %v197 = vld [vmem:[%s138 + $0xb0] sm:$0xf]
      %v198 = vld [vmem:[%s138 + $0xb4] sm:$0xf]
      %v199 = vld [vmem:[%s138 + $0xb8] sm:$0xf]
      %v200 = vld [vmem:[%s138 + $0xbc] sm:$0xf]
      %v209 = vunpack.c.l.b16 %v145
      %v210 = vunpack.c.h.b16 %v145
      %v211 = vunpack.c.l.b16 %v146
      %v212 = vunpack.c.l.b16 %v147
      %v213 = vunpack.c.h.b16 %v147
      %v214 = vunpack.c.l.b16 %v148
      %v215 = vunpack.c.l.b16 %v149
      %v216 = vunpack.c.h.b16 %v149
      %v217 = vunpack.c.l.b16 %v150
      %v218 = vunpack.c.l.b16 %v151
      %v219 = vunpack.c.h.b16 %v151
      %v220 = vunpack.c.l.b16 %v152
      %v221 = vpack.c.b16 %v212, %v209
      %v222 = vpack.c.b16 %v213, %v210
      %v223 = vpack.c.b16 %v214, %v211
      %v224 = vpack.c.b16 %v218, %v215
      %v225 = vpack.c.b16 %v219, %v216
      %v226 = vpack.c.b16 %v220, %v217
      %v281 = vunpack.c.l.b16 %v153
      %v282 = vunpack.c.l.b16 %v154
      %v283 = vunpack.c.l.b16 %v155
      %v284 = vunpack.c.l.b16 %v156
      %v285 = vunpack.c.l.b16 %v157
      %v286 = vunpack.c.l.b16 %v158
      %v287 = vunpack.c.l.b16 %v159
      %v288 = vunpack.c.l.b16 %v160
      %v289 = vunpack.c.l.b16 %v161
      %v290 = vunpack.c.l.b16 %v162
      %v291 = vunpack.c.l.b16 %v163
      %v292 = vunpack.c.l.b16 %v164
      %v293 = vunpack.c.l.b16 %v165
      %v294 = vunpack.c.l.b16 %v166
      %v295 = vunpack.c.l.b16 %v167
      %v296 = vunpack.c.l.b16 %v168
      %v297 = vunpack.c.l.b16 %v169
      %v298 = vunpack.c.l.b16 %v170
      %v299 = vunpack.c.l.b16 %v171
      %v300 = vunpack.c.l.b16 %v172
      %v301 = vunpack.c.l.b16 %v173
      %v302 = vunpack.c.l.b16 %v174
      %v303 = vunpack.c.l.b16 %v175
      %v304 = vunpack.c.l.b16 %v176
      %v305 = vunpack.c.l.b16 %v177
      %v306 = vunpack.c.l.b16 %v178
      %v307 = vunpack.c.l.b16 %v179
      %v308 = vunpack.c.l.b16 %v180
      %v309 = vunpack.c.l.b16 %v181
      %v310 = vunpack.c.l.b16 %v182
      %v311 = vunpack.c.l.b16 %v183
      %v312 = vunpack.c.l.b16 %v184
      %v313 = vunpack.c.l.b16 %v185
      %v314 = vunpack.c.l.b16 %v186
      %v315 = vunpack.c.l.b16 %v187
      %v316 = vunpack.c.l.b16 %v188
      %v317 = vunpack.c.l.b16 %v189
      %v318 = vunpack.c.l.b16 %v190
      %v319 = vunpack.c.l.b16 %v191
      %v320 = vunpack.c.l.b16 %v192
      %v321 = vunpack.c.l.b16 %v193
      %v322 = vunpack.c.l.b16 %v194
      %v323 = vunpack.c.l.b16 %v195
      %v324 = vunpack.c.l.b16 %v196
      %v325 = vunpack.c.l.b16 %v197
      %v326 = vunpack.c.l.b16 %v198
      %v327 = vunpack.c.l.b16 %v199
      %v328 = vunpack.c.l.b16 %v200
      %v329 = vpack.c.b16 %v282, %v281
      %v330 = vpack.c.b16 %v284, %v283
      %v331 = vpack.c.b16 %v286, %v285
      %v332 = vpack.c.b16 %v288, %v287
      %v333 = vpack.c.b16 %v290, %v289
      %v334 = vpack.c.b16 %v292, %v291
      %v335 = vpack.c.b16 %v294, %v293
      %v336 = vpack.c.b16 %v296, %v295
      %v337 = vpack.c.b16 %v298, %v297
      %v338 = vpack.c.b16 %v300, %v299
      %v339 = vpack.c.b16 %v302, %v301
      %v340 = vpack.c.b16 %v304, %v303
      %v341 = vpack.c.b16 %v306, %v305
      %v342 = vpack.c.b16 %v308, %v307
      %v343 = vpack.c.b16 %v310, %v309
      %v344 = vpack.c.b16 %v312, %v311
      %v345 = vpack.c.b16 %v314, %v313
      %v346 = vpack.c.b16 %v316, %v315
      %v347 = vpack.c.b16 %v318, %v317
      %v348 = vpack.c.b16 %v320, %v319
      %v349 = vpack.c.b16 %v322, %v321
      %v350 = vpack.c.b16 %v324, %v323
      %v351 = vpack.c.b16 %v326, %v325
      %v352 = vpack.c.b16 %v328, %v327
      %377 = vmatprep.subr.bf16.mxu0 0
      %378 = vmatpush1.bf16.msra.mxu0 %v336
      %379 = vmatprep.subr.bf16.mxu0 0
      %380 = vmatpush1.bf16.msra.mxu0 %v335
      %381 = vmatprep.subr.bf16.mxu0 0
      %382 = vmatpush1.bf16.msra.mxu0 %v334
      %383 = vmatprep.subr.bf16.mxu0 0
      %384 = vmatpush1.bf16.msra.mxu0 %v333
      %385 = vmatprep.subr.bf16.mxu0 0
      %386 = vmatpush1.bf16.msra.mxu0 %v332
      %387 = vmatprep.subr.bf16.mxu0 0
      %388 = vmatpush1.bf16.msra.mxu0 %v331
      %389 = vmatprep.subr.bf16.mxu0 0
      %390 = vmatpush1.bf16.msra.mxu0 %v330
      %391 = vmatprep.subr.bf16.mxu0 0
      %392 = vmatpush1.bf16.msra.mxu0 %v329
      %393 = vmatprep.subr.bf16.mxu0 0
      %394 = vmatpush2.bf16.msra.mxu0 %v344
      %395 = vmatprep.subr.bf16.mxu0 0
      %396 = vmatpush2.bf16.msra.mxu0 %v343
      %397 = vmatprep.subr.bf16.mxu0 0
      %398 = vmatpush2.bf16.msra.mxu0 %v342
      %399 = vmatprep.subr.bf16.mxu0 0
      %400 = vmatpush2.bf16.msra.mxu0 %v341
      %401 = vmatprep.subr.bf16.mxu0 0
      %402 = vmatpush2.bf16.msra.mxu0 %v340
      %403 = vmatprep.subr.bf16.mxu0 0
      %404 = vmatpush2.bf16.msra.mxu0 %v339
      %405 = vmatprep.subr.bf16.mxu0 0
      %406 = vmatpush2.bf16.msra.mxu0 %v338
      %407 = vmatprep.subr.bf16.mxu0 0
      %408 = vmatpush2.bf16.msra.mxu0 %v337
      %409 = vmatprep.mubr.bf16.mxu0 %v222
      %410 = vmatmul.mubr.bf16.gmra.mxu0 %v221
      %v411 = vpop.f32.mrf.mxu0
      %v412 = vadd.f32 0.0, %v411
      %v413 = vpop.f32.mrf.mxu0
      %v414 = vpop.f32.mrf.mxu0
      %v415 = vadd.f32 0.0, %v414
      %v416 = vpop.f32.mrf.mxu0
      %417 = vmatprep.mubr.bf16.mxu0 %v225
      %418 = vmatmul.mubr.bf16.gmra.mxu0 %v224
      %v419 = vpop.f32.mrf.mxu0
      %v420 = vadd.f32 0.0, %v419
      %v421 = vpop.f32.mrf.mxu0
      %v422 = vpop.f32.mrf.mxu0
      %v423 = vadd.f32 0.0, %v422
      %v424 = vpop.f32.mrf.mxu0
      %425 = vdwg.mxu0
      %426 = vmatprep.subr.bf16.mxu0 0
      %427 = vmatpush1.bf16.msra.mxu0 %v352
      %428 = vmatprep.subr.bf16.mxu0 0
      %429 = vmatpush1.bf16.msra.mxu0 %v351
      %430 = vmatprep.subr.bf16.mxu0 0
      %431 = vmatpush1.bf16.msra.mxu0 %v350
      %432 = vmatprep.subr.bf16.mxu0 0
      %433 = vmatpush1.bf16.msra.mxu0 %v349
      %434 = vmatprep.subr.bf16.mxu0 0
      %435 = vmatpush1.bf16.msra.mxu0 %v348
      %436 = vmatprep.subr.bf16.mxu0 0
      %437 = vmatpush1.bf16.msra.mxu0 %v347
      %438 = vmatprep.subr.bf16.mxu0 0
      %439 = vmatpush1.bf16.msra.mxu0 %v346
      %440 = vmatprep.subr.bf16.mxu0 0
      %441 = vmatpush1.bf16.msra.mxu0 %v345
      %442 = vmatprep.subr.bf16.mxu0 0
      %443 = vmatpush2.bf16.msra.mxu0 0
      %444 = vmatprep.subr.bf16.mxu0 0
      %445 = vmatpush2.bf16.msra.mxu0 0
      %446 = vmatprep.subr.bf16.mxu0 0
      %447 = vmatpush2.bf16.msra.mxu0 0
      %448 = vmatprep.subr.bf16.mxu0 0
      %449 = vmatpush2.bf16.msra.mxu0 0
      %450 = vmatprep.subr.bf16.mxu0 0
      %451 = vmatpush2.bf16.msra.mxu0 0
      %452 = vmatprep.subr.bf16.mxu0 0
      %453 = vmatpush2.bf16.msra.mxu0 0
      %454 = vmatprep.subr.bf16.mxu0 0
      %455 = vmatpush2.bf16.msra.mxu0 0
      %456 = vmatprep.subr.bf16.mxu0 0
      %457 = vmatpush2.bf16.msra.mxu0 0
      %458 = vmatprep.mubr.bf16.mxu0 0
      %459 = vmatmul.mubr.bf16.gmra.mxu0 %v223
      %v460 = vpop.f32.mrf.mxu0
      %v461 = vadd.f32 %v412, %v460
      %v462 = vpop.f32.mrf.mxu0
      %v463 = vpop.f32.mrf.mxu0
      %v464 = vadd.f32 %v415, %v463
      %v465 = vpop.f32.mrf.mxu0
      %466 = vmatprep.mubr.bf16.mxu0 0
      %467 = vmatmul.mubr.bf16.gmra.mxu0 %v226
      %v468 = vpop.f32.mrf.mxu0
      %v469 = vadd.f32 %v420, %v468
      %v470 = vpop.f32.mrf.mxu0
      %v471 = vpop.f32.mrf.mxu0
      %v472 = vadd.f32 %v423, %v471
      %v473 = vpop.f32.mrf.mxu0
      %474 = vdwg.mxu0
      %vm475 = vcmask 130048
      %v476 = vsel %vm475, %v461, 0.0
      %477 = vadd.xlane.f32.xlu0 %v476
      %v478 = vpop.xlane.xlu0 %477
      %v479 = vsel %vm475, %v464, 0.0
      %480 = vadd.xlane.f32.xlu0 %v479
      %v481 = vpop.xlane.xlu0 %480
      %v482 = vsel %vm475, %v469, 0.0
      %483 = vadd.xlane.f32.xlu0 %v482
      %v484 = vpop.xlane.xlu0 %483
      %v485 = vsel %vm475, %v472, 0.0
      %486 = vadd.xlane.f32.xlu0 %v485
      %v487 = vpop.xlane.xlu0 %486
      %v488 = vrcp.pop 16.0
      %v489 = vmul.f32 %v478, %v488
      %v490 = vmul.f32 %v481, %v488
      %v491 = vmul.f32 %v484, %v488
      %v492 = vmul.f32 %v487, %v488
      %v493 = vsub.f32 %v461, %v489
      %v494 = vsub.f32 %v464, %v490
      %v495 = vsub.f32 %v469, %v491
      %v496 = vsub.f32 %v472, %v492
      %v497 = vmul.f32 %v493, %v493
      %v498 = vmul.f32 %v494, %v494
      %v499 = vmul.f32 %v495, %v495
      %v500 = vmul.f32 %v496, %v496
      %v501 = vsel %vm475, %v497, 0.0
      %502 = vadd.xlane.f32.xlu0 %v501
      %v503 = vpop.xlane.xlu0 %502
      %v504 = vsel %vm475, %v498, 0.0
      %505 = vadd.xlane.f32.xlu0 %v504
      %v506 = vpop.xlane.xlu0 %505
      %v507 = vsel %vm475, %v499, 0.0
      %508 = vadd.xlane.f32.xlu0 %v507
      %v509 = vpop.xlane.xlu0 %508
      %v510 = vsel %vm475, %v500, 0.0
      %511 = vadd.xlane.f32.xlu0 %v510
      %v512 = vpop.xlane.xlu0 %511
      %v513 = vmul.f32 %v503, %v488
      %v514 = vmul.f32 %v506, %v488
      %v515 = vmul.f32 %v509, %v488
      %v516 = vmul.f32 %v512, %v488
      %v517 = vadd.f32 %v513, 1e-05
      %v518 = vadd.f32 %v514, 1e-05
      %v519 = vadd.f32 %v515, 1e-05
      %v520 = vadd.f32 %v516, 1e-05
      %v521 = vrsqrt.pop %v517
      %v522 = vrsqrt.pop %v518
      %v523 = vrsqrt.pop %v519
      %v524 = vrsqrt.pop %v520
      %v525 = vmul.f32 %v493, %v521
      %v526 = vmul.f32 %v494, %v522
      %v527 = vmul.f32 %v495, %v523
      %v528 = vmul.f32 %v496, %v524
      %v529 = vmax.f32 %v525, 0.0
      %v530 = vmax.f32 %v526, 0.0
      %v531 = vmax.f32 %v527, 0.0
      %v532 = vmax.f32 %v528, 0.0
      %533 = vst.msk [vmem:[%s143] sm:$0xff] %vm475, %v529
      %534 = vst.msk [vmem:[%s143 + $0x8] sm:$0xff] %vm475, %v530
      %535 = vst.msk [vmem:[%s143 + $0x10] sm:$0xff] %vm475, %v531
      %536 = vst.msk [vmem:[%s143 + $0x18] sm:$0xff] %vm475, %v532
      %p537 = scmp.lt.s32.totalorder %s13, 1
      %s538 = scalar_select %p537, %s13, 1
      %s539 = smul.addr %s538, 4
      %s540 = smul.addr %s539, 8
      %s541 = scalar_lea.vmem %s2, %s540
      // Predicated region
      $region29: #{residual_generator_forward.13} parent=27 // pred_check
        %p542 = pneg %p78
      $region30: #{residual_generator_forward.13} parent=27 // pred_check_branch
        %544 = sbr.rel (%p542) target = $region32
      $region31: #{residual_generator_forward.13} parent=27 // pred_region
        _
      $region32: #{residual_generator_forward.13} parent=27 // pred_fallthru
        _
    $region28: #{residual_generator_forward.13} parent=5 // pred_fallthru
      _
    %p545 = scmp.le.s32.totalorder 2, %s8
    // Predicated region
    $region33: #{residual_generator_forward.13} parent=5 // pred_check
      %p546 = pneg %p545
    $region34: #{residual_generator_forward.13} parent=5 // pred_check_branch
      %548 = sbr.rel (%p546) target = $region36
    $region35: #{residual_generator_forward.13} parent=5 // pred_region
      %s549 = ssub.s32 %s8, 2
      // Predicated region
      $region37: #{residual_generator_forward.13} parent=35 // pred_check
        %p550 = pneg %p84
      $region38: #{residual_generator_forward.13} parent=35 // pred_check_branch
        %552 = sbr.rel (%p550) target = $region40
      $region39: #{residual_generator_forward.13} parent=35 // pred_region
        %p553 = scmp.lt.s32.totalorder %s14, 1
        %s554 = scalar_select %p553, %s14, 1
        %s555 = smul.addr %s554, 4
        %s556 = smul.addr %s555, 8
        %s557 = scalar_lea.vmem %s2, %s556
      $region40: #{residual_generator_forward.13} parent=35 // pred_fallthru
        _
    $region36: #{residual_generator_forward.13} parent=5 // pred_fallthru
      _
  $region6: #{residual_generator_forward.13} parent=0 // loop_footer
    %s12 = sadd.s32 1, %s8
  $region7: #{residual_generator_forward.13} parent=0 // loop_footer_branch
    %7 = sbr.rel target = $region3
  $region8: #{residual_generator_forward.13} parent=0 // loop_exit
    _

// kernel: residual_generator_forward.17
$region0: #{residual_generator_forward.17}
  #allocation0 [shape = 'u32[]', space=smem, size = 0x4, offset = 0x4, fixed_abs, tag = 'smem constant byte address 0x4 - core index']
  #allocation1 [shape = 'u32[144,128]{1,0:T(1,128)}', space=vmem, size = 0x12000, scoped, tag = 'internal scratch']
  %s0 = inlined_call_operand.vmem [shape: bf16[2,4,128,16], index: 0, kind: input, shape index: {}]
  %s1 = inlined_call_operand.vmem [shape: bf16[4,16,128], index: 1, kind: input, shape index: {}]
  %s2 = inlined_call_operand.vmem [shape: f32[2,4,16,16], index: 2, kind: output, shape index: {}]
  %s3 = sld [smem:[#allocation0]]
  $region41: #{residual_generator_forward.17} parent=0
    _
  %s5 = ssub.s32 1, %s3
  %s6 = scalar_select 0, %s5, %s3
  loop: start=0, step=1, limit=4
  $region2: #{residual_generator_forward.17} parent=0 // loop_pre_header
    _
  $region3: #{residual_generator_forward.17} parent=0 // loop_header
    %s8 = sphi 0, %s12
    %p9 = scmp.ge.s32.totalorder %s8, 4
    %s18 = sphi 0, %s20
    %s21 = sphi 0, %s18
    %s22 = sphi 0, %s21
    %s38 = sphi 0, %s22
    %s42 = sphi 0, %s42
    %s44 = sphi 0, %s42
    %s45 = sphi 0, %s44
    %s59 = sphi 0, %s45
    %s65 = sphi 0, %s67
    %s68 = sphi 0, %s65
    %s69 = sphi 0, %s68
    %s85 = sphi 0, %s69
  $region4: #{residual_generator_forward.17} parent=0 // loop_header_branch
    %11 = sbr.rel (%p9) target = $region8
  $region5: #{residual_generator_forward.17} parent=0 // loop_body
    %s13 = ssub.s32 %s8, 1
    %s14 = ssub.s32 %s8, 2
    %s15 = sadd.s32 %s8, 1
    %s16 = ssub.s32 %s8, %s15
    %p17 = scmp.eq.s32.totalorder %s16, 0
    %s19 = sadd.s32 %s18, 1
    %s20 = scalar_select %p17, %s18, %s19
    %p23 = pneg %p17
    %p24 = scmp.eq.s32.totalorder %s8, 1
    %p25 = por %p23, %p24
    %p26 = scmp.ne.s32.totalorder %s18, %s21
    %p27 = scmp.eq.s32.totalorder %s8, 0
    %p28 = por %p26, %p27
    %p29 = scmp.ne.s32.totalorder %s18, %s21
    %p30 = scmp.eq.s32.totalorder %s13, 1
    %p31 = por %p29, %p30
    %p32 = scmp.ne.s32.totalorder %s21, %s22
    %p33 = scmp.eq.s32.totalorder %s13, 0
    %p34 = por %p32, %p33
    %p35 = scmp.ne.s32.totalorder %s21, %s22
    %p36 = scmp.eq.s32.totalorder %s14, 1
    %p37 = por %p35, %p36
    %p39 = scmp.ne.s32.totalorder %s22, %s38
    %p40 = scmp.eq.s32.totalorder %s14, 0
    %p41 = por %p39, %p40
    %s43 = sadd.s32 %s42, 1
    %p46 = scmp.eq.s32.totalorder %s8, 1
    %p47 = scmp.ne.s32.totalorder %s42, %s44
    %p48 = scmp.eq.s32.totalorder %s8, 0
    %p49 = por %p47, %p48
    %p50 = scmp.ne.s32.totalorder %s42, %s44
    %p51 = scmp.eq.s32.totalorder %s13, 1
    %p52 = por %p50, %p51
    %p53 = scmp.ne.s32.totalorder %s44, %s45
    %p54 = scmp.eq.s32.totalorder %s13, 0
    %p55 = por %p53, %p54
    %p56 = scmp.ne.s32.totalorder %s44, %s45
    %p57 = scmp.eq.s32.totalorder %s14, 1
    %p58 = por %p56, %p57
    %p60 = scmp.ne.s32.totalorder %s45, %s59
    %p61 = scmp.eq.s32.totalorder %s14, 0
    %p62 = por %p60, %p61
    %s63 = ssub.s32 %s8, %s15
    %p64 = scmp.eq.s32.totalorder %s63, 0
    %s66 = sadd.s32 %s65, 1
    %s67 = scalar_select %p64, %s65, %s66
    %p70 = pneg %p64
    %p71 = scmp.eq.s32.totalorder %s8, 1
    %p72 = por %p70, %p71
    %p73 = scmp.ne.s32.totalorder %s65, %s68
    %p74 = scmp.eq.s32.totalorder %s8, 0
    %p75 = por %p73, %p74
    %p76 = scmp.ne.s32.totalorder %s65, %s68
    %p77 = scmp.eq.s32.totalorder %s13, 1
    %p78 = por %p76, %p77
    %p79 = scmp.ne.s32.totalorder %s68, %s69
    %p80 = scmp.eq.s32.totalorder %s13, 0
    %p81 = por %p79, %p80
    %p82 = scmp.ne.s32.totalorder %s68, %s69
    %p83 = scmp.eq.s32.totalorder %s14, 1
    %p84 = por %p82, %p83
    %p86 = scmp.ne.s32.totalorder %s69, %s85
    %p87 = scmp.eq.s32.totalorder %s14, 0
    %p88 = por %p86, %p87
    %p89 = scmp.le.s32.totalorder 1, %s8
    %p90 = scmp.lt.s32.totalorder %s8, 3
    %p91 = pnand %p89, %p90
    %p92 = pneg %p91
    // Predicated region
    $region9: #{residual_generator_forward.17} parent=5 // pred_check
      _
    $region10: #{residual_generator_forward.17} parent=5 // pred_check_branch
      %94 = sbr.rel (%p91) target = $region12
    $region11: #{residual_generator_forward.17} parent=5 // pred_region
      %s95 = ssub.s32 %s8, 1
      // Predicated region
      $region13: #{residual_generator_forward.17} parent=11 // pred_check
        %p96 = pneg %p55
      $region14: #{residual_generator_forward.17} parent=11 // pred_check_branch
        %98 = sbr.rel (%p96) target = $region16
      $region15: #{residual_generator_forward.17} parent=11 // pred_region
        _
      $region16: #{residual_generator_forward.17} parent=11 // pred_fallthru
        _
    $region12: #{residual_generator_forward.17} parent=5 // pred_fallthru
      _
    %p99 = scmp.lt.s32.totalorder %s8, 2
    // Predicated region
    $region17: #{residual_generator_forward.17} parent=5 // pred_check
      %p100 = pneg %p99
    $region18: #{residual_generator_forward.17} parent=5 // pred_check_branch
      %102 = sbr.rel (%p100) target = $region20
    $region19: #{residual_generator_forward.17} parent=5 // pred_region
      // Predicated region
      $region21: #{residual_generator_forward.17} parent=19 // pred_check
        %p103 = pneg %p28
      $region22: #{residual_generator_forward.17} parent=19 // pred_check_branch
        %105 = sbr.rel (%p103) target = $region24
      $region23: #{residual_generator_forward.17} parent=19 // pred_region
        %p106 = scmp.lt.s32.totalorder %s8, 1
        %s107 = scalar_select %p106, %s8, 1
        %s108 = smul.addr %s107, 64
        %s109 = smul.addr %s108, 4
        %s110 = scalar_lea.vmem %s0, %s109
      $region24: #{residual_generator_forward.17} parent=19 // pred_fallthru
        _
    $region20: #{residual_generator_forward.17} parent=5 // pred_fallthru
      _
    %p111 = scmp.le.s32.totalorder 1, %s8
    %p112 = scmp.lt.s32.totalorder %s8, 3
    %p113 = pnand %p111, %p112
    %p114 = pneg %p113
    // Predicated region
    $region25: #{residual_generator_forward.17} parent=5 // pred_check
      _
    $region26: #{residual_generator_forward.17} parent=5 // pred_check_branch
      %116 = sbr.rel (%p113) target = $region28
    $region27: #{residual_generator_forward.17} parent=5 // pred_region
      %s117 = ssub.s32 %s8, 1
      %p118 = scmp.lt.s32.totalorder %s13, 1
      %s119 = scalar_select %p118, %s13, 1
      %s120 = smul.addr %s119, 64
      %s121 = smul.addr %s120, 4
      %s122 = scalar_lea.vmem %s0, %s121
      %p123 = pneg %p34
      %p124 = pneg %p31
      %p125 = pneg %p55
      %p126 = pneg %p52
      %p127 = pneg %p81
      %p128 = pneg %p78
      %p129 = scmp.lt.s32.totalorder %s13, 1
      %s130 = scalar_select %p129, %s13, 1
      %s131 = smul.addr %s130, 8
      %s132 = smul.addr %s131, 8
      %s133 = scalar_lea.vmem %s2, %s132
      %p134 = scmp.lt.s32.totalorder %s13, 1
      %s135 = scalar_select %p134, %s13, 1
      %s136 = smul.addr %s135, 64
      %s137 = smul.addr %s136, 4
      %s138 = scalar_lea.vmem %s0, %s137
      %p139 = scmp.lt.s32.totalorder %s13, 1
      %s140 = scalar_select %p139, %s13, 1
      %s141 = smul.addr %s140, 8
      %s142 = smul.addr %s141, 8
      %s143 = scalar_lea.vmem %s2, %s142
      %v145 = vld [vmem:[%s1] sm:$0xf]
      %v146 = vld [vmem:[%s1 + $0x4] sm:$0xf]
      %v147 = vld [vmem:[%s138] sm:$0xf]
      %v148 = vld [vmem:[%s138 + $0x4] sm:$0xf]
      %v149 = vld [vmem:[%s138 + $0x8] sm:$0xf]
      %v150 = vld [vmem:[%s138 + $0xc] sm:$0xf]
      %v151 = vld [vmem:[%s138 + $0x10] sm:$0xf]
      %v152 = vld [vmem:[%s138 + $0x14] sm:$0xf]
      %v153 = vld [vmem:[%s138 + $0x18] sm:$0xf]
      %v154 = vld [vmem:[%s138 + $0x1c] sm:$0xf]
      %v155 = vld [vmem:[%s138 + $0x20] sm:$0xf]
      %v156 = vld [vmem:[%s138 + $0x24] sm:$0xf]
      %v157 = vld [vmem:[%s138 + $0x28] sm:$0xf]
      %v158 = vld [vmem:[%s138 + $0x2c] sm:$0xf]
      %v159 = vld [vmem:[%s138 + $0x30] sm:$0xf]
      %v160 = vld [vmem:[%s138 + $0x34] sm:$0xf]
      %v161 = vld [vmem:[%s138 + $0x38] sm:$0xf]
      %v162 = vld [vmem:[%s138 + $0x3c] sm:$0xf]
      %v165 = vunpack.c.l.b16 %v145
      %v166 = vunpack.c.l.b16 %v146
      %v167 = vpack.c.b16 %v166, %v165
      %v185 = vunpack.c.l.b16 %v147
      %v186 = vunpack.c.l.b16 %v148
      %v187 = vunpack.c.l.b16 %v149
      %v188 = vunpack.c.l.b16 %v150
      %v189 = vunpack.c.l.b16 %v151
      %v190 = vunpack.c.l.b16 %v152
      %v191 = vunpack.c.l.b16 %v153
      %v192 = vunpack.c.l.b16 %v154
      %v193 = vunpack.c.l.b16 %v155
      %v194 = vunpack.c.l.b16 %v156
      %v195 = vunpack.c.l.b16 %v157
      %v196 = vunpack.c.l.b16 %v158
      %v197 = vunpack.c.l.b16 %v159
      %v198 = vunpack.c.l.b16 %v160
      %v199 = vunpack.c.l.b16 %v161
      %v200 = vunpack.c.l.b16 %v162
      %v201 = vpack.c.b16 %v186, %v185
      %v202 = vpack.c.b16 %v188, %v187
      %v203 = vpack.c.b16 %v190, %v189
      %v204 = vpack.c.b16 %v192, %v191
      %v205 = vpack.c.b16 %v194, %v193
      %v206 = vpack.c.b16 %v196, %v195
      %v207 = vpack.c.b16 %v198, %v197
      %v208 = vpack.c.b16 %v200, %v199
      %217 = vmatprep.subr.bf16.mxu0 0
      %218 = vmatpush1.bf16.msra.mxu0 %v208
      %219 = vmatprep.subr.bf16.mxu0 0
      %220 = vmatpush1.bf16.msra.mxu0 %v207
      %221 = vmatprep.subr.bf16.mxu0 0
      %222 = vmatpush1.bf16.msra.mxu0 %v206
      %223 = vmatprep.subr.bf16.mxu0 0
      %224 = vmatpush1.bf16.msra.mxu0 %v205
      %225 = vmatprep.subr.bf16.mxu0 0
      %226 = vmatpush1.bf16.msra.mxu0 %v204
      %227 = vmatprep.subr.bf16.mxu0 0
      %228 = vmatpush1.bf16.msra.mxu0 %v203
      %229 = vmatprep.subr.bf16.mxu0 0
      %230 = vmatpush1.bf16.msra.mxu0 %v202
      %231 = vmatprep.subr.bf16.mxu0 0
      %232 = vmatpush1.bf16.msra.mxu0 %v201
      %233 = vmatprep.subr.bf16.mxu0 0
      %234 = vmatpush2.bf16.msra.mxu0 0
      %235 = vmatprep.subr.bf16.mxu0 0
      %236 = vmatpush2.bf16.msra.mxu0 0
      %237 = vmatprep.subr.bf16.mxu0 0
      %238 = vmatpush2.bf16.msra.mxu0 0
      %239 = vmatprep.subr.bf16.mxu0 0
      %240 = vmatpush2.bf16.msra.mxu0 0
      %241 = vmatprep.subr.bf16.mxu0 0
      %242 = vmatpush2.bf16.msra.mxu0 0
      %243 = vmatprep.subr.bf16.mxu0 0
      %244 = vmatpush2.bf16.msra.mxu0 0
      %245 = vmatprep.subr.bf16.mxu0 0
      %246 = vmatpush2.bf16.msra.mxu0 0
      %247 = vmatprep.subr.bf16.mxu0 0
      %248 = vmatpush2.bf16.msra.mxu0 0
      %249 = vmatprep.mubr.bf16.mxu0 0
      %250 = vmatmul.mubr.bf16.gmra.mxu0 %v167
      %v251 = vpop.f32.mrf.mxu0
      %v252 = vadd.f32 0.0, %v251
      %v253 = vpop.f32.mrf.mxu0
      %v254 = vpop.f32.mrf.mxu0
      %v255 = vadd.f32 0.0, %v254
      %v256 = vpop.f32.mrf.mxu0
      %257 = vdwg.mxu0
      %s258 = scalar_lea.vmem %s1, 8
      %v259 = vld [vmem:[%s258] sm:$0xf]
      %v260 = vld [vmem:[%s258 + $0x4] sm:$0xf]
      %s261 = scalar_lea.vmem %s138, 64
      %v262 = vld [vmem:[%s261] sm:$0xf]
      %v263 = vld [vmem:[%s261 + $0x4] sm:$0xf]
      %v264 = vld [vmem:[%s261 + $0x8] sm:$0xf]
      %v265 = vld [vmem:[%s261 + $0xc] sm:$0xf]
      %v266 = vld [vmem:[%s261 + $0x10] sm:$0xf]
      %v267 = vld [vmem:[%s261 + $0x14] sm:$0xf]
      %v268 = vld [vmem:[%s261 + $0x18] sm:$0xf]
      %v269 = vld [vmem:[%s261 + $0x1c] sm:$0xf]
      %v270 = vld [vmem:[%s261 + $0x20] sm:$0xf]
      %v271 = vld [vmem:[%s261 + $0x24] sm:$0xf]
      %v272 = vld [vmem:[%s261 + $0x28] sm:$0xf]
      %v273 = vld [vmem:[%s261 + $0x2c] sm:$0xf]
      %v274 = vld [vmem:[%s261 + $0x30] sm:$0xf]
      %v275 = vld [vmem:[%s261 + $0x34] sm:$0xf]
      %v276 = vld [vmem:[%s261 + $0x38] sm:$0xf]
      %v277 = vld [vmem:[%s261 + $0x3c] sm:$0xf]
      %v280 = vunpack.c.l.b16 %v259
      %v281 = vunpack.c.l.b16 %v260
      %v282 = vpack.c.b16 %v281, %v280
      %v300 = vunpack.c.l.b16 %v262
      %v301 = vunpack.c.l.b16 %v263
      %v302 = vunpack.c.l.b16 %v264
      %v303 = vunpack.c.l.b16 %v265
      %v304 = vunpack.c.l.b16 %v266
      %v305 = vunpack.c.l.b16 %v267
      %v306 = vunpack.c.l.b16 %v268
      %v307 = vunpack.c.l.b16 %v269
      %v308 = vunpack.c.l.b16 %v270
      %v309 = vunpack.c.l.b16 %v271
      %v310 = vunpack.c.l.b16 %v272
      %v311 = vunpack.c.l.b16 %v273
      %v312 = vunpack.c.l.b16 %v274
      %v313 = vunpack.c.l.b16 %v275
      %v314 = vunpack.c.l.b16 %v276
      %v315 = vunpack.c.l.b16 %v277
      %v316 = vpack.c.b16 %v301, %v300
      %v317 = vpack.c.b16 %v303, %v302
      %v318 = vpack.c.b16 %v305, %v304
      %v319 = vpack.c.b16 %v307, %v306
      %v320 = vpack.c.b16 %v309, %v308
      %v321 = vpack.c.b16 %v311, %v310
      %v322 = vpack.c.b16 %v313, %v312
      %v323 = vpack.c.b16 %v315, %v314
      %332 = vmatprep.subr.bf16.mxu0 0
      %333 = vmatpush1.bf16.msra.mxu0 %v323
      %334 = vmatprep.subr.bf16.mxu0 0
      %335 = vmatpush1.bf16.msra.mxu0 %v322
      %336 = vmatprep.subr.bf16.mxu0 0
      %337 = vmatpush1.bf16.msra.mxu0 %v321
      %338 = vmatprep.subr.bf16.mxu0 0
      %339 = vmatpush1.bf16.msra.mxu0 %v320
      %340 = vmatprep.subr.bf16.mxu0 0
      %341 = vmatpush1.bf16.msra.mxu0 %v319
      %342 = vmatprep.subr.bf16.mxu0 0
      %343 = vmatpush1.bf16.msra.mxu0 %v318
      %344 = vmatprep.subr.bf16.mxu0 0
      %345 = vmatpush1.bf16.msra.mxu0 %v317
      %346 = vmatprep.subr.bf16.mxu0 0
      %347 = vmatpush1.bf16.msra.mxu0 %v316
      %348 = vmatprep.subr.bf16.mxu0 0
      %349 = vmatpush2.bf16.msra.mxu0 0
      %350 = vmatprep.subr.bf16.mxu0 0
      %351 = vmatpush2.bf16.msra.mxu0 0
      %352 = vmatprep.subr.bf16.mxu0 0
      %353 = vmatpush2.bf16.msra.mxu0 0
      %354 = vmatprep.subr.bf16.mxu0 0
      %355 = vmatpush2.bf16.msra.mxu0 0
      %356 = vmatprep.subr.bf16.mxu0 0
      %357 = vmatpush2.bf16.msra.mxu0 0
      %358 = vmatprep.subr.bf16.mxu0 0
      %359 = vmatpush2.bf16.msra.mxu0 0
      %360 = vmatprep.subr.bf16.mxu0 0
      %361 = vmatpush2.bf16.msra.mxu0 0
      %362 = vmatprep.subr.bf16.mxu0 0
      %363 = vmatpush2.bf16.msra.mxu0 0
      %364 = vmatprep.mubr.bf16.mxu0 0
      %365 = vmatmul.mubr.bf16.gmra.mxu0 %v282
      %v366 = vpop.f32.mrf.mxu0
      %v367 = vadd.f32 0.0, %v366
      %v368 = vpop.f32.mrf.mxu0
      %v369 = vpop.f32.mrf.mxu0
      %v370 = vadd.f32 0.0, %v369
      %v371 = vpop.f32.mrf.mxu0
      %372 = vdwg.mxu0
      %s373 = scalar_lea.vmem %s1, 16
      %v374 = vld [vmem:[%s373] sm:$0xf]
      %v375 = vld [vmem:[%s373 + $0x4] sm:$0xf]
      %s376 = scalar_lea.vmem %s138, 128
      %v377 = vld [vmem:[%s376] sm:$0xf]
      %v378 = vld [vmem:[%s376 + $0x4] sm:$0xf]
      %v379 = vld [vmem:[%s376 + $0x8] sm:$0xf]
      %v380 = vld [vmem:[%s376 + $0xc] sm:$0xf]
      %v381 = vld [vmem:[%s376 + $0x10] sm:$0xf]
      %v382 = vld [vmem:[%s376 + $0x14] sm:$0xf]
      %v383 = vld [vmem:[%s376 + $0x18] sm:$0xf]
      %v384 = vld [vmem:[%s376 + $0x1c] sm:$0xf]
      %v385 = vld [vmem:[%s376 + $0x20] sm:$0xf]
      %v386 = vld [vmem:[%s376 + $0x24] sm:$0xf]
      %v387 = vld [vmem:[%s376 + $0x28] sm:$0xf]
      %v388 = vld [vmem:[%s376 + $0x2c] sm:$0xf]
      %v389 = vld [vmem:[%s376 + $0x30] sm:$0xf]
      %v390 = vld [vmem:[%s376 + $0x34] sm:$0xf]
      %v391 = vld [vmem:[%s376 + $0x38] sm:$0xf]
      %v392 = vld [vmem:[%s376 + $0x3c] sm:$0xf]
      %v395 = vunpack.c.l.b16 %v374
      %v396 = vunpack.c.l.b16 %v375
      %v397 = vpack.c.b16 %v396, %v395
      %v415 = vunpack.c.l.b16 %v377
      %v416 = vunpack.c.l.b16 %v378
      %v417 = vunpack.c.l.b16 %v379
      %v418 = vunpack.c.l.b16 %v380
      %v419 = vunpack.c.l.b16 %v381
      %v420 = vunpack.c.l.b16 %v382
      %v421 = vunpack.c.l.b16 %v383
      %v422 = vunpack.c.l.b16 %v384
      %v423 = vunpack.c.l.b16 %v385
      %v424 = vunpack.c.l.b16 %v386
      %v425 = vunpack.c.l.b16 %v387
      %v426 = vunpack.c.l.b16 %v388
      %v427 = vunpack.c.l.b16 %v389
      %v428 = vunpack.c.l.b16 %v390
      %v429 = vunpack.c.l.b16 %v391
      %v430 = vunpack.c.l.b16 %v392
      %v431 = vpack.c.b16 %v416, %v415
      %v432 = vpack.c.b16 %v418, %v417
      %v433 = vpack.c.b16 %v420, %v419
      %v434 = vpack.c.b16 %v422, %v421
      %v435 = vpack.c.b16 %v424, %v423
      %v436 = vpack.c.b16 %v426, %v425
      %v437 = vpack.c.b16 %v428, %v427
      %v438 = vpack.c.b16 %v430, %v429
      %447 = vmatprep.subr.bf16.mxu0 0
      %448 = vmatpush1.bf16.msra.mxu0 %v438
      %449 = vmatprep.subr.bf16.mxu0 0
      %450 = vmatpush1.bf16.msra.mxu0 %v437
      %451 = vmatprep.subr.bf16.mxu0 0
      %452 = vmatpush1.bf16.msra.mxu0 %v436
      %453 = vmatprep.subr.bf16.mxu0 0
      %454 = vmatpush1.bf16.msra.mxu0 %v435
      %455 = vmatprep.subr.bf16.mxu0 0
      %456 = vmatpush1.bf16.msra.mxu0 %v434
      %457 = vmatprep.subr.bf16.mxu0 0
      %458 = vmatpush1.bf16.msra.mxu0 %v433
      %459 = vmatprep.subr.bf16.mxu0 0
      %460 = vmatpush1.bf16.msra.mxu0 %v432
      %461 = vmatprep.subr.bf16.mxu0 0
      %462 = vmatpush1.bf16.msra.mxu0 %v431
      %463 = vmatprep.subr.bf16.mxu0 0
      %464 = vmatpush2.bf16.msra.mxu0 0
      %465 = vmatprep.subr.bf16.mxu0 0
      %466 = vmatpush2.bf16.msra.mxu0 0
      %467 = vmatprep.subr.bf16.mxu0 0
      %468 = vmatpush2.bf16.msra.mxu0 0
      %469 = vmatprep.subr.bf16.mxu0 0
      %470 = vmatpush2.bf16.msra.mxu0 0
      %471 = vmatprep.subr.bf16.mxu0 0
      %472 = vmatpush2.bf16.msra.mxu0 0
      %473 = vmatprep.subr.bf16.mxu0 0
      %474 = vmatpush2.bf16.msra.mxu0 0
      %475 = vmatprep.subr.bf16.mxu0 0
      %476 = vmatpush2.bf16.msra.mxu0 0
      %477 = vmatprep.subr.bf16.mxu0 0
      %478 = vmatpush2.bf16.msra.mxu0 0
      %479 = vmatprep.mubr.bf16.mxu0 0
      %480 = vmatmul.mubr.bf16.gmra.mxu0 %v397
      %v481 = vpop.f32.mrf.mxu0
      %v482 = vadd.f32 0.0, %v481
      %v483 = vpop.f32.mrf.mxu0
      %v484 = vpop.f32.mrf.mxu0
      %v485 = vadd.f32 0.0, %v484
      %v486 = vpop.f32.mrf.mxu0
      %487 = vdwg.mxu0
      %s488 = scalar_lea.vmem %s1, 24
      %v489 = vld [vmem:[%s488] sm:$0xf]
      %v490 = vld [vmem:[%s488 + $0x4] sm:$0xf]
      %s491 = scalar_lea.vmem %s138, 192
      %v492 = vld [vmem:[%s491] sm:$0xf]
      %v493 = vld [vmem:[%s491 + $0x4] sm:$0xf]
      %v494 = vld [vmem:[%s491 + $0x8] sm:$0xf]
      %v495 = vld [vmem:[%s491 + $0xc] sm:$0xf]
      %v496 = vld [vmem:[%s491 + $0x10] sm:$0xf]
      %v497 = vld [vmem:[%s491 + $0x14] sm:$0xf]
      %v498 = vld [vmem:[%s491 + $0x18] sm:$0xf]
      %v499 = vld [vmem:[%s491 + $0x1c] sm:$0xf]
      %v500 = vld [vmem:[%s491 + $0x20] sm:$0xf]
      %v501 = vld [vmem:[%s491 + $0x24] sm:$0xf]
      %v502 = vld [vmem:[%s491 + $0x28] sm:$0xf]
      %v503 = vld [vmem:[%s491 + $0x2c] sm:$0xf]
      %v504 = vld [vmem:[%s491 + $0x30] sm:$0xf]
      %v505 = vld [vmem:[%s491 + $0x34] sm:$0xf]
      %v506 = vld [vmem:[%s491 + $0x38] sm:$0xf]
      %v507 = vld [vmem:[%s491 + $0x3c] sm:$0xf]
      %v510 = vunpack.c.l.b16 %v489
      %v511 = vunpack.c.l.b16 %v490
      %v512 = vpack.c.b16 %v511, %v510
      %v530 = vunpack.c.l.b16 %v492
      %v531 = vunpack.c.l.b16 %v493
      %v532 = vunpack.c.l.b16 %v494
      %v533 = vunpack.c.l.b16 %v495
      %v534 = vunpack.c.l.b16 %v496
      %v535 = vunpack.c.l.b16 %v497
      %v536 = vunpack.c.l.b16 %v498
      %v537 = vunpack.c.l.b16 %v499
      %v538 = vunpack.c.l.b16 %v500
      %v539 = vunpack.c.l.b16 %v501
      %v540 = vunpack.c.l.b16 %v502
      %v541 = vunpack.c.l.b16 %v503
      %v542 = vunpack.c.l.b16 %v504
      %v543 = vunpack.c.l.b16 %v505
      %v544 = vunpack.c.l.b16 %v506
      %v545 = vunpack.c.l.b16 %v507
      %v546 = vpack.c.b16 %v531, %v530
      %v547 = vpack.c.b16 %v533, %v532
      %v548 = vpack.c.b16 %v535, %v534
      %v549 = vpack.c.b16 %v537, %v536
      %v550 = vpack.c.b16 %v539, %v538
      %v551 = vpack.c.b16 %v541, %v540
      %v552 = vpack.c.b16 %v543, %v542
      %v553 = vpack.c.b16 %v545, %v544
      %562 = vmatprep.subr.bf16.mxu0 0
      %563 = vmatpush1.bf16.msra.mxu0 %v553
      %564 = vmatprep.subr.bf16.mxu0 0
      %565 = vmatpush1.bf16.msra.mxu0 %v552
      %566 = vmatprep.subr.bf16.mxu0 0
      %567 = vmatpush1.bf16.msra.mxu0 %v551
      %568 = vmatprep.subr.bf16.mxu0 0
      %569 = vmatpush1.bf16.msra.mxu0 %v550
      %570 = vmatprep.subr.bf16.mxu0 0
      %571 = vmatpush1.bf16.msra.mxu0 %v549
      %572 = vmatprep.subr.bf16.mxu0 0
      %573 = vmatpush1.bf16.msra.mxu0 %v548
      %574 = vmatprep.subr.bf16.mxu0 0
      %575 = vmatpush1.bf16.msra.mxu0 %v547
      %576 = vmatprep.subr.bf16.mxu0 0
      %577 = vmatpush1.bf16.msra.mxu0 %v546
      %578 = vmatprep.subr.bf16.mxu0 0
      %579 = vmatpush2.bf16.msra.mxu0 0
      %580 = vmatprep.subr.bf16.mxu0 0
      %581 = vmatpush2.bf16.msra.mxu0 0
      %582 = vmatprep.subr.bf16.mxu0 0
      %583 = vmatpush2.bf16.msra.mxu0 0
      %584 = vmatprep.subr.bf16.mxu0 0
      %585 = vmatpush2.bf16.msra.mxu0 0
      %586 = vmatprep.subr.bf16.mxu0 0
      %587 = vmatpush2.bf16.msra.mxu0 0
      %588 = vmatprep.subr.bf16.mxu0 0
      %589 = vmatpush2.bf16.msra.mxu0 0
      %590 = vmatprep.subr.bf16.mxu0 0
      %591 = vmatpush2.bf16.msra.mxu0 0
      %592 = vmatprep.subr.bf16.mxu0 0
      %593 = vmatpush2.bf16.msra.mxu0 0
      %594 = vmatprep.mubr.bf16.mxu0 0
      %595 = vmatmul.mubr.bf16.gmra.mxu0 %v512
      %v596 = vpop.f32.mrf.mxu0
      %v597 = vadd.f32 0.0, %v596
      %v598 = vpop.f32.mrf.mxu0
      %v599 = vpop.f32.mrf.mxu0
      %v600 = vadd.f32 0.0, %v599
      %v601 = vpop.f32.mrf.mxu0
      %602 = vdwg.mxu0
      %vm603 = vcmask 130048
      %v604 = vsel %vm603, %v252, 0.0
      %605 = vadd.xlane.f32.xlu0 %v604
      %v606 = vpop.xlane.xlu0 %605
      %v607 = vsel %vm603, %v255, 0.0
      %608 = vadd.xlane.f32.xlu0 %v607
      %v609 = vpop.xlane.xlu0 %608
      %v610 = vadd.f32 %v606, 0.0
      %v611 = vadd.f32 %v609, 0.0
      %v612 = vsel %vm603, %v367, 0.0
      %613 = vadd.xlane.f32.xlu0 %v612
      %v614 = vpop.xlane.xlu0 %613
      %v615 = vsel %vm603, %v370, 0.0
      %616 = vadd.xlane.f32.xlu0 %v615
      %v617 = vpop.xlane.xlu0 %616
      %v618 = vadd.f32 %v610, %v614
      %v619 = vadd.f32 %v611, %v617
      %v620 = vsel %vm603, %v482, 0.0
      %621 = vadd.xlane.f32.xlu0 %v620
      %v622 = vpop.xlane.xlu0 %621
      %v623 = vsel %vm603, %v485, 0.0
      %624 = vadd.xlane.f32.xlu0 %v623
      %v625 = vpop.xlane.xlu0 %624
      %v626 = vadd.f32 %v618, %v622
      %v627 = vadd.f32 %v619, %v625
      %v628 = vsel %vm603, %v597, 0.0
      %629 = vadd.xlane.f32.xlu0 %v628
      %v630 = vpop.xlane.xlu0 %629
      %v631 = vsel %vm603, %v600, 0.0
      %632 = vadd.xlane.f32.xlu0 %v631
      %v633 = vpop.xlane.xlu0 %632
      %v634 = vadd.f32 %v626, %v630
      %v635 = vadd.f32 %v627, %v633
      %v636 = vrcp.pop 64.0
      %v637 = vmul.f32 %v634, %v636
      %v638 = vmul.f32 %v635, %v636
      %v639 = vsub.f32 %v252, %v637
      %v640 = vsub.f32 %v255, %v638
      %v641 = vmul.f32 %v639, %v639
      %v642 = vmul.f32 %v640, %v640
      %v643 = vsel %vm603, %v641, 0.0
      %644 = vadd.xlane.f32.xlu0 %v643
      %v645 = vpop.xlane.xlu0 %644
      %v646 = vsel %vm603, %v642, 0.0
      %647 = vadd.xlane.f32.xlu0 %v646
      %v648 = vpop.xlane.xlu0 %647
      %v649 = vadd.f32 %v645, 0.0
      %v650 = vadd.f32 %v648, 0.0
      %v651 = vsub.f32 %v367, %v637
      %v652 = vsub.f32 %v370, %v638
      %v653 = vmul.f32 %v651, %v651
      %v654 = vmul.f32 %v652, %v652
      %v655 = vsel %vm603, %v653, 0.0
      %656 = vadd.xlane.f32.xlu0 %v655
      %v657 = vpop.xlane.xlu0 %656
      %v658 = vsel %vm603, %v654, 0.0
      %659 = vadd.xlane.f32.xlu0 %v658
      %v660 = vpop.xlane.xlu0 %659
      %v661 = vadd.f32 %v649, %v657
      %v662 = vadd.f32 %v650, %v660
      %v663 = vsub.f32 %v482, %v637
      %v664 = vsub.f32 %v485, %v638
      %v665 = vmul.f32 %v663, %v663
      %v666 = vmul.f32 %v664, %v664
      %v667 = vsel %vm603, %v665, 0.0
      %668 = vadd.xlane.f32.xlu0 %v667
      %v669 = vpop.xlane.xlu0 %668
      %v670 = vsel %vm603, %v666, 0.0
      %671 = vadd.xlane.f32.xlu0 %v670
      %v672 = vpop.xlane.xlu0 %671
      %v673 = vadd.f32 %v661, %v669
      %v674 = vadd.f32 %v662, %v672
      %v675 = vsub.f32 %v597, %v637
      %v676 = vsub.f32 %v600, %v638
      %v677 = vmul.f32 %v675, %v675
      %v678 = vmul.f32 %v676, %v676
      %v679 = vsel %vm603, %v677, 0.0
      %680 = vadd.xlane.f32.xlu0 %v679
      %v681 = vpop.xlane.xlu0 %680
      %v682 = vsel %vm603, %v678, 0.0
      %683 = vadd.xlane.f32.xlu0 %v682
      %v684 = vpop.xlane.xlu0 %683
      %v685 = vadd.f32 %v673, %v681
      %v686 = vadd.f32 %v674, %v684
      %v687 = vmul.f32 %v685, %v636
      %v688 = vmul.f32 %v686, %v636
      %v689 = vadd.f32 %v687, 1e-05
      %v690 = vadd.f32 %v688, 1e-05
      %v691 = vrsqrt.pop %v689
      %v692 = vrsqrt.pop %v690
      %v693 = vmul.f32 %v639, %v691
      %v694 = vmul.f32 %v640, %v692
      %v695 = vmax.f32 %v693, 0.0
      %v696 = vmax.f32 %v694, 0.0
      %697 = vst.msk [vmem:[%s143] sm:$0xff] %vm603, %v695
      %698 = vst.msk [vmem:[%s143 + $0x8] sm:$0xff] %vm603, %v696
      %v699 = vmul.f32 %v651, %v691
      %v700 = vmul.f32 %v652, %v692
      %v701 = vmax.f32 %v699, 0.0
      %v702 = vmax.f32 %v700, 0.0
      %s703 = scalar_lea.vmem %s143, 16
      %704 = vst.msk [vmem:[%s703] sm:$0xff] %vm603, %v701
      %705 = vst.msk [vmem:[%s703 + $0x8] sm:$0xff] %vm603, %v702
      %v706 = vmul.f32 %v663, %v691
      %v707 = vmul.f32 %v664, %v692
      %v708 = vmax.f32 %v706, 0.0
      %v709 = vmax.f32 %v707, 0.0
      %s710 = scalar_lea.vmem %s143, 32
      %711 = vst.msk [vmem:[%s710] sm:$0xff] %vm603, %v708
      %712 = vst.msk [vmem:[%s710 + $0x8] sm:$0xff] %vm603, %v709
      %v713 = vmul.f32 %v675, %v691
      %v714 = vmul.f32 %v676, %v692
      %v715 = vmax.f32 %v713, 0.0
      %v716 = vmax.f32 %v714, 0.0
      %s717 = scalar_lea.vmem %s143, 48
      %718 = vst.msk [vmem:[%s717] sm:$0xff] %vm603, %v715
      %719 = vst.msk [vmem:[%s717 + $0x8] sm:$0xff] %vm603, %v716
      %p720 = scmp.lt.s32.totalorder %s13, 1
      %s721 = scalar_select %p720, %s13, 1
      %s722 = smul.addr %s721, 8
      %s723 = smul.addr %s722, 8
      %s724 = scalar_lea.vmem %s2, %s723
      // Predicated region
      $region29: #{residual_generator_forward.17} parent=27 // pred_check
        %p725 = pneg %p78
      $region30: #{residual_generator_forward.17} parent=27 // pred_check_branch
        %727 = sbr.rel (%p725) target = $region32
      $region31: #{residual_generator_forward.17} parent=27 // pred_region
        _
      $region32: #{residual_generator_forward.17} parent=27 // pred_fallthru
        _
    $region28: #{residual_generator_forward.17} parent=5 // pred_fallthru
      _
    %p728 = scmp.le.s32.totalorder 2, %s8
    // Predicated region
    $region33: #{residual_generator_forward.17} parent=5 // pred_check
      %p729 = pneg %p728
    $region34: #{residual_generator_forward.17} parent=5 // pred_check_branch
      %731 = sbr.rel (%p729) target = $region36
    $region35: #{residual_generator_forward.17} parent=5 // pred_region
      %s732 = ssub.s32 %s8, 2
      // Predicated region
      $region37: #{residual_generator_forward.17} parent=35 // pred_check
        %p733 = pneg %p84
      $region38: #{residual_generator_forward.17} parent=35 // pred_check_branch
        %735 = sbr.rel (%p733) target = $region40
      $region39: #{residual_generator_forward.17} parent=35 // pred_region
        %p736 = scmp.lt.s32.totalorder %s14, 1
        %s737 = scalar_select %p736, %s14, 1
        %s738 = smul.addr %s737, 8
        %s739 = smul.addr %s738, 8
        %s740 = scalar_lea.vmem %s2, %s739
      $region40: #{residual_generator_forward.17} parent=35 // pred_fallthru
        _
    $region36: #{residual_generator_forward.17} parent=5 // pred_fallthru
      _
  $region6: #{residual_generator_forward.17} parent=0 // loop_footer
    %s12 = sadd.s32 1, %s8
  $region7: #{residual_generator_forward.17} parent=0 // loop_footer_branch
    %7 = sbr.rel target = $region3
  $region8: #{residual_generator_forward.17} parent=0 // loop_exit
    _

// kernel: residual_generator_forward.18
$region0: #{residual_generator_forward.18}
  #allocation0 [shape = 'u32[]', space=smem, size = 0x4, offset = 0x4, fixed_abs, tag = 'smem constant byte address 0x4 - core index']
  #allocation1 [shape = 'u32[144,128]{1,0:T(1,128)}', space=vmem, size = 0x12000, scoped, tag = 'internal scratch']
  %s0 = inlined_call_operand.vmem [shape: bf16[2,4,128,64], index: 0, kind: input, shape index: {}]
  %s1 = inlined_call_operand.vmem [shape: bf16[4,8,128], index: 1, kind: input, shape index: {}]
  %s2 = inlined_call_operand.vmem [shape: f32[2,4,8,64], index: 2, kind: output, shape index: {}]
  %s3 = sld [smem:[#allocation0]]
  $region41: #{residual_generator_forward.18} parent=0
    _
  %s5 = ssub.s32 1, %s3
  %s6 = scalar_select 0, %s5, %s3
  loop: start=0, step=1, limit=4
  $region2: #{residual_generator_forward.18} parent=0 // loop_pre_header
    _
  $region3: #{residual_generator_forward.18} parent=0 // loop_header
    %s8 = sphi 0, %s12
    %p9 = scmp.ge.s32.totalorder %s8, 4
    %s18 = sphi 0, %s20
    %s21 = sphi 0, %s18
    %s22 = sphi 0, %s21
    %s38 = sphi 0, %s22
    %s42 = sphi 0, %s42
    %s44 = sphi 0, %s42
    %s45 = sphi 0, %s44
    %s59 = sphi 0, %s45
    %s65 = sphi 0, %s67
    %s68 = sphi 0, %s65
    %s69 = sphi 0, %s68
    %s85 = sphi 0, %s69
  $region4: #{residual_generator_forward.18} parent=0 // loop_header_branch
    %11 = sbr.rel (%p9) target = $region8
  $region5: #{residual_generator_forward.18} parent=0 // loop_body
    %s13 = ssub.s32 %s8, 1
    %s14 = ssub.s32 %s8, 2
    %s15 = sadd.s32 %s8, 1
    %s16 = ssub.s32 %s8, %s15
    %p17 = scmp.eq.s32.totalorder %s16, 0
    %s19 = sadd.s32 %s18, 1
    %s20 = scalar_select %p17, %s18, %s19
    %p23 = pneg %p17
    %p24 = scmp.eq.s32.totalorder %s8, 1
    %p25 = por %p23, %p24
    %p26 = scmp.ne.s32.totalorder %s18, %s21
    %p27 = scmp.eq.s32.totalorder %s8, 0
    %p28 = por %p26, %p27
    %p29 = scmp.ne.s32.totalorder %s18, %s21
    %p30 = scmp.eq.s32.totalorder %s13, 1
    %p31 = por %p29, %p30
    %p32 = scmp.ne.s32.totalorder %s21, %s22
    %p33 = scmp.eq.s32.totalorder %s13, 0
    %p34 = por %p32, %p33
    %p35 = scmp.ne.s32.totalorder %s21, %s22
    %p36 = scmp.eq.s32.totalorder %s14, 1
    %p37 = por %p35, %p36
    %p39 = scmp.ne.s32.totalorder %s22, %s38
    %p40 = scmp.eq.s32.totalorder %s14, 0
    %p41 = por %p39, %p40
    %s43 = sadd.s32 %s42, 1
    %p46 = scmp.eq.s32.totalorder %s8, 1
    %p47 = scmp.ne.s32.totalorder %s42, %s44
    %p48 = scmp.eq.s32.totalorder %s8, 0
    %p49 = por %p47, %p48
    %p50 = scmp.ne.s32.totalorder %s42, %s44
    %p51 = scmp.eq.s32.totalorder %s13, 1
    %p52 = por %p50, %p51
    %p53 = scmp.ne.s32.totalorder %s44, %s45
    %p54 = scmp.eq.s32.totalorder %s13, 0
    %p55 = por %p53, %p54
    %p56 = scmp.ne.s32.totalorder %s44, %s45
    %p57 = scmp.eq.s32.totalorder %s14, 1
    %p58 = por %p56, %p57
    %p60 = scmp.ne.s32.totalorder %s45, %s59
    %p61 = scmp.eq.s32.totalorder %s14, 0
    %p62 = por %p60, %p61
    %s63 = ssub.s32 %s8, %s15
    %p64 = scmp.eq.s32.totalorder %s63, 0
    %s66 = sadd.s32 %s65, 1
    %s67 = scalar_select %p64, %s65, %s66
    %p70 = pneg %p64
    %p71 = scmp.eq.s32.totalorder %s8, 1
    %p72 = por %p70, %p71
    %p73 = scmp.ne.s32.totalorder %s65, %s68
    %p74 = scmp.eq.s32.totalorder %s8, 0
    %p75 = por %p73, %p74
    %p76 = scmp.ne.s32.totalorder %s65, %s68
    %p77 = scmp.eq.s32.totalorder %s13, 1
    %p78 = por %p76, %p77
    %p79 = scmp.ne.s32.totalorder %s68, %s69
    %p80 = scmp.eq.s32.totalorder %s13, 0
    %p81 = por %p79, %p80
    %p82 = scmp.ne.s32.totalorder %s68, %s69
    %p83 = scmp.eq.s32.totalorder %s14, 1
    %p84 = por %p82, %p83
    %p86 = scmp.ne.s32.totalorder %s69, %s85
    %p87 = scmp.eq.s32.totalorder %s14, 0
    %p88 = por %p86, %p87
    %p89 = scmp.le.s32.totalorder 1, %s8
    %p90 = scmp.lt.s32.totalorder %s8, 3
    %p91 = pnand %p89, %p90
    %p92 = pneg %p91
    // Predicated region
    $region9: #{residual_generator_forward.18} parent=5 // pred_check
      _
    $region10: #{residual_generator_forward.18} parent=5 // pred_check_branch
      %94 = sbr.rel (%p91) target = $region12
    $region11: #{residual_generator_forward.18} parent=5 // pred_region
      %s95 = ssub.s32 %s8, 1
      // Predicated region
      $region13: #{residual_generator_forward.18} parent=11 // pred_check
        %p96 = pneg %p55
      $region14: #{residual_generator_forward.18} parent=11 // pred_check_branch
        %98 = sbr.rel (%p96) target = $region16
      $region15: #{residual_generator_forward.18} parent=11 // pred_region
        _
      $region16: #{residual_generator_forward.18} parent=11 // pred_fallthru
        _
    $region12: #{residual_generator_forward.18} parent=5 // pred_fallthru
      _
    %p99 = scmp.lt.s32.totalorder %s8, 2
    // Predicated region
    $region17: #{residual_generator_forward.18} parent=5 // pred_check
      %p100 = pneg %p99
    $region18: #{residual_generator_forward.18} parent=5 // pred_check_branch
      %102 = sbr.rel (%p100) target = $region20
    $region19: #{residual_generator_forward.18} parent=5 // pred_region
      // Predicated region
      $region21: #{residual_generator_forward.18} parent=19 // pred_check
        %p103 = pneg %p28
      $region22: #{residual_generator_forward.18} parent=19 // pred_check_branch
        %105 = sbr.rel (%p103) target = $region24
      $region23: #{residual_generator_forward.18} parent=19 // pred_region
        %p106 = scmp.lt.s32.totalorder %s8, 1
        %s107 = scalar_select %p106, %s8, 1
        %s108 = smul.addr %s107, 64
        %s109 = smul.addr %s108, 4
        %s110 = scalar_lea.vmem %s0, %s109
      $region24: #{residual_generator_forward.18} parent=19 // pred_fallthru
        _
    $region20: #{residual_generator_forward.18} parent=5 // pred_fallthru
      _
    %p111 = scmp.le.s32.totalorder 1, %s8
    %p112 = scmp.lt.s32.totalorder %s8, 3
    %p113 = pnand %p111, %p112
    %p114 = pneg %p113
    // Predicated region
    $region25: #{residual_generator_forward.18} parent=5 // pred_check
      _
    $region26: #{residual_generator_forward.18} parent=5 // pred_check_branch
      %116 = sbr.rel (%p113) target = $region28
    $region27: #{residual_generator_forward.18} parent=5 // pred_region
      %s117 = ssub.s32 %s8, 1
      %p118 = scmp.lt.s32.totalorder %s13, 1
      %s119 = scalar_select %p118, %s13, 1
      %s120 = smul.addr %s119, 64
      %s121 = smul.addr %s120, 4
      %s122 = scalar_lea.vmem %s0, %s121
      %p123 = pneg %p34
      %p124 = pneg %p31
      %p125 = pneg %p55
      %p126 = pneg %p52
      %p127 = pneg %p81
      %p128 = pneg %p78
      %p129 = scmp.lt.s32.totalorder %s13, 1
      %s130 = scalar_select %p129, %s13, 1
      %s131 = smul.addr %s130, 4
      %s132 = smul.addr %s131, 8
      %s133 = scalar_lea.vmem %s2, %s132
      %p134 = scmp.lt.s32.totalorder %s13, 1
      %s135 = scalar_select %p134, %s13, 1
      %s136 = smul.addr %s135, 64
      %s137 = smul.addr %s136, 4
      %s138 = scalar_lea.vmem %s0, %s137
      %p139 = scmp.lt.s32.totalorder %s13, 1
      %s140 = scalar_select %p139, %s13, 1
      %s141 = smul.addr %s140, 4
      %s142 = smul.addr %s141, 8
      %s143 = scalar_lea.vmem %s2, %s142
      %v145 = vld [vmem:[%s1] sm:$0xf]
      %v146 = vld [vmem:[%s138] sm:$0xf]
      %v147 = vld [vmem:[%s138 + $0x4] sm:$0xf]
      %v148 = vld [vmem:[%s138 + $0x8] sm:$0xf]
      %v149 = vld [vmem:[%s138 + $0xc] sm:$0xf]
      %v150 = vld [vmem:[%s138 + $0x10] sm:$0xf]
      %v151 = vld [vmem:[%s138 + $0x14] sm:$0xf]
      %v152 = vld [vmem:[%s138 + $0x18] sm:$0xf]
      %v153 = vld [vmem:[%s138 + $0x1c] sm:$0xf]
      %v154 = vld [vmem:[%s138 + $0x20] sm:$0xf]
      %v155 = vld [vmem:[%s138 + $0x24] sm:$0xf]
      %v156 = vld [vmem:[%s138 + $0x28] sm:$0xf]
      %v157 = vld [vmem:[%s138 + $0x2c] sm:$0xf]
      %v158 = vld [vmem:[%s138 + $0x30] sm:$0xf]
      %v159 = vld [vmem:[%s138 + $0x34] sm:$0xf]
      %v160 = vld [vmem:[%s138 + $0x38] sm:$0xf]
      %v161 = vld [vmem:[%s138 + $0x3c] sm:$0xf]
      %v178 = vunpack.c.l.b16 %v146
      %v179 = vunpack.c.l.b16 %v147
      %v180 = vunpack.c.l.b16 %v148
      %v181 = vunpack.c.l.b16 %v149
      %v182 = vunpack.c.l.b16 %v150
      %v183 = vunpack.c.l.b16 %v151
      %v184 = vunpack.c.l.b16 %v152
      %v185 = vunpack.c.l.b16 %v153
      %v186 = vunpack.c.l.b16 %v154
      %v187 = vunpack.c.l.b16 %v155
      %v188 = vunpack.c.l.b16 %v156
      %v189 = vunpack.c.l.b16 %v157
      %v190 = vunpack.c.l.b16 %v158
      %v191 = vunpack.c.l.b16 %v159
      %v192 = vunpack.c.l.b16 %v160
      %v193 = vunpack.c.l.b16 %v161
      %v194 = vpack.c.b16 %v179, %v178
      %v195 = vpack.c.b16 %v181, %v180
      %v196 = vpack.c.b16 %v183, %v182
      %v197 = vpack.c.b16 %v185, %v184
      %v198 = vpack.c.b16 %v187, %v186
      %v199 = vpack.c.b16 %v189, %v188
      %v200 = vpack.c.b16 %v191, %v190
      %v201 = vpack.c.b16 %v193, %v192
      %210 = vmatprep.subr.bf16.mxu0 0
      %211 = vmatpush1.bf16.msra.mxu0 %v201
      %212 = vmatprep.subr.bf16.mxu0 0
      %213 = vmatpush1.bf16.msra.mxu0 %v200
      %214 = vmatprep.subr.bf16.mxu0 0
      %215 = vmatpush1.bf16.msra.mxu0 %v199
      %216 = vmatprep.subr.bf16.mxu0 0
      %217 = vmatpush1.bf16.msra.mxu0 %v198
      %218 = vmatprep.subr.bf16.mxu0 0
      %219 = vmatpush1.bf16.msra.mxu0 %v197
      %220 = vmatprep.subr.bf16.mxu0 0
      %221 = vmatpush1.bf16.msra.mxu0 %v196
      %222 = vmatprep.subr.bf16.mxu0 0
      %223 = vmatpush1.bf16.msra.mxu0 %v195
      %224 = vmatprep.subr.bf16.mxu0 0
      %225 = vmatpush1.bf16.msra.mxu0 %v194
      %226 = vmatprep.subr.bf16.mxu0 0
      %227 = vmatpush2.bf16.msra.mxu0 0
      %228 = vmatprep.subr.bf16.mxu0 0
      %229 = vmatpush2.bf16.msra.mxu0 0
      %230 = vmatprep.subr.bf16.mxu0 0
      %231 = vmatpush2.bf16.msra.mxu0 0
      %232 = vmatprep.subr.bf16.mxu0 0
      %233 = vmatpush2.bf16.msra.mxu0 0
      %234 = vmatprep.subr.bf16.mxu0 0
      %235 = vmatpush2.bf16.msra.mxu0 0
      %236 = vmatprep.subr.bf16.mxu0 0
      %237 = vmatpush2.bf16.msra.mxu0 0
      %238 = vmatprep.subr.bf16.mxu0 0
      %239 = vmatpush2.bf16.msra.mxu0 0
      %240 = vmatprep.subr.bf16.mxu0 0
      %241 = vmatpush2.bf16.msra.mxu0 0
      %242 = vmatprep.mubr.bf16.mxu0 0
      %243 = vmatmul.mubr.bf16.gmra.mxu0 %v145
      %v244 = vpop.f32.mrf.mxu0
      %v245 = vadd.f32 0.0, %v244
      %v246 = vpop.f32.mrf.mxu0
      %v247 = vpop.f32.mrf.mxu0
      %v248 = vpop.f32.mrf.mxu0
      %249 = vdwg.mxu0
      %s250 = scalar_lea.vmem %s1, 4
      %v251 = vld [vmem:[%s250] sm:$0xf]
      %s252 = scalar_lea.vmem %s138, 64
      %v253 = vld [vmem:[%s252] sm:$0xf]
      %v254 = vld [vmem:[%s252 + $0x4] sm:$0xf]
      %v255 = vld [vmem:[%s252 + $0x8] sm:$0xf]
      %v256 = vld [vmem:[%s252 + $0xc] sm:$0xf]
      %v257 = vld [vmem:[%s252 + $0x10] sm:$0xf]
      %v258 = vld [vmem:[%s252 + $0x14] sm:$0xf]
      %v259 = vld [vmem:[%s252 + $0x18] sm:$0xf]
      %v260 = vld [vmem:[%s252 + $0x1c] sm:$0xf]
      %v261 = vld [vmem:[%s252 + $0x20] sm:$0xf]
      %v262 = vld [vmem:[%s252 + $0x24] sm:$0xf]
      %v263 = vld [vmem:[%s252 + $0x28] sm:$0xf]
      %v264 = vld [vmem:[%s252 + $0x2c] sm:$0xf]
      %v265 = vld [vmem:[%s252 + $0x30] sm:$0xf]
      %v266 = vld [vmem:[%s252 + $0x34] sm:$0xf]
      %v267 = vld [vmem:[%s252 + $0x38] sm:$0xf]
      %v268 = vld [vmem:[%s252 + $0x3c] sm:$0xf]
      %v285 = vunpack.c.l.b16 %v253
      %v286 = vunpack.c.l.b16 %v254
      %v287 = vunpack.c.l.b16 %v255
      %v288 = vunpack.c.l.b16 %v256
      %v289 = vunpack.c.l.b16 %v257
      %v290 = vunpack.c.l.b16 %v258
      %v291 = vunpack.c.l.b16 %v259
      %v292 = vunpack.c.l.b16 %v260
      %v293 = vunpack.c.l.b16 %v261
      %v294 = vunpack.c.l.b16 %v262
      %v295 = vunpack.c.l.b16 %v263
      %v296 = vunpack.c.l.b16 %v264
      %v297 = vunpack.c.l.b16 %v265
      %v298 = vunpack.c.l.b16 %v266
      %v299 = vunpack.c.l.b16 %v267
      %v300 = vunpack.c.l.b16 %v268
      %v301 = vpack.c.b16 %v286, %v285
      %v302 = vpack.c.b16 %v288, %v287
      %v303 = vpack.c.b16 %v290, %v289
      %v304 = vpack.c.b16 %v292, %v291
      %v305 = vpack.c.b16 %v294, %v293
      %v306 = vpack.c.b16 %v296, %v295
      %v307 = vpack.c.b16 %v298, %v297
      %v308 = vpack.c.b16 %v300, %v299
      %317 = vmatprep.subr.bf16.mxu0 0
      %318 = vmatpush1.bf16.msra.mxu0 %v308
      %319 = vmatprep.subr.bf16.mxu0 0
      %320 = vmatpush1.bf16.msra.mxu0 %v307
      %321 = vmatprep.subr.bf16.mxu0 0
      %322 = vmatpush1.bf16.msra.mxu0 %v306
      %323 = vmatprep.subr.bf16.mxu0 0
      %324 = vmatpush1.bf16.msra.mxu0 %v305
      %325 = vmatprep.subr.bf16.mxu0 0
      %326 = vmatpush1.bf16.msra.mxu0 %v304
      %327 = vmatprep.subr.bf16.mxu0 0
      %328 = vmatpush1.bf16.msra.mxu0 %v303
      %329 = vmatprep.subr.bf16.mxu0 0
      %330 = vmatpush1.bf16.msra.mxu0 %v302
      %331 = vmatprep.subr.bf16.mxu0 0
      %332 = vmatpush1.bf16.msra.mxu0 %v301
      %333 = vmatprep.subr.bf16.mxu0 0
      %334 = vmatpush2.bf16.msra.mxu0 0
      %335 = vmatprep.subr.bf16.mxu0 0
      %336 = vmatpush2.bf16.msra.mxu0 0
      %337 = vmatprep.subr.bf16.mxu0 0
      %338 = vmatpush2.bf16.msra.mxu0 0
      %339 = vmatprep.subr.bf16.mxu0 0
      %340 = vmatpush2.bf16.msra.mxu0 0
      %341 = vmatprep.subr.bf16.mxu0 0
      %342 = vmatpush2.bf16.msra.mxu0 0
      %343 = vmatprep.subr.bf16.mxu0 0
      %344 = vmatpush2.bf16.msra.mxu0 0
      %345 = vmatprep.subr.bf16.mxu0 0
      %346 = vmatpush2.bf16.msra.mxu0 0
      %347 = vmatprep.subr.bf16.mxu0 0
      %348 = vmatpush2.bf16.msra.mxu0 0
      %349 = vmatprep.mubr.bf16.mxu0 0
      %350 = vmatmul.mubr.bf16.gmra.mxu0 %v251
      %v351 = vpop.f32.mrf.mxu0
      %v352 = vadd.f32 0.0, %v351
      %v353 = vpop.f32.mrf.mxu0
      %v354 = vpop.f32.mrf.mxu0
      %v355 = vpop.f32.mrf.mxu0
      %356 = vdwg.mxu0
      %s357 = scalar_lea.vmem %s1, 8
      %v358 = vld [vmem:[%s357] sm:$0xf]
      %s359 = scalar_lea.vmem %s138, 128
      %v360 = vld [vmem:[%s359] sm:$0xf]
      %v361 = vld [vmem:[%s359 + $0x4] sm:$0xf]
      %v362 = vld [vmem:[%s359 + $0x8] sm:$0xf]
      %v363 = vld [vmem:[%s359 + $0xc] sm:$0xf]
      %v364 = vld [vmem:[%s359 + $0x10] sm:$0xf]
      %v365 = vld [vmem:[%s359 + $0x14] sm:$0xf]
      %v366 = vld [vmem:[%s359 + $0x18] sm:$0xf]
      %v367 = vld [vmem:[%s359 + $0x1c] sm:$0xf]
      %v368 = vld [vmem:[%s359 + $0x20] sm:$0xf]
      %v369 = vld [vmem:[%s359 + $0x24] sm:$0xf]
      %v370 = vld [vmem:[%s359 + $0x28] sm:$0xf]
      %v371 = vld [vmem:[%s359 + $0x2c] sm:$0xf]
      %v372 = vld [vmem:[%s359 + $0x30] sm:$0xf]
      %v373 = vld [vmem:[%s359 + $0x34] sm:$0xf]
      %v374 = vld [vmem:[%s359 + $0x38] sm:$0xf]
      %v375 = vld [vmem:[%s359 + $0x3c] sm:$0xf]
      %v392 = vunpack.c.l.b16 %v360
      %v393 = vunpack.c.l.b16 %v361
      %v394 = vunpack.c.l.b16 %v362
      %v395 = vunpack.c.l.b16 %v363
      %v396 = vunpack.c.l.b16 %v364
      %v397 = vunpack.c.l.b16 %v365
      %v398 = vunpack.c.l.b16 %v366
      %v399 = vunpack.c.l.b16 %v367
      %v400 = vunpack.c.l.b16 %v368
      %v401 = vunpack.c.l.b16 %v369
      %v402 = vunpack.c.l.b16 %v370
      %v403 = vunpack.c.l.b16 %v371
      %v404 = vunpack.c.l.b16 %v372
      %v405 = vunpack.c.l.b16 %v373
      %v406 = vunpack.c.l.b16 %v374
      %v407 = vunpack.c.l.b16 %v375
      %v408 = vpack.c.b16 %v393, %v392
      %v409 = vpack.c.b16 %v395, %v394
      %v410 = vpack.c.b16 %v397, %v396
      %v411 = vpack.c.b16 %v399, %v398
      %v412 = vpack.c.b16 %v401, %v400
      %v413 = vpack.c.b16 %v403, %v402
      %v414 = vpack.c.b16 %v405, %v404
      %v415 = vpack.c.b16 %v407, %v406
      %424 = vmatprep.subr.bf16.mxu0 0
      %425 = vmatpush1.bf16.msra.mxu0 %v415
      %426 = vmatprep.subr.bf16.mxu0 0
      %427 = vmatpush1.bf16.msra.mxu0 %v414
      %428 = vmatprep.subr.bf16.mxu0 0
      %429 = vmatpush1.bf16.msra.mxu0 %v413
      %430 = vmatprep.subr.bf16.mxu0 0
      %431 = vmatpush1.bf16.msra.mxu0 %v412
      %432 = vmatprep.subr.bf16.mxu0 0
      %433 = vmatpush1.bf16.msra.mxu0 %v411
      %434 = vmatprep.subr.bf16.mxu0 0
      %435 = vmatpush1.bf16.msra.mxu0 %v410
      %436 = vmatprep.subr.bf16.mxu0 0
      %437 = vmatpush1.bf16.msra.mxu0 %v409
      %438 = vmatprep.subr.bf16.mxu0 0
      %439 = vmatpush1.bf16.msra.mxu0 %v408
      %440 = vmatprep.subr.bf16.mxu0 0
      %441 = vmatpush2.bf16.msra.mxu0 0
      %442 = vmatprep.subr.bf16.mxu0 0
      %443 = vmatpush2.bf16.msra.mxu0 0
      %444 = vmatprep.subr.bf16.mxu0 0
      %445 = vmatpush2.bf16.msra.mxu0 0
      %446 = vmatprep.subr.bf16.mxu0 0
      %447 = vmatpush2.bf16.msra.mxu0 0
      %448 = vmatprep.subr.bf16.mxu0 0
      %449 = vmatpush2.bf16.msra.mxu0 0
      %450 = vmatprep.subr.bf16.mxu0 0
      %451 = vmatpush2.bf16.msra.mxu0 0
      %452 = vmatprep.subr.bf16.mxu0 0
      %453 = vmatpush2.bf16.msra.mxu0 0
      %454 = vmatprep.subr.bf16.mxu0 0
      %455 = vmatpush2.bf16.msra.mxu0 0
      %456 = vmatprep.mubr.bf16.mxu0 0
      %457 = vmatmul.mubr.bf16.gmra.mxu0 %v358
      %v458 = vpop.f32.mrf.mxu0
      %v459 = vadd.f32 0.0, %v458
      %v460 = vpop.f32.mrf.mxu0
      %v461 = vpop.f32.mrf.mxu0
      %v462 = vpop.f32.mrf.mxu0
      %463 = vdwg.mxu0
      %s464 = scalar_lea.vmem %s1, 12
      %v465 = vld [vmem:[%s464] sm:$0xf]
      %s466 = scalar_lea.vmem %s138, 192
      %v467 = vld [vmem:[%s466] sm:$0xf]
      %v468 = vld [vmem:[%s466 + $0x4] sm:$0xf]
      %v469 = vld [vmem:[%s466 + $0x8] sm:$0xf]
      %v470 = vld [vmem:[%s466 + $0xc] sm:$0xf]
      %v471 = vld [vmem:[%s466 + $0x10] sm:$0xf]
      %v472 = vld [vmem:[%s466 + $0x14] sm:$0xf]
      %v473 = vld [vmem:[%s466 + $0x18] sm:$0xf]
      %v474 = vld [vmem:[%s466 + $0x1c] sm:$0xf]
      %v475 = vld [vmem:[%s466 + $0x20] sm:$0xf]
      %v476 = vld [vmem:[%s466 + $0x24] sm:$0xf]
      %v477 = vld [vmem:[%s466 + $0x28] sm:$0xf]
      %v478 = vld [vmem:[%s466 + $0x2c] sm:$0xf]
      %v479 = vld [vmem:[%s466 + $0x30] sm:$0xf]
      %v480 = vld [vmem:[%s466 + $0x34] sm:$0xf]
      %v481 = vld [vmem:[%s466 + $0x38] sm:$0xf]
      %v482 = vld [vmem:[%s466 + $0x3c] sm:$0xf]
      %v499 = vunpack.c.l.b16 %v467
      %v500 = vunpack.c.l.b16 %v468
      %v501 = vunpack.c.l.b16 %v469
      %v502 = vunpack.c.l.b16 %v470
      %v503 = vunpack.c.l.b16 %v471
      %v504 = vunpack.c.l.b16 %v472
      %v505 = vunpack.c.l.b16 %v473
      %v506 = vunpack.c.l.b16 %v474
      %v507 = vunpack.c.l.b16 %v475
      %v508 = vunpack.c.l.b16 %v476
      %v509 = vunpack.c.l.b16 %v477
      %v510 = vunpack.c.l.b16 %v478
      %v511 = vunpack.c.l.b16 %v479
      %v512 = vunpack.c.l.b16 %v480
      %v513 = vunpack.c.l.b16 %v481
      %v514 = vunpack.c.l.b16 %v482
      %v515 = vpack.c.b16 %v500, %v499
      %v516 = vpack.c.b16 %v502, %v501
      %v517 = vpack.c.b16 %v504, %v503
      %v518 = vpack.c.b16 %v506, %v505
      %v519 = vpack.c.b16 %v508, %v507
      %v520 = vpack.c.b16 %v510, %v509
      %v521 = vpack.c.b16 %v512, %v511
      %v522 = vpack.c.b16 %v514, %v513
      %531 = vmatprep.subr.bf16.mxu0 0
      %532 = vmatpush1.bf16.msra.mxu0 %v522
      %533 = vmatprep.subr.bf16.mxu0 0
      %534 = vmatpush1.bf16.msra.mxu0 %v521
      %535 = vmatprep.subr.bf16.mxu0 0
      %536 = vmatpush1.bf16.msra.mxu0 %v520
      %537 = vmatprep.subr.bf16.mxu0 0
      %538 = vmatpush1.bf16.msra.mxu0 %v519
      %539 = vmatprep.subr.bf16.mxu0 0
      %540 = vmatpush1.bf16.msra.mxu0 %v518
      %541 = vmatprep.subr.bf16.mxu0 0
      %542 = vmatpush1.bf16.msra.mxu0 %v517
      %543 = vmatprep.subr.bf16.mxu0 0
      %544 = vmatpush1.bf16.msra.mxu0 %v516
      %545 = vmatprep.subr.bf16.mxu0 0
      %546 = vmatpush1.bf16.msra.mxu0 %v515
      %547 = vmatprep.subr.bf16.mxu0 0
      %548 = vmatpush2.bf16.msra.mxu0 0
      %549 = vmatprep.subr.bf16.mxu0 0
      %550 = vmatpush2.bf16.msra.mxu0 0
      %551 = vmatprep.subr.bf16.mxu0 0
      %552 = vmatpush2.bf16.msra.mxu0 0
      %553 = vmatprep.subr.bf16.mxu0 0
      %554 = vmatpush2.bf16.msra.mxu0 0
      %555 = vmatprep.subr.bf16.mxu0 0
      %556 = vmatpush2.bf16.msra.mxu0 0
      %557 = vmatprep.subr.bf16.mxu0 0
      %558 = vmatpush2.bf16.msra.mxu0 0
      %559 = vmatprep.subr.bf16.mxu0 0
      %560 = vmatpush2.bf16.msra.mxu0 0
      %561 = vmatprep.subr.bf16.mxu0 0
      %562 = vmatpush2.bf16.msra.mxu0 0
      %563 = vmatprep.mubr.bf16.mxu0 0
      %564 = vmatmul.mubr.bf16.gmra.mxu0 %v465
      %v565 = vpop.f32.mrf.mxu0
      %v566 = vadd.f32 0.0, %v565
      %v567 = vpop.f32.mrf.mxu0
      %v568 = vpop.f32.mrf.mxu0
      %v569 = vpop.f32.mrf.mxu0
      %570 = vdwg.mxu0
      %vm571 = vcmask 523264
      %v572 = vsel %vm571, %v245, 0.0
      %573 = vadd.xlane.f32.xlu0 %v572
      %v574 = vpop.xlane.xlu0 %573
      %v575 = vadd.f32 %v574, 0.0
      %v576 = vsel %vm571, %v352, 0.0
      %577 = vadd.xlane.f32.xlu0 %v576
      %v578 = vpop.xlane.xlu0 %577
      %v579 = vadd.f32 %v575, %v578
      %v580 = vsel %vm571, %v459, 0.0
      %581 = vadd.xlane.f32.xlu0 %v580
      %v582 = vpop.xlane.xlu0 %581
      %v583 = vadd.f32 %v579, %v582
      %v584 = vsel %vm571, %v566, 0.0
      %585 = vadd.xlane.f32.xlu0 %v584
      %v586 = vpop.xlane.xlu0 %585
      %v587 = vadd.f32 %v583, %v586
      %v588 = vrcp.pop 256.0
      %v589 = vmul.f32 %v587, %v588
      %v590 = vsub.f32 %v245, %v589
      %v591 = vmul.f32 %v590, %v590
      %v592 = vsel %vm571, %v591, 0.0
      %593 = vadd.xlane.f32.xlu0 %v592
      %v594 = vpop.xlane.xlu0 %593
      %v595 = vadd.f32 %v594, 0.0
      %v596 = vsub.f32 %v352, %v589
      %v597 = vmul.f32 %v596, %v596
      %v598 = vsel %vm571, %v597, 0.0
      %599 = vadd.xlane.f32.xlu0 %v598
      %v600 = vpop.xlane.xlu0 %599
      %v601 = vadd.f32 %v595, %v600
      %v602 = vsub.f32 %v459, %v589
      %v603 = vmul.f32 %v602, %v602
      %v604 = vsel %vm571, %v603, 0.0
      %605 = vadd.xlane.f32.xlu0 %v604
      %v606 = vpop.xlane.xlu0 %605
      %v607 = vadd.f32 %v601, %v606
      %v608 = vsub.f32 %v566, %v589
      %v609 = vmul.f32 %v608, %v608
      %v610 = vsel %vm571, %v609, 0.0
      %611 = vadd.xlane.f32.xlu0 %v610
      %v612 = vpop.xlane.xlu0 %611
      %v613 = vadd.f32 %v607, %v612
      %v614 = vmul.f32 %v613, %v588
      %v615 = vadd.f32 %v614, 1e-05
      %v616 = vrsqrt.pop %v615
      %v617 = vmul.f32 %v590, %v616
      %v618 = vmax.f32 %v617, 0.0
      %619 = vst.msk [vmem:[%s143] sm:$0xff] %vm571, %v618
      %v620 = vmul.f32 %v596, %v616
      %v621 = vmax.f32 %v620, 0.0
      %s622 = scalar_lea.vmem %s143, 8
      %623 = vst.msk [vmem:[%s622] sm:$0xff] %vm571, %v621
      %v624 = vmul.f32 %v602, %v616
      %v625 = vmax.f32 %v624, 0.0
      %s626 = scalar_lea.vmem %s143, 16
      %627 = vst.msk [vmem:[%s626] sm:$0xff] %vm571, %v625
      %v628 = vmul.f32 %v608, %v616
      %v629 = vmax.f32 %v628, 0.0
      %s630 = scalar_lea.vmem %s143, 24
      %631 = vst.msk [vmem:[%s630] sm:$0xff] %vm571, %v629
      %p632 = scmp.lt.s32.totalorder %s13, 1
      %s633 = scalar_select %p632, %s13, 1
      %s634 = smul.addr %s633, 4
      %s635 = smul.addr %s634, 8
      %s636 = scalar_lea.vmem %s2, %s635
      // Predicated region
      $region29: #{residual_generator_forward.18} parent=27 // pred_check
        %p637 = pneg %p78
      $region30: #{residual_generator_forward.18} parent=27 // pred_check_branch
        %639 = sbr.rel (%p637) target = $region32
      $region31: #{residual_generator_forward.18} parent=27 // pred_region
        _
      $region32: #{residual_generator_forward.18} parent=27 // pred_fallthru
        _
    $region28: #{residual_generator_forward.18} parent=5 // pred_fallthru
      _
    %p640 = scmp.le.s32.totalorder 2, %s8
    // Predicated region
    $region33: #{residual_generator_forward.18} parent=5 // pred_check
      %p641 = pneg %p640
    $region34: #{residual_generator_forward.18} parent=5 // pred_check_branch
      %643 = sbr.rel (%p641) target = $region36
    $region35: #{residual_generator_forward.18} parent=5 // pred_region
      %s644 = ssub.s32 %s8, 2
      // Predicated region
      $region37: #{residual_generator_forward.18} parent=35 // pred_check
        %p645 = pneg %p84
      $region38: #{residual_generator_forward.18} parent=35 // pred_check_branch
        %647 = sbr.rel (%p645) target = $region40
      $region39: #{residual_generator_forward.18} parent=35 // pred_region
        %p648 = scmp.lt.s32.totalorder %s14, 1
        %s649 = scalar_select %p648, %s14, 1
        %s650 = smul.addr %s649, 4
        %s651 = smul.addr %s650, 8
        %s652 = scalar_lea.vmem %s2, %s651
      $region40: #{residual_generator_forward.18} parent=35 // pred_fallthru
        _
    $region36: #{residual_generator_forward.18} parent=5 // pred_fallthru
      _
  $region6: #{residual_generator_forward.18} parent=0 // loop_footer
    %s12 = sadd.s32 1, %s8
  $region7: #{residual_generator_forward.18} parent=0 // loop_footer_branch
    %7 = sbr.rel target = $region3
  $region8: #{residual_generator_forward.18} parent=0 // loop_exit
    _

// kernel: residual_generator_forward.19
$region0: #{residual_generator_forward.19}
  #allocation0 [shape = 'u32[]', space=smem, size = 0x4, offset = 0x4, fixed_abs, tag = 'smem constant byte address 0x4 - core index']
  #allocation1 [shape = 'u32[144,128]{1,0:T(1,128)}', space=vmem, size = 0x12000, scoped, tag = 'internal scratch']
  %s0 = inlined_call_operand.vmem [shape: bf16[2,512,256], index: 0, kind: input, shape index: {}]
  %s1 = inlined_call_operand.vmem [shape: bf16[8,512], index: 1, kind: input, shape index: {}]
  %s2 = inlined_call_operand.vmem [shape: f32[8,1], index: 2, kind: input, shape index: {}]
  %s3 = inlined_call_operand.vmem [shape: f32[2,8,256], index: 3, kind: output, shape index: {}]
  %s4 = sld [smem:[#allocation0]]
  $region45: #{residual_generator_forward.19} parent=0
    _
  %s6 = ssub.s32 1, %s4
  %s7 = scalar_select 0, %s6, %s4
  loop: start=0, step=1, limit=4
  $region2: #{residual_generator_forward.19} parent=0 // loop_pre_header
    _
  $region3: #{residual_generator_forward.19} parent=0 // loop_header
    %s9 = sphi 0, %s13
    %p10 = scmp.ge.s32.totalorder %s9, 4
    %s19 = sphi 0, %s21
    %s22 = sphi 0, %s19
    %s23 = sphi 0, %s22
    %s39 = sphi 0, %s23
    %s43 = sphi 0, %s43
    %s45 = sphi 0, %s43
    %s46 = sphi 0, %s45
    %s60 = sphi 0, %s46
    %s64 = sphi 0, %s64
    %s66 = sphi 0, %s64
    %s67 = sphi 0, %s66
    %s81 = sphi 0, %s67
    %s87 = sphi 0, %s89
    %s90 = sphi 0, %s87
    %s91 = sphi 0, %s90
    %s107 = sphi 0, %s91
  $region4: #{residual_generator_forward.19} parent=0 // loop_header_branch
    %12 = sbr.rel (%p10) target = $region8
  $region5: #{residual_generator_forward.19} parent=0 // loop_body
    %s14 = ssub.s32 %s9, 1
    %s15 = ssub.s32 %s9, 2
    %s16 = sadd.s32 %s9, 1
    %s17 = ssub.s32 %s9, %s16
    %p18 = scmp.eq.s32.totalorder %s17, 0
    %s20 = sadd.s32 %s19, 1
    %s21 = scalar_select %p18, %s19, %s20
    %p24 = pneg %p18
    %p25 = scmp.eq.s32.totalorder %s9, 1
    %p26 = por %p24, %p25
    %p27 = scmp.ne.s32.totalorder %s19, %s22
    %p28 = scmp.eq.s32.totalorder %s9, 0
    %p29 = por %p27, %p28
    %p30 = scmp.ne.s32.totalorder %s19, %s22
    %p31 = scmp.eq.s32.totalorder %s14, 1
    %p32 = por %p30, %p31
    %p33 = scmp.ne.s32.totalorder %s22, %s23
    %p34 = scmp.eq.s32.totalorder %s14, 0
    %p35 = por %p33, %p34
    %p36 = scmp.ne.s32.totalorder %s22, %s23
    %p37 = scmp.eq.s32.totalorder %s15, 1
    %p38 = por %p36, %p37
    %p40 = scmp.ne.s32.totalorder %s23, %s39
    %p41 = scmp.eq.s32.totalorder %s15, 0
    %p42 = por %p40, %p41
    %s44 = sadd.s32 %s43, 1
    %p47 = scmp.eq.s32.totalorder %s9, 1
    %p48 = scmp.ne.s32.totalorder %s43, %s45
    %p49 = scmp.eq.s32.totalorder %s9, 0
    %p50 = por %p48, %p49
    %p51 = scmp.ne.s32.totalorder %s43, %s45
    %p52 = scmp.eq.s32.totalorder %s14, 1
    %p53 = por %p51, %p52
    %p54 = scmp.ne.s32.totalorder %s45, %s46
    %p55 = scmp.eq.s32.totalorder %s14, 0
    %p56 = por %p54, %p55
    %p57 = scmp.ne.s32.totalorder %s45, %s46
    %p58 = scmp.eq.s32.totalorder %s15, 1
    %p59 = por %p57, %p58
    %p61 = scmp.ne.s32.totalorder %s46, %s60
    %p62 = scmp.eq.s32.totalorder %s15, 0
    %p63 = por %p61, %p62
    %s65 = sadd.s32 %s64, 1
    %p68 = scmp.eq.s32.totalorder %s9, 1
    %p69 = scmp.ne.s32.totalorder %s64, %s66
    %p70 = scmp.eq.s32.totalorder %s9, 0
    %p71 = por %p69, %p70
    %p72 = scmp.ne.s32.totalorder %s64, %s66
    %p73 = scmp.eq.s32.totalorder %s14, 1
    %p74 = por %p72, %p73
    %p75 = scmp.ne.s32.totalorder %s66, %s67
    %p76 = scmp.eq.s32.totalorder %s14, 0
    %p77 = por %p75, %p76
    %p78 = scmp.ne.s32.totalorder %s66, %s67
    %p79 = scmp.eq.s32.totalorder %s15, 1
    %p80 = por %p78, %p79
    %p82 = scmp.ne.s32.totalorder %s67, %s81
    %p83 = scmp.eq.s32.totalorder %s15, 0
    %p84 = por %p82, %p83
    %s85 = ssub.s32 %s9, %s16
    %p86 = scmp.eq.s32.totalorder %s85, 0
    %s88 = sadd.s32 %s87, 1
    %s89 = scalar_select %p86, %s87, %s88
    %p92 = pneg %p86
    %p93 = scmp.eq.s32.totalorder %s9, 1
    %p94 = por %p92, %p93
    %p95 = scmp.ne.s32.totalorder %s87, %s90
    %p96 = scmp.eq.s32.totalorder %s9, 0
    %p97 = por %p95, %p96
    %p98 = scmp.ne.s32.totalorder %s87, %s90
    %p99 = scmp.eq.s32.totalorder %s14, 1
    %p100 = por %p98, %p99
    %p101 = scmp.ne.s32.totalorder %s90, %s91
    %p102 = scmp.eq.s32.totalorder %s14, 0
    %p103 = por %p101, %p102
    %p104 = scmp.ne.s32.totalorder %s90, %s91
    %p105 = scmp.eq.s32.totalorder %s15, 1
    %p106 = por %p104, %p105
    %p108 = scmp.ne.s32.totalorder %s91, %s107
    %p109 = scmp.eq.s32.totalorder %s15, 0
    %p110 = por %p108, %p109
    %p111 = scmp.le.s32.totalorder 1, %s9
    %p112 = scmp.lt.s32.totalorder %s9, 3
    %p113 = pnand %p111, %p112
    %p114 = pneg %p113
    // Predicated region
    $region9: #{residual_generator_forward.19} parent=5 // pred_check
      _
    $region10: #{residual_generator_forward.19} parent=5 // pred_check_branch
      %116 = sbr.rel (%p113) target = $region12
    $region11: #{residual_generator_forward.19} parent=5 // pred_region
      %s117 = ssub.s32 %s9, 1
      // Predicated region
      $region13: #{residual_generator_forward.19} parent=11 // pred_check
        %p118 = pneg %p56
      $region14: #{residual_generator_forward.19} parent=11 // pred_check_branch
        %120 = sbr.rel (%p118) target = $region16
      $region15: #{residual_generator_forward.19} parent=11 // pred_region
        _
      $region16: #{residual_generator_forward.19} parent=11 // pred_fallthru
        _
      // Predicated region
      $region17: #{residual_generator_forward.19} parent=11 // pred_check
        %p121 = pneg %p77
      $region18: #{residual_generator_forward.19} parent=11 // pred_check_branch
        %123 = sbr.rel (%p121) target = $region20
      $region19: #{residual_generator_forward.19} parent=11 // pred_region
        _
      $region20: #{residual_generator_forward.19} parent=11 // pred_fallthru
        _
    $region12: #{residual_generator_forward.19} parent=5 // pred_fallthru
      _
    %p124 = scmp.lt.s32.totalorder %s9, 2
    // Predicated region
    $region21: #{residual_generator_forward.19} parent=5 // pred_check
      %p125 = pneg %p124
    $region22: #{residual_generator_forward.19} parent=5 // pred_check_branch
      %127 = sbr.rel (%p125) target = $region24
    $region23: #{residual_generator_forward.19} parent=5 // pred_region
      // Predicated region
      $region25: #{residual_generator_forward.19} parent=23 // pred_check
        %p128 = pneg %p29
      $region26: #{residual_generator_forward.19} parent=23 // pred_check_branch
        %130 = sbr.rel (%p128) target = $region28
      $region27: #{residual_generator_forward.19} parent=23 // pred_region
        %p131 = scmp.lt.s32.totalorder %s9, 1
        %s132 = scalar_select %p131, %s9, 1
        %s133 = smul.addr %s132, 128
        %s134 = smul.addr %s133, 4
        %s135 = scalar_lea.vmem %s0, %s134
      $region28: #{residual_generator_forward.19} parent=23 // pred_fallthru
        _
    $region24: #{residual_generator_forward.19} parent=5 // pred_fallthru
      _
    %p136 = scmp.le.s32.totalorder 1, %s9
    %p137 = scmp.lt.s32.totalorder %s9, 3
    %p138 = pnand %p136, %p137
    %p139 = pneg %p138
    // Predicated region
    $region29: #{residual_generator_forward.19} parent=5 // pred_check
      _
    $region30: #{residual_generator_forward.19} parent=5 // pred_check_branch
      %141 = sbr.rel (%p138) target = $region32
    $region31: #{residual_generator_forward.19} parent=5 // pred_region
      %s142 = ssub.s32 %s9, 1
      %p143 = scmp.lt.s32.totalorder %s14, 1
      %s144 = scalar_select %p143, %s14, 1
      %s145 = smul.addr %s144, 128
      %s146 = smul.addr %s145, 4
      %s147 = scalar_lea.vmem %s0, %s146
      %p148 = pneg %p35
      %p149 = pneg %p32
      %p150 = pneg %p56
      %p151 = pneg %p53
      %p152 = pneg %p77
      %p153 = pneg %p74
      %p154 = pneg %p103
      %p155 = pneg %p100
      %p156 = scmp.lt.s32.totalorder %s14, 1
      %s157 = scalar_select %p156, %s14, 1
      %s158 = smul.addr %s157, 2
      %s159 = smul.addr %s158, 8
      %s160 = scalar_lea.vmem %s3, %s159
      %p161 = scmp.lt.s32.totalorder %s14, 1
      %s162 = scalar_select %p161, %s14, 1
      %s163 = smul.addr %s162, 128
      %s164 = smul.addr %s163, 4
      %s165 = scalar_lea.vmem %s0, %s164
      %p166 = scmp.lt.s32.totalorder %s14, 1
      %s167 = scalar_select %p166, %s14, 1
      %s168 = smul.addr %s167, 2
      %s169 = smul.addr %s168, 8
      %s170 = scalar_lea.vmem %s3, %s169
      %v171 = vld [vmem:[%s1] sm:$0xff]
      %v172 = vld [vmem:[%s1 + $0x8] sm:$0xff]
      %v173 = vld [vmem:[%s165] sm:$0xff]
      %v174 = vld [vmem:[%s165 + $0x8] sm:$0xff]
      %v175 = vld [vmem:[%s165 + $0x10] sm:$0xff]
      %v176 = vld [vmem:[%s165 + $0x18] sm:$0xff]
      %v177 = vld [vmem:[%s165 + $0x20] sm:$0xff]
      %v178 = vld [vmem:[%s165 + $0x28] sm:$0xff]
      %v179 = vld [vmem:[%s165 + $0x30] sm:$0xff]
      %v180 = vld [vmem:[%s165 + $0x38] sm:$0xff]
      %v181 = vld [vmem:[%s165 + $0x40] sm:$0xff]
      %v182 = vld [vmem:[%s165 + $0x48] sm:$0xff]
      %v183 = vld [vmem:[%s165 + $0x50] sm:$0xff]
      %v184 = vld [vmem:[%s165 + $0x58] sm:$0xff]
      %v185 = vld [vmem:[%s165 + $0x60] sm:$0xff]
      %v186 = vld [vmem:[%s165 + $0x68] sm:$0xff]
      %v187 = vld [vmem:[%s165 + $0x70] sm:$0xff]
      %v188 = vld [vmem:[%s165 + $0x78] sm:$0xff]
      %v189 = vld [vmem:[%s165 + $0x80] sm:$0xff]
      %v190 = vld [vmem:[%s165 + $0x88] sm:$0xff]
      %v191 = vld [vmem:[%s165 + $0x90] sm:$0xff]
      %v192 = vld [vmem:[%s165 + $0x98] sm:$0xff]
      %v193 = vld [vmem:[%s165 + $0xa0] sm:$0xff]
      %v194 = vld [vmem:[%s165 + $0xa8] sm:$0xff]
      %v195 = vld [vmem:[%s165 + $0xb0] sm:$0xff]
      %v196 = vld [vmem:[%s165 + $0xb8] sm:$0xff]
      %v197 = vld [vmem:[%s165 + $0xc0] sm:$0xff]
      %v198 = vld [vmem:[%s165 + $0xc8] sm:$0xff]
      %v199 = vld [vmem:[%s165 + $0xd0] sm:$0xff]
      %v200 = vld [vmem:[%s165 + $0xd8] sm:$0xff]
      %v201 = vld [vmem:[%s165 + $0xe0] sm:$0xff]
      %v202 = vld [vmem:[%s165 + $0xe8] sm:$0xff]
      %v203 = vld [vmem:[%s165 + $0xf0] sm:$0xff]
      %v204 = vld [vmem:[%s165 + $0xf8] sm:$0xff]
      %v205 = vld [vmem:[%s165 + $0x100] sm:$0xff]
      %v206 = vld [vmem:[%s165 + $0x108] sm:$0xff]
      %v207 = vld [vmem:[%s165 + $0x110] sm:$0xff]
      %v208 = vld [vmem:[%s165 + $0x118] sm:$0xff]
      %v209 = vld [vmem:[%s165 + $0x120] sm:$0xff]
      %v210 = vld [vmem:[%s165 + $0x128] sm:$0xff]
      %v211 = vld [vmem:[%s165 + $0x130] sm:$0xff]
      %v212 = vld [vmem:[%s165 + $0x138] sm:$0xff]
      %v213 = vld [vmem:[%s165 + $0x140] sm:$0xff]
      %v214 = vld [vmem:[%s165 + $0x148] sm:$0xff]
      %v215 = vld [vmem:[%s165 + $0x150] sm:$0xff]
      %v216 = vld [vmem:[%s165 + $0x158] sm:$0xff]
      %v217 = vld [vmem:[%s165 + $0x160] sm:$0xff]
      %v218 = vld [vmem:[%s165 + $0x168] sm:$0xff]
      %v219 = vld [vmem:[%s165 + $0x170] sm:$0xff]
      %v220 = vld [vmem:[%s165 + $0x178] sm:$0xff]
      %v221 = vld [vmem:[%s165 + $0x180] sm:$0xff]
      %v222 = vld [vmem:[%s165 + $0x188] sm:$0xff]
      %v223 = vld [vmem:[%s165 + $0x190] sm:$0xff]
      %v224 = vld [vmem:[%s165 + $0x198] sm:$0xff]
      %v225 = vld [vmem:[%s165 + $0x1a0] sm:$0xff]
      %v226 = vld [vmem:[%s165 + $0x1a8] sm:$0xff]
      %v227 = vld [vmem:[%s165 + $0x1b0] sm:$0xff]
      %v228 = vld [vmem:[%s165 + $0x1b8] sm:$0xff]
      %v229 = vld [vmem:[%s165 + $0x1c0] sm:$0xff]
      %v230 = vld [vmem:[%s165 + $0x1c8] sm:$0xff]
      %v231 = vld [vmem:[%s165 + $0x1d0] sm:$0xff]
      %v232 = vld [vmem:[%s165 + $0x1d8] sm:$0xff]
      %v233 = vld [vmem:[%s165 + $0x1e0] sm:$0xff]
      %v234 = vld [vmem:[%s165 + $0x1e8] sm:$0xff]
      %v235 = vld [vmem:[%s165 + $0x1f0] sm:$0xff]
      %v236 = vld [vmem:[%s165 + $0x1f8] sm:$0xff]
      %v237 = vld [vmem:[%s2] sm:$0xff]
      %239 = vset.pattern.permute.xlu0 0
      %240 = vperm.xlu0 %239, %v237
      %v241 = vpop.permute.xlu0 %240
      %v245 = vunpack.c.l.b16 %v171
      %v246 = vunpack.c.h.b16 %v171
      %v247 = vunpack.c.l.b16 %v172
      %v248 = vunpack.c.h.b16 %v172
      %v249 = vpack.c.b16 %v245, %v245
      %v250 = vpack.c.b16 %v246, %v246
      %v251 = vpack.c.b16 %v247, %v247
      %v252 = vpack.c.b16 %v248, %v248
      %v321 = vunpack.c.l.b16 %v173
      %v322 = vunpack.c.h.b16 %v173
      %v323 = vunpack.c.l.b16 %v174
      %v324 = vunpack.c.h.b16 %v174
      %v325 = vunpack.c.l.b16 %v175
      %v326 = vunpack.c.h.b16 %v175
      %v327 = vunpack.c.l.b16 %v176
      %v328 = vunpack.c.h.b16 %v176
      %v329 = vunpack.c.l.b16 %v177
      %v330 = vunpack.c.h.b16 %v177
      %v331 = vunpack.c.l.b16 %v178
      %v332 = vunpack.c.h.b16 %v178
      %v333 = vunpack.c.l.b16 %v179
      %v334 = vunpack.c.h.b16 %v179
      %v335 = vunpack.c.l.b16 %v180
      %v336 = vunpack.c.h.b16 %v180
      %v337 = vunpack.c.l.b16 %v181
      %v338 = vunpack.c.h.b16 %v181
      %v339 = vunpack.c.l.b16 %v182
      %v340 = vunpack.c.h.b16 %v182
      %v341 = vunpack.c.l.b16 %v183
      %v342 = vunpack.c.h.b16 %v183
      %v343 = vunpack.c.l.b16 %v184
      %v344 = vunpack.c.h.b16 %v184
      %v345 = vunpack.c.l.b16 %v185
      %v346 = vunpack.c.h.b16 %v185
      %v347 = vunpack.c.l.b16 %v186
      %v348 = vunpack.c.h.b16 %v186
      %v349 = vunpack.c.l.b16 %v187
      %v350 = vunpack.c.h.b16 %v187
      %v351 = vunpack.c.l.b16 %v188
      %v352 = vunpack.c.h.b16 %v188
      %v353 = vunpack.c.l.b16 %v189
      %v354 = vunpack.c.h.b16 %v189
      %v355 = vunpack.c.l.b16 %v190
      %v356 = vunpack.c.h.b16 %v190
      %v357 = vunpack.c.l.b16 %v191
      %v358 = vunpack.c.h.b16 %v191
      %v359 = vunpack.c.l.b16 %v192
      %v360 = vunpack.c.h.b16 %v192
      %v361 = vunpack.c.l.b16 %v193
      %v362 = vunpack.c.h.b16 %v193
      %v363 = vunpack.c.l.b16 %v194
      %v364 = vunpack.c.h.b16 %v194
      %v365 = vunpack.c.l.b16 %v195
      %v366 = vunpack.c.h.b16 %v195
      %v367 = vunpack.c.l.b16 %v196
      %v368 = vunpack.c.h.b16 %v196
      %v369 = vunpack.c.l.b16 %v197
      %v370 = vunpack.c.h.b16 %v197
      %v371 = vunpack.c.l.b16 %v198
      %v372 = vunpack.c.h.b16 %v198
      %v373 = vunpack.c.l.b16 %v199
      %v374 = vunpack.c.h.b16 %v199
      %v375 = vunpack.c.l.b16 %v200
      %v376 = vunpack.c.h.b16 %v200
      %v377 = vunpack.c.l.b16 %v201
      %v378 = vunpack.c.h.b16 %v201
      %v379 = vunpack.c.l.b16 %v202
      %v380 = vunpack.c.h.b16 %v202
      %v381 = vunpack.c.l.b16 %v203
      %v382 = vunpack.c.h.b16 %v203
      %v383 = vunpack.c.l.b16 %v204
      %v384 = vunpack.c.h.b16 %v204
      %v385 = vunpack.c.l.b16 %v205
      %v386 = vunpack.c.h.b16 %v205
      %v387 = vunpack.c.l.b16 %v206
      %v388 = vunpack.c.h.b16 %v206
      %v389 = vunpack.c.l.b16 %v207
      %v390 = vunpack.c.h.b16 %v207
      %v391 = vunpack.c.l.b16 %v208
      %v392 = vunpack.c.h.b16 %v208
      %v393 = vunpack.c.l.b16 %v209
      %v394 = vunpack.c.h.b16 %v209
      %v395 = vunpack.c.l.b16 %v210
      %v396 = vunpack.c.h.b16 %v210
      %v397 = vunpack.c.l.b16 %v211
      %v398 = vunpack.c.h.b16 %v211
      %v399 = vunpack.c.l.b16 %v212
      %v400 = vunpack.c.h.b16 %v212
      %v401 = vunpack.c.l.b16 %v213
      %v402 = vunpack.c.h.b16 %v213
      %v403 = vunpack.c.l.b16 %v214
      %v404 = vunpack.c.h.b16 %v214
      %v405 = vunpack.c.l.b16 %v215
      %v406 = vunpack.c.h.b16 %v215
      %v407 = vunpack.c.l.b16 %v216
      %v408 = vunpack.c.h.b16 %v216
      %v409 = vunpack.c.l.b16 %v217
      %v410 = vunpack.c.h.b16 %v217
      %v411 = vunpack.c.l.b16 %v218
      %v412 = vunpack.c.h.b16 %v218
      %v413 = vunpack.c.l.b16 %v219
      %v414 = vunpack.c.h.b16 %v219
      %v415 = vunpack.c.l.b16 %v220
      %v416 = vunpack.c.h.b16 %v220
      %v417 = vunpack.c.l.b16 %v221
      %v418 = vunpack.c.h.b16 %v221
      %v419 = vunpack.c.l.b16 %v222
      %v420 = vunpack.c.h.b16 %v222
      %v421 = vunpack.c.l.b16 %v223
      %v422 = vunpack.c.h.b16 %v223
      %v423 = vunpack.c.l.b16 %v224
      %v424 = vunpack.c.h.b16 %v224
      %v425 = vunpack.c.l.b16 %v225
      %v426 = vunpack.c.h.b16 %v225
      %v427 = vunpack.c.l.b16 %v226
      %v428 = vunpack.c.h.b16 %v226
      %v429 = vunpack.c.l.b16 %v227
      %v430 = vunpack.c.h.b16 %v227
      %v431 = vunpack.c.l.b16 %v228
      %v432 = vunpack.c.h.b16 %v228
      %v433 = vunpack.c.l.b16 %v229
      %v434 = vunpack.c.h.b16 %v229
      %v435 = vunpack.c.l.b16 %v230
      %v436 = vunpack.c.h.b16 %v230
      %v437 = vunpack.c.l.b16 %v231
      %v438 = vunpack.c.h.b16 %v231
      %v439 = vunpack.c.l.b16 %v232
      %v440 = vunpack.c.h.b16 %v232
      %v441 = vunpack.c.l.b16 %v233
      %v442 = vunpack.c.h.b16 %v233
      %v443 = vunpack.c.l.b16 %v234
      %v444 = vunpack.c.h.b16 %v234
      %v445 = vunpack.c.l.b16 %v235
      %v446 = vunpack.c.h.b16 %v235
      %v447 = vunpack.c.l.b16 %v236
      %v448 = vunpack.c.h.b16 %v236
      %v449 = vpack.c.b16 %v323, %v321
      %v450 = vpack.c.b16 %v324, %v322
      %v451 = vpack.c.b16 %v327, %v325
      %v452 = vpack.c.b16 %v328, %v326
      %v453 = vpack.c.b16 %v331, %v329
      %v454 = vpack.c.b16 %v332, %v330
      %v455 = vpack.c.b16 %v335, %v333
      %v456 = vpack.c.b16 %v336, %v334
      %v457 = vpack.c.b16 %v339, %v337
      %v458 = vpack.c.b16 %v340, %v338
      %v459 = vpack.c.b16 %v343, %v341
      %v460 = vpack.c.b16 %v344, %v342
      %v461 = vpack.c.b16 %v347, %v345
      %v462 = vpack.c.b16 %v348, %v346
      %v463 = vpack.c.b16 %v351, %v349
      %v464 = vpack.c.b16 %v352, %v350
      %v465 = vpack.c.b16 %v355, %v353
      %v466 = vpack.c.b16 %v356, %v354
      %v467 = vpack.c.b16 %v359, %v357
      %v468 = vpack.c.b16 %v360, %v358
      %v469 = vpack.c.b16 %v363, %v361
      %v470 = vpack.c.b16 %v364, %v362
      %v471 = vpack.c.b16 %v367, %v365
      %v472 = vpack.c.b16 %v368, %v366
      %v473 = vpack.c.b16 %v371, %v369
      %v474 = vpack.c.b16 %v372, %v370
      %v475 = vpack.c.b16 %v375, %v373
      %v476 = vpack.c.b16 %v376, %v374
      %v477 = vpack.c.b16 %v379, %v377
      %v478 = vpack.c.b16 %v380, %v378
      %v479 = vpack.c.b16 %v383, %v381
      %v480 = vpack.c.b16 %v384, %v382
      %v481 = vpack.c.b16 %v387, %v385
      %v482 = vpack.c.b16 %v388, %v386
      %v483 = vpack.c.b16 %v391, %v389
      %v484 = vpack.c.b16 %v392, %v390
      %v485 = vpack.c.b16 %v395, %v393
      %v486 = vpack.c.b16 %v396, %v394
      %v487 = vpack.c.b16 %v399, %v397
      %v488 = vpack.c.b16 %v400, %v398
      %v489 = vpack.c.b16 %v403, %v401
      %v490 = vpack.c.b16 %v404, %v402
      %v491 = vpack.c.b16 %v407, %v405
      %v492 = vpack.c.b16 %v408, %v406
      %v493 = vpack.c.b16 %v411, %v409
      %v494 = vpack.c.b16 %v412, %v410
      %v495 = vpack.c.b16 %v415, %v413
      %v496 = vpack.c.b16 %v416, %v414
      %v497 = vpack.c.b16 %v419, %v417
      %v498 = vpack.c.b16 %v420, %v418
      %v499 = vpack.c.b16 %v423, %v421
      %v500 = vpack.c.b16 %v424, %v422
      %v501 = vpack.c.b16 %v427, %v425
      %v502 = vpack.c.b16 %v428, %v426
      %v503 = vpack.c.b16 %v431, %v429
      %v504 = vpack.c.b16 %v432, %v430
      %v505 = vpack.c.b16 %v435, %v433
      %v506 = vpack.c.b16 %v436, %v434
      %v507 = vpack.c.b16 %v439, %v437
      %v508 = vpack.c.b16 %v440, %v438
      %v509 = vpack.c.b16 %v443, %v441
      %v510 = vpack.c.b16 %v444, %v442
      %v511 = vpack.c.b16 %v447, %v445
      %v512 = vpack.c.b16 %v448, %v446
      %577 = vmatprep.subr.bf16.mxu0 %v464
      %578 = vmatpush1.bf16.msra.mxu0 %v463
      %579 = vmatprep.subr.bf16.mxu0 %v462
      %580 = vmatpush1.bf16.msra.mxu0 %v461
      %581 = vmatprep.subr.bf16.mxu0 %v460
      %582 = vmatpush1.bf16.msra.mxu0 %v459
      %583 = vmatprep.subr.bf16.mxu0 %v458
      %584 = vmatpush1.bf16.msra.mxu0 %v457
      %585 = vmatprep.subr.bf16.mxu0 %v456
      %586 = vmatpush1.bf16.msra.mxu0 %v455
      %587 = vmatprep.subr.bf16.mxu0 %v454
      %588 = vmatpush1.bf16.msra.mxu0 %v453
      %589 = vmatprep.subr.bf16.mxu0 %v452
      %590 = vmatpush1.bf16.msra.mxu0 %v451
      %591 = vmatprep.subr.bf16.mxu0 %v450
      %592 = vmatpush1.bf16.msra.mxu0 %v449
      %593 = vmatprep.subr.bf16.mxu0 %v480
      %594 = vmatpush2.bf16.msra.mxu0 %v479
      %595 = vmatprep.subr.bf16.mxu0 %v478
      %596 = vmatpush2.bf16.msra.mxu0 %v477
      %597 = vmatprep.subr.bf16.mxu0 %v476
      %598 = vmatpush2.bf16.msra.mxu0 %v475
      %599 = vmatprep.subr.bf16.mxu0 %v474
      %600 = vmatpush2.bf16.msra.mxu0 %v473
      %601 = vmatprep.subr.bf16.mxu0 %v472
      %602 = vmatpush2.bf16.msra.mxu0 %v471
      %603 = vmatprep.subr.bf16.mxu0 %v470
      %604 = vmatpush2.bf16.msra.mxu0 %v469
      %605 = vmatprep.subr.bf16.mxu0 %v468
      %606 = vmatpush2.bf16.msra.mxu0 %v467
      %607 = vmatprep.subr.bf16.mxu0 %v466
      %608 = vmatpush2.bf16.msra.mxu0 %v465
      %609 = vmatprep.mubr.bf16.mxu0 %v250
      %610 = vmatmul.mubr.bf16.gmra.mxu0 %v249
      %v611 = vpop.f32.mrf.mxu0
      %v612 = vadd.f32 %v241, %v611
      %v613 = vpop.f32.mrf.mxu0
      %v614 = vadd.f32 %v241, %v613
      %v615 = vpop.f32.mrf.mxu0
      %v616 = vpop.f32.mrf.mxu0
      %617 = vdwg.mxu0
      %618 = vmatprep.subr.bf16.mxu0 %v496
      %619 = vmatpush1.bf16.msra.mxu0 %v495
      %620 = vmatprep.subr.bf16.mxu0 %v494
      %621 = vmatpush1.bf16.msra.mxu0 %v493
      %622 = vmatprep.subr.bf16.mxu0 %v492
      %623 = vmatpush1.bf16.msra.mxu0 %v491
      %624 = vmatprep.subr.bf16.mxu0 %v490
      %625 = vmatpush1.bf16.msra.mxu0 %v489
      %626 = vmatprep.subr.bf16.mxu0 %v488
      %627 = vmatpush1.bf16.msra.mxu0 %v487
      %628 = vmatprep.subr.bf16.mxu0 %v486
      %629 = vmatpush1.bf16.msra.mxu0 %v485
      %630 = vmatprep.subr.bf16.mxu0 %v484
      %631 = vmatpush1.bf16.msra.mxu0 %v483
      %632 = vmatprep.subr.bf16.mxu0 %v482
      %633 = vmatpush1.bf16.msra.mxu0 %v481
      %634 = vmatprep.subr.bf16.mxu0 %v512
      %635 = vmatpush2.bf16.msra.mxu0 %v511
      %636 = vmatprep.subr.bf16.mxu0 %v510
      %637 = vmatpush2.bf16.msra.mxu0 %v509
      %638 = vmatprep.subr.bf16.mxu0 %v508
      %639 = vmatpush2.bf16.msra.mxu0 %v507
      %640 = vmatprep.subr.bf16.mxu0 %v506
      %641 = vmatpush2.bf16.msra.mxu0 %v505
      %642 = vmatprep.subr.bf16.mxu0 %v504
      %643 = vmatpush2.bf16.msra.mxu0 %v503
      %644 = vmatprep.subr.bf16.mxu0 %v502
      %645 = vmatpush2.bf16.msra.mxu0 %v501
      %646 = vmatprep.subr.bf16.mxu0 %v500
      %647 = vmatpush2.bf16.msra.mxu0 %v499
      %648 = vmatprep.subr.bf16.mxu0 %v498
      %649 = vmatpush2.bf16.msra.mxu0 %v497
      %650 = vmatprep.mubr.bf16.mxu0 %v252
      %651 = vmatmul.mubr.bf16.gmra.mxu0 %v251
      %v652 = vpop.f32.mrf.mxu0
      %v653 = vadd.f32 %v612, %v652
      %v654 = vpop.f32.mrf.mxu0
      %v655 = vadd.f32 %v614, %v654
      %v656 = vpop.f32.mrf.mxu0
      %v657 = vpop.f32.mrf.mxu0
      %658 = vdwg.mxu0
      %v659 = vtanh.pop %v653
      %v660 = vtanh.pop %v655
      %661 = vst [vmem:[%s170] sm:$0xff] %v659
      %662 = vst [vmem:[%s170 + $0x8] sm:$0xff] %v660
      %p663 = scmp.lt.s32.totalorder %s14, 1
      %s664 = scalar_select %p663, %s14, 1
      %s665 = smul.addr %s664, 2
      %s666 = smul.addr %s665, 8
      %s667 = scalar_lea.vmem %s3, %s666
      // Predicated region
      $region33: #{residual_generator_forward.19} parent=31 // pred_check
        %p668 = pneg %p100
      $region34: #{residual_generator_forward.19} parent=31 // pred_check_branch
        %670 = sbr.rel (%p668) target = $region36
      $region35: #{residual_generator_forward.19} parent=31 // pred_region
        _
      $region36: #{residual_generator_forward.19} parent=31 // pred_fallthru
        _
    $region32: #{residual_generator_forward.19} parent=5 // pred_fallthru
      _
    %p671 = scmp.le.s32.totalorder 2, %s9
    // Predicated region
    $region37: #{residual_generator_forward.19} parent=5 // pred_check
      %p672 = pneg %p671
    $region38: #{residual_generator_forward.19} parent=5 // pred_check_branch
      %674 = sbr.rel (%p672) target = $region40
    $region39: #{residual_generator_forward.19} parent=5 // pred_region
      %s675 = ssub.s32 %s9, 2
      // Predicated region
      $region41: #{residual_generator_forward.19} parent=39 // pred_check
        %p676 = pneg %p106
      $region42: #{residual_generator_forward.19} parent=39 // pred_check_branch
        %678 = sbr.rel (%p676) target = $region44
      $region43: #{residual_generator_forward.19} parent=39 // pred_region
        %p679 = scmp.lt.s32.totalorder %s15, 1
        %s680 = scalar_select %p679, %s15, 1
        %s681 = smul.addr %s680, 2
        %s682 = smul.addr %s681, 8
        %s683 = scalar_lea.vmem %s3, %s682
      $region44: #{residual_generator_forward.19} parent=39 // pred_fallthru
        _
    $region40: #{residual_generator_forward.19} parent=5 // pred_fallthru
      _
  $region6: #{residual_generator_forward.19} parent=0 // loop_footer
    %s13 = sadd.s32 1, %s9
  $region7: #{residual_generator_forward.19} parent=0 // loop_footer_branch
    %8 = sbr.rel target = $region3
  $region8: #{residual_generator_forward.19} parent=0 // loop_exit
    _

</llo_original>
